<compile_context>
chip_gen: v6e
topology: v6e:2x2x1
jax: 0.10.0
libtpu: 0.0.40
codegen_flags: <defaults>
</compile_context>

<pallas_src>
import jax
import jax.numpy as jnp
from jax.experimental import pallas as pl
from jax.experimental.pallas import tpu as pltpu


# ---------------------------------------------------------------------------
# One-time weight preprocessing (outside the hot path)
# ---------------------------------------------------------------------------
def _conv_band(w_oihw, wi):
    """Fold a 'valid' 5x5 conv into banded matmul weights.

    Activations are laid out per image as rows (H, W*Cin).  The conv becomes
        y[h, :] = sum_d  act[h + d, :] @ M[d]
    with M[d] of shape (W*Cin, (W-4)//2 * Cout), returned separately for the
    even / odd output columns (so width max-pool is an elementwise max).
    """
    co, ci, kh, kw = w_oihw.shape
    wo = wi - kw + 1
    wo2 = wo // 2
    w = jnp.transpose(w_oihw, (2, 3, 1, 0)).astype(jnp.float32)      # (kh, kw, ci, co)
    w_in = jnp.arange(wi)[None, :, None]
    w_out = jnp.arange(wo)[None, None, :]
    dj = jnp.arange(kw)[:, None, None]
    sel = (w_in == w_out + dj).astype(jnp.float32)                   # (kw, wi, wo)
    m = jnp.einsum("jpw,ijco->ipcwo", sel, w)                        # (kh, wi, ci, wo, co)
    m = m.reshape(kh, wi * ci, wo2, 2, co)                           # w_out = 2*w2 + parity
    m_even = m[:, :, :, 0, :].reshape(kh, wi * ci, wo2 * co)
    m_odd = m[:, :, :, 1, :].reshape(kh, wi * ci, wo2 * co)
    return m_even, m_odd


def prepare_params(params):
    """Build kernel-ready weights once (not per forward call)."""
    m1e, m1o = _conv_band(params["conv1_w"], 28)                     # (5, 28, 120) each
    m2e, m2o = _conv_band(params["conv2_w"], 12)                     # (5, 120, 80) each
    # fc1 acts on torch's channel-major view(-1, 320) of a (20, 4, 4) map.
    # Permute its input axis once so the kernel consumes the (h, w*20+c)
    # layout directly (no per-call activation transpose).
    w3 = params["fc1_w"].reshape(50, 20, 4, 4)                       # (n, c, h, w)
    w3 = jnp.transpose(w3, (2, 3, 1, 0)).reshape(320, 50)            # row = h*80 + w*20 + c
    return dict(
        m1e=m1e, m1o=m1o, b1=jnp.tile(params["conv1_b"], 12)[None, :],   # (1, 120)
        m2e=m2e, m2o=m2o, b2=jnp.tile(params["conv2_b"], 4)[None, :],    # (1, 80)
        w3=w3, b3=params["fc1_b"][None, :],                              # (320,50),(1,50)
        w4=params["fc2_w"].T, b4=params["fc2_b"][None, :],               # (50,10),(1,10)
    )


# ---------------------------------------------------------------------------
# Fused kernel (one image per grid step; everything stays in VMEM/vregs)
# ---------------------------------------------------------------------------
def _parity_rows(n, parity):
    """(n, 2n) selector with S[i, 2*i + parity] = 1 — row-pair gather via MXU."""
    r = jax.lax.broadcasted_iota(jnp.int32, (n, 2 * n), 0)
    c = jax.lax.broadcasted_iota(jnp.int32, (n, 2 * n), 1)
    return (c == 2 * r + parity).astype(jnp.float32)


def _net_kernel(x_ref, m1e_ref, m1o_ref, b1_ref, m2e_ref, m2o_ref, b2_ref,
                w3_ref, b3_ref, w4_ref, b4_ref, o_ref, p1_ref, p2_ref):
    f32 = jnp.float32

    # ---- conv1 (5x5, 1->10): banded matmuls, even/odd output columns apart --
    y1e = jnp.dot(x_ref[0, 0:24, :], m1e_ref[0], preferred_element_type=f32)
    y1o = jnp.dot(x_ref[0, 0:24, :], m1o_ref[0], preferred_element_type=f32)
    for d in range(1, 5):
        xs = x_ref[0, d:d + 24, :]
        y1e = y1e + jnp.dot(xs, m1e_ref[d], preferred_element_type=f32)
        y1o = y1o + jnp.dot(xs, m1o_ref[d], preferred_element_type=f32)
    # ---- 2x2 max-pool + relu (width: elementwise max; height: selector) ----
    wp1 = jnp.maximum(y1e, y1o)                                         # (24, 120)
    hp1 = jnp.maximum(jnp.dot(_parity_rows(12, 0), wp1, preferred_element_type=f32),
                      jnp.dot(_parity_rows(12, 1), wp1, preferred_element_type=f32))
    p1_ref[...] = jnp.maximum(hp1 + b1_ref[...], 0.0)                   # (12, 120) = (h, w*10+c)

    # ---- conv2 (5x5, 10->20) ------------------------------------------------
    # TODO(synk): Dropout2d (conv2_drop) / F.dropout are identity in eval mode;
    #             training-mode RNG is not reproduced here.
    y2e = jnp.dot(p1_ref[0:8, :], m2e_ref[0], preferred_element_type=f32)
    y2o = jnp.dot(p1_ref[0:8, :], m2o_ref[0], preferred_element_type=f32)
    for d in range(1, 5):
        ps = p1_ref[d:d + 8, :]
        y2e = y2e + jnp.dot(ps, m2e_ref[d], preferred_element_type=f32)
        y2o = y2o + jnp.dot(ps, m2o_ref[d], preferred_element_type=f32)
    wp2 = jnp.maximum(y2e, y2o)                                         # (8, 80)
    hp2 = jnp.maximum(jnp.dot(_parity_rows(4, 0), wp2, preferred_element_type=f32),
                      jnp.dot(_parity_rows(4, 1), wp2, preferred_element_type=f32))
    p2_ref[...] = jnp.maximum(hp2 + b2_ref[...], 0.0)                   # (4, 80) = (h, w*20+c)

    # ---- fc1 + relu (torch channel-major flatten folded into w3's rows) ----
    h1 = jnp.dot(p2_ref[0:1, :], w3_ref[0:80, :], preferred_element_type=f32)
    for h in range(1, 4):
        h1 = h1 + jnp.dot(p2_ref[h:h + 1, :], w3_ref[80 * h:80 * (h + 1), :],
                          preferred_element_type=f32)
    h1 = jnp.maximum(h1 + b3_ref[...], 0.0)                             # (1, 50)

    # ---- fc2 + log_softmax --------------------------------------------------
    z = jnp.dot(h1, w4_ref[...], preferred_element_type=f32) + b4_ref[...]   # (1, 10)
    z = z - jnp.max(z, axis=-1, keepdims=True)
    z = z - jnp.log(jnp.sum(jnp.exp(z), axis=-1, keepdims=True))
    o_ref[0] = z


# ---------------------------------------------------------------------------
# Wrapper
# ---------------------------------------------------------------------------
def net_forward(prep, x_nchw):
    """Forward pass of `Net` (eval mode).  x_nchw: (N, 1, 28, 28) float32."""
    n = x_nchw.shape[0]
    x = x_nchw.reshape(n, 28, 28)                                    # Cin == 1
    flops_per_img = 2 * (24 * 28 * 120 * 10 + 12 * 24 * 120 * 2
                         + 8 * 120 * 80 * 10 + 4 * 8 * 80 * 2
                         + 4 * 80 * 50 + 50 * 10)
    weight_bytes = 4 * (2 * 5 * 28 * 120 + 120 + 2 * 5 * 120 * 80 + 80
                        + 320 * 50 + 50 + 50 * 10 + 10)
    out = pl.pallas_call(
        _net_kernel,
        out_shape=jax.ShapeDtypeStruct((n, 1, 10), jnp.float32),
        grid=(n,),
        in_specs=[
            pl.BlockSpec((1, 28, 28), lambda i: (i, 0, 0)),          # x: one image / step
            pl.BlockSpec((5, 28, 120), lambda i: (0, 0, 0)),         # conv1 band (even cols)
            pl.BlockSpec((5, 28, 120), lambda i: (0, 0, 0)),         # conv1 band (odd cols)
            pl.BlockSpec((1, 120), lambda i: (0, 0)),                # conv1 bias (tiled)
            pl.BlockSpec((5, 120, 80), lambda i: (0, 0, 0)),         # conv2 band (even cols)
            pl.BlockSpec((5, 120, 80), lambda i: (0, 0, 0)),         # conv2 band (odd cols)
            pl.BlockSpec((1, 80), lambda i: (0, 0)),                 # conv2 bias (tiled)
            pl.BlockSpec((320, 50), lambda i: (0, 0)),               # fc1 w (row-permuted)
            pl.BlockSpec((1, 50), lambda i: (0, 0)),                 # fc1 b
            pl.BlockSpec((50, 10), lambda i: (0, 0)),                # fc2 w (pre-transposed)
            pl.BlockSpec((1, 10), lambda i: (0, 0)),                 # fc2 b
        ],
        out_specs=pl.BlockSpec((1, 1, 10), lambda i: (i, 0, 0)),
        scratch_shapes=[pltpu.VMEM((12, 120), jnp.float32),          # pooled conv1
                        pltpu.VMEM((4, 80), jnp.float32)],           # pooled conv2
        compiler_params=pltpu.CompilerParams(
            dimension_semantics=("parallel",)),
        cost_estimate=pl.CostEstimate(
            flops=flops_per_img * n,
            transcendentals=11 * n,
            bytes_accessed=n * (28 * 28 * 4 + 40) + weight_bytes),
    )(x, prep["m1e"], prep["m1o"], prep["b1"], prep["m2e"], prep["m2o"],
      prep["b2"], prep["w3"], prep["b3"], prep["w4"], prep["b4"])
    return out.reshape(n, 10)


# ---------------------------------------------------------------------------
# Parameters (deterministic, PyTorch-default-style uniform init)
# ---------------------------------------------------------------------------
def init_params(key):
    keys = jax.random.split(key, 8)

    def u(k, shape, fan_in):
        bound = 1.0 / jnp.sqrt(float(fan_in))
        return jax.random.uniform(k, shape, jnp.float32, -bound, bound)

    return {
        "conv1_w": u(keys[0], (10, 1, 5, 5), 1 * 25),
        "conv1_b": u(keys[1], (10,), 1 * 25),
        "conv2_w": u(keys[2], (20, 10, 5, 5), 10 * 25),
        "conv2_b": u(keys[3], (20,), 10 * 25),
        "fc1_w": u(keys[4], (50, 320), 320),
        "fc1_b": u(keys[5], (50,), 320),
        "fc2_w": u(keys[6], (10, 50), 50),
        "fc2_b": u(keys[7], (10,), 50),
    }


# ---------------------------------------------------------------------------
# Pure-JAX reference (for the correctness check in __main__ only)
# ---------------------------------------------------------------------------
def _reference_forward(params, x_nchw):
    x = jnp.transpose(x_nchw, (0, 2, 3, 1))

    def conv(x, w, b):
        y = jax.lax.conv_general_dilated(
            x, jnp.transpose(w, (2, 3, 1, 0)), (1, 1), "VALID",
            dimension_numbers=("NHWC", "HWIO", "NHWC"))
        return y + b

    def pool_relu(x):
        y = jax.lax.reduce_window(x, -jnp.inf, jax.lax.max,
                                  (1, 2, 2, 1), (1, 2, 2, 1), "VALID")
        return jnp.maximum(y, 0.0)

    x = pool_relu(conv(x, params["conv1_w"], params["conv1_b"]))
    x = pool_relu(conv(x, params["conv2_w"], params["conv2_b"]))
    x = jnp.transpose(x, (0, 3, 1, 2)).reshape(x.shape[0], 320)
    x = jnp.maximum(x @ params["fc1_w"].T + params["fc1_b"], 0.0)
    x = x @ params["fc2_w"].T + params["fc2_b"]
    return jax.nn.log_softmax(x, axis=-1)


if __name__ == "__main__":
    key = jax.random.PRNGKey(0)
    pkey, xkey = jax.random.split(key)
    params = init_params(pkey)
    x = jax.random.normal(xkey, (2, 1, 28, 28), jnp.float32)

    prep = prepare_params(params)          # one-time weight prep, outside hot path
    fwd = jax.jit(net_forward)
    out = jax.block_until_ready(fwd(prep, x))

    assert out.shape == (2, 10)
    assert bool(jnp.all(jnp.isfinite(out)))
    assert bool(jnp.allclose(jnp.sum(jnp.exp(out), axis=-1), 1.0, atol=1e-4))
    ref = _reference_forward(params, x)
    assert bool(jnp.allclose(out, ref, atol=2e-2, rtol=2e-2))
    print("KERNEL_OK")
</pallas_src>

<mosaic_0001>
module attributes {stable_mosaic.version = 11 : i64} {
  func.func @_net_kernel(%arg0: i32, %arg1: memref<1x28x28xf32, #tpu.memory_space<vmem>>, %arg2: memref<5x28x120xf32, #tpu.memory_space<vmem>>, %arg3: memref<5x28x120xf32, #tpu.memory_space<vmem>>, %arg4: memref<1x120xf32, #tpu.memory_space<vmem>>, %arg5: memref<5x120x80xf32, #tpu.memory_space<vmem>>, %arg6: memref<5x120x80xf32, #tpu.memory_space<vmem>>, %arg7: memref<1x80xf32, #tpu.memory_space<vmem>>, %arg8: memref<320x50xf32, #tpu.memory_space<vmem>>, %arg9: memref<1x50xf32, #tpu.memory_space<vmem>>, %arg10: memref<50x10xf32, #tpu.memory_space<vmem>>, %arg11: memref<1x10xf32, #tpu.memory_space<vmem>>, %arg12: memref<1x1x10xf32, #tpu.memory_space<vmem>>, %arg13: memref<12x120xf32, #tpu.memory_space<vmem>>, %arg14: memref<4x80xf32, #tpu.memory_space<vmem>>) attributes {dimension_semantics = [#tpu.dimension_semantics<parallel>], iteration_bounds = array<i64: 2>, scalar_prefetch = 0 : i64, scratch_operands = 2 : i64, tpu.core_type = #tpu.core_type<tc>, window_params = [{transform_indices = @transform_0, window_bounds = array<i64: 1, 28, 28>}, {pipeline_mode = #tpu.pipeline_mode<synchronous>, transform_indices = @transform_1, window_bounds = array<i64: 5, 28, 120>}, {pipeline_mode = #tpu.pipeline_mode<synchronous>, transform_indices = @transform_2, window_bounds = array<i64: 5, 28, 120>}, {pipeline_mode = #tpu.pipeline_mode<synchronous>, transform_indices = @transform_3, window_bounds = array<i64: 1, 120>}, {pipeline_mode = #tpu.pipeline_mode<synchronous>, transform_indices = @transform_4, window_bounds = array<i64: 5, 120, 80>}, {pipeline_mode = #tpu.pipeline_mode<synchronous>, transform_indices = @transform_5, window_bounds = array<i64: 5, 120, 80>}, {pipeline_mode = #tpu.pipeline_mode<synchronous>, transform_indices = @transform_6, window_bounds = array<i64: 1, 80>}, {pipeline_mode = #tpu.pipeline_mode<synchronous>, transform_indices = @transform_7, window_bounds = array<i64: 320, 50>}, {pipeline_mode = #tpu.pipeline_mode<synchronous>, transform_indices = @transform_8, window_bounds = array<i64: 1, 50>}, {pipeline_mode = #tpu.pipeline_mode<synchronous>, transform_indices = @transform_9, window_bounds = array<i64: 50, 10>}, {pipeline_mode = #tpu.pipeline_mode<synchronous>, transform_indices = @transform_10, window_bounds = array<i64: 1, 10>}, {transform_indices = @transform_11, window_bounds = array<i64: 1, 1, 10>}]} {
    %c0 = arith.constant 0 : index
    %c0_0 = arith.constant 0 : index
    %c0_1 = arith.constant 0 : index
    %0 = vector.load %arg1[%c0, %c0_0, %c0_1] : memref<1x28x28xf32, #tpu.memory_space<vmem>>, vector<1x24x28xf32>
    %1 = vector.shape_cast %0 : vector<1x24x28xf32> to vector<24x28xf32>
    %c0_2 = arith.constant 0 : index
    %c0_3 = arith.constant 0 : index
    %c0_4 = arith.constant 0 : index
    %2 = vector.load %arg2[%c0_2, %c0_3, %c0_4] : memref<5x28x120xf32, #tpu.memory_space<vmem>>, vector<1x28x120xf32>
    %3 = vector.shape_cast %2 : vector<1x28x120xf32> to vector<28x120xf32>
    %cst = arith.constant dense<0.000000e+00> : vector<24x120xf32>
    %4 = tpu.matmul %1, %3, %cst {dimension_numbers = #tpu.dot_dimension_numbers<[1], [0], [0], [1], [0, 0, 1, 1], [], []>} : vector<24x28xf32>, vector<28x120xf32>, vector<24x120xf32> -> vector<24x120xf32>
    %c0_5 = arith.constant 0 : index
    %c0_6 = arith.constant 0 : index
    %c0_7 = arith.constant 0 : index
    %5 = vector.load %arg1[%c0_5, %c0_6, %c0_7] : memref<1x28x28xf32, #tpu.memory_space<vmem>>, vector<1x24x28xf32>
    %6 = vector.shape_cast %5 : vector<1x24x28xf32> to vector<24x28xf32>
    %c0_8 = arith.constant 0 : index
    %c0_9 = arith.constant 0 : index
    %c0_10 = arith.constant 0 : index
    %7 = vector.load %arg3[%c0_8, %c0_9, %c0_10] : memref<5x28x120xf32, #tpu.memory_space<vmem>>, vector<1x28x120xf32>
    %8 = vector.shape_cast %7 : vector<1x28x120xf32> to vector<28x120xf32>
    %cst_11 = arith.constant dense<0.000000e+00> : vector<24x120xf32>
    %9 = tpu.matmul %6, %8, %cst_11 {dimension_numbers = #tpu.dot_dimension_numbers<[1], [0], [0], [1], [0, 0, 1, 1], [], []>} : vector<24x28xf32>, vector<28x120xf32>, vector<24x120xf32> -> vector<24x120xf32>
    %c0_12 = arith.constant 0 : index
    %c1 = arith.constant 1 : index
    %c0_13 = arith.constant 0 : index
    %10 = vector.load %arg1[%c0_12, %c1, %c0_13] : memref<1x28x28xf32, #tpu.memory_space<vmem>>, vector<1x24x28xf32>
    %11 = vector.shape_cast %10 : vector<1x24x28xf32> to vector<24x28xf32>
    %c1_14 = arith.constant 1 : index
    %c0_15 = arith.constant 0 : index
    %c0_16 = arith.constant 0 : index
    %12 = vector.load %arg2[%c1_14, %c0_15, %c0_16] : memref<5x28x120xf32, #tpu.memory_space<vmem>>, vector<1x28x120xf32>
    %13 = vector.shape_cast %12 : vector<1x28x120xf32> to vector<28x120xf32>
    %cst_17 = arith.constant dense<0.000000e+00> : vector<24x120xf32>
    %14 = tpu.matmul %11, %13, %cst_17 {dimension_numbers = #tpu.dot_dimension_numbers<[1], [0], [0], [1], [0, 0, 1, 1], [], []>} : vector<24x28xf32>, vector<28x120xf32>, vector<24x120xf32> -> vector<24x120xf32>
    %15 = arith.addf %4, %14 : vector<24x120xf32>
    %c1_18 = arith.constant 1 : index
    %c0_19 = arith.constant 0 : index
    %c0_20 = arith.constant 0 : index
    %16 = vector.load %arg3[%c1_18, %c0_19, %c0_20] : memref<5x28x120xf32, #tpu.memory_space<vmem>>, vector<1x28x120xf32>
    %17 = vector.shape_cast %16 : vector<1x28x120xf32> to vector<28x120xf32>
    %cst_21 = arith.constant dense<0.000000e+00> : vector<24x120xf32>
    %18 = tpu.matmul %11, %17, %cst_21 {dimension_numbers = #tpu.dot_dimension_numbers<[1], [0], [0], [1], [0, 0, 1, 1], [], []>} : vector<24x28xf32>, vector<28x120xf32>, vector<24x120xf32> -> vector<24x120xf32>
    %19 = arith.addf %9, %18 : vector<24x120xf32>
    %c0_22 = arith.constant 0 : index
    %c2 = arith.constant 2 : index
    %c0_23 = arith.constant 0 : index
    %20 = vector.load %arg1[%c0_22, %c2, %c0_23] : memref<1x28x28xf32, #tpu.memory_space<vmem>>, vector<1x24x28xf32>
    %21 = vector.shape_cast %20 : vector<1x24x28xf32> to vector<24x28xf32>
    %c2_24 = arith.constant 2 : index
    %c0_25 = arith.constant 0 : index
    %c0_26 = arith.constant 0 : index
    %22 = vector.load %arg2[%c2_24, %c0_25, %c0_26] : memref<5x28x120xf32, #tpu.memory_space<vmem>>, vector<1x28x120xf32>
    %23 = vector.shape_cast %22 : vector<1x28x120xf32> to vector<28x120xf32>
    %cst_27 = arith.constant dense<0.000000e+00> : vector<24x120xf32>
    %24 = tpu.matmul %21, %23, %cst_27 {dimension_numbers = #tpu.dot_dimension_numbers<[1], [0], [0], [1], [0, 0, 1, 1], [], []>} : vector<24x28xf32>, vector<28x120xf32>, vector<24x120xf32> -> vector<24x120xf32>
    %25 = arith.addf %15, %24 : vector<24x120xf32>
    %c2_28 = arith.constant 2 : index
    %c0_29 = arith.constant 0 : index
    %c0_30 = arith.constant 0 : index
    %26 = vector.load %arg3[%c2_28, %c0_29, %c0_30] : memref<5x28x120xf32, #tpu.memory_space<vmem>>, vector<1x28x120xf32>
    %27 = vector.shape_cast %26 : vector<1x28x120xf32> to vector<28x120xf32>
    %cst_31 = arith.constant dense<0.000000e+00> : vector<24x120xf32>
    %28 = tpu.matmul %21, %27, %cst_31 {dimension_numbers = #tpu.dot_dimension_numbers<[1], [0], [0], [1], [0, 0, 1, 1], [], []>} : vector<24x28xf32>, vector<28x120xf32>, vector<24x120xf32> -> vector<24x120xf32>
    %29 = arith.addf %19, %28 : vector<24x120xf32>
    %c0_32 = arith.constant 0 : index
    %c3 = arith.constant 3 : index
    %c0_33 = arith.constant 0 : index
    %30 = vector.load %arg1[%c0_32, %c3, %c0_33] : memref<1x28x28xf32, #tpu.memory_space<vmem>>, vector<1x24x28xf32>
    %31 = vector.shape_cast %30 : vector<1x24x28xf32> to vector<24x28xf32>
    %c3_34 = arith.constant 3 : index
    %c0_35 = arith.constant 0 : index
    %c0_36 = arith.constant 0 : index
    %32 = vector.load %arg2[%c3_34, %c0_35, %c0_36] : memref<5x28x120xf32, #tpu.memory_space<vmem>>, vector<1x28x120xf32>
    %33 = vector.shape_cast %32 : vector<1x28x120xf32> to vector<28x120xf32>
    %cst_37 = arith.constant dense<0.000000e+00> : vector<24x120xf32>
    %34 = tpu.matmul %31, %33, %cst_37 {dimension_numbers = #tpu.dot_dimension_numbers<[1], [0], [0], [1], [0, 0, 1, 1], [], []>} : vector<24x28xf32>, vector<28x120xf32>, vector<24x120xf32> -> vector<24x120xf32>
    %35 = arith.addf %25, %34 : vector<24x120xf32>
    %c3_38 = arith.constant 3 : index
    %c0_39 = arith.constant 0 : index
    %c0_40 = arith.constant 0 : index
    %36 = vector.load %arg3[%c3_38, %c0_39, %c0_40] : memref<5x28x120xf32, #tpu.memory_space<vmem>>, vector<1x28x120xf32>
    %37 = vector.shape_cast %36 : vector<1x28x120xf32> to vector<28x120xf32>
    %cst_41 = arith.constant dense<0.000000e+00> : vector<24x120xf32>
    %38 = tpu.matmul %31, %37, %cst_41 {dimension_numbers = #tpu.dot_dimension_numbers<[1], [0], [0], [1], [0, 0, 1, 1], [], []>} : vector<24x28xf32>, vector<28x120xf32>, vector<24x120xf32> -> vector<24x120xf32>
    %39 = arith.addf %29, %38 : vector<24x120xf32>
    %c0_42 = arith.constant 0 : index
    %c4 = arith.constant 4 : index
    %c0_43 = arith.constant 0 : index
    %40 = vector.load %arg1[%c0_42, %c4, %c0_43] : memref<1x28x28xf32, #tpu.memory_space<vmem>>, vector<1x24x28xf32>
    %41 = vector.shape_cast %40 : vector<1x24x28xf32> to vector<24x28xf32>
    %c4_44 = arith.constant 4 : index
    %c0_45 = arith.constant 0 : index
    %c0_46 = arith.constant 0 : index
    %42 = vector.load %arg2[%c4_44, %c0_45, %c0_46] : memref<5x28x120xf32, #tpu.memory_space<vmem>>, vector<1x28x120xf32>
    %43 = vector.shape_cast %42 : vector<1x28x120xf32> to vector<28x120xf32>
    %cst_47 = arith.constant dense<0.000000e+00> : vector<24x120xf32>
    %44 = tpu.matmul %41, %43, %cst_47 {dimension_numbers = #tpu.dot_dimension_numbers<[1], [0], [0], [1], [0, 0, 1, 1], [], []>} : vector<24x28xf32>, vector<28x120xf32>, vector<24x120xf32> -> vector<24x120xf32>
    %45 = arith.addf %35, %44 : vector<24x120xf32>
    %c4_48 = arith.constant 4 : index
    %c0_49 = arith.constant 0 : index
    %c0_50 = arith.constant 0 : index
    %46 = vector.load %arg3[%c4_48, %c0_49, %c0_50] : memref<5x28x120xf32, #tpu.memory_space<vmem>>, vector<1x28x120xf32>
    %47 = vector.shape_cast %46 : vector<1x28x120xf32> to vector<28x120xf32>
    %cst_51 = arith.constant dense<0.000000e+00> : vector<24x120xf32>
    %48 = tpu.matmul %41, %47, %cst_51 {dimension_numbers = #tpu.dot_dimension_numbers<[1], [0], [0], [1], [0, 0, 1, 1], [], []>} : vector<24x28xf32>, vector<28x120xf32>, vector<24x120xf32> -> vector<24x120xf32>
    %49 = arith.addf %39, %48 : vector<24x120xf32>
    %50 = arith.maximumf %45, %49 : vector<24x120xf32>
    %51 = tpu.iota {dimensions = array<i32: 0>} : vector<12x24xi32>
    %52 = tpu.iota {dimensions = array<i32: 1>} : vector<12x24xi32>
    %c2_i32 = arith.constant 2 : i32
    %53 = vector.broadcast %c2_i32 : i32 to vector<12x24xi32>
    %54 = arith.muli %53, %51 : vector<12x24xi32>
    %c0_i32 = arith.constant 0 : i32
    %55 = vector.broadcast %c0_i32 : i32 to vector<12x24xi32>
    %56 = arith.addi %54, %55 : vector<12x24xi32>
    %57 = arith.cmpi eq, %52, %56 : vector<12x24xi32>
    %58 = arith.extui %57 : vector<12x24xi1> to vector<12x24xi32>
    %59 = arith.sitofp %58 : vector<12x24xi32> to vector<12x24xf32>
    %cst_52 = arith.constant dense<0.000000e+00> : vector<12x120xf32>
    %60 = tpu.matmul %59, %50, %cst_52 {dimension_numbers = #tpu.dot_dimension_numbers<[1], [0], [0], [1], [0, 0, 1, 1], [], []>} : vector<12x24xf32>, vector<24x120xf32>, vector<12x120xf32> -> vector<12x120xf32>
    %61 = tpu.iota {dimensions = array<i32: 0>} : vector<12x24xi32>
    %62 = tpu.iota {dimensions = array<i32: 1>} : vector<12x24xi32>
    %c2_i32_53 = arith.constant 2 : i32
    %63 = vector.broadcast %c2_i32_53 : i32 to vector<12x24xi32>
    %64 = arith.muli %63, %61 : vector<12x24xi32>
    %c1_i32 = arith.constant 1 : i32
    %65 = vector.broadcast %c1_i32 : i32 to vector<12x24xi32>
    %66 = arith.addi %64, %65 : vector<12x24xi32>
    %67 = arith.cmpi eq, %62, %66 : vector<12x24xi32>
    %68 = arith.extui %67 : vector<12x24xi1> to vector<12x24xi32>
    %69 = arith.sitofp %68 : vector<12x24xi32> to vector<12x24xf32>
    %cst_54 = arith.constant dense<0.000000e+00> : vector<12x120xf32>
    %70 = tpu.matmul %69, %50, %cst_54 {dimension_numbers = #tpu.dot_dimension_numbers<[1], [0], [0], [1], [0, 0, 1, 1], [], []>} : vector<12x24xf32>, vector<24x120xf32>, vector<12x120xf32> -> vector<12x120xf32>
    %71 = arith.maximumf %60, %70 : vector<12x120xf32>
    %c0_55 = arith.constant 0 : index
    %c0_56 = arith.constant 0 : index
    %72 = vector.load %arg4[%c0_55, %c0_56] : memref<1x120xf32, #tpu.memory_space<vmem>>, vector<1x120xf32>
    %73 = vector.broadcast %72 : vector<1x120xf32> to vector<12x120xf32>
    %74 = arith.addf %71, %73 : vector<12x120xf32>
    %cst_57 = arith.constant 0.000000e+00 : f32
    %75 = vector.broadcast %cst_57 : f32 to vector<12x120xf32>
    %76 = arith.maximumf %74, %75 : vector<12x120xf32>
    %c0_58 = arith.constant 0 : index
    %c0_59 = arith.constant 0 : index
    %77 = vector.load %arg13[%c0_58, %c0_59] : memref<12x120xf32, #tpu.memory_space<vmem>>, vector<12x120xf32>
    tpu.vector_store %arg13[%c0_58, %c0_59], %76 {strides = array<i32>} : memref<12x120xf32, #tpu.memory_space<vmem>>, vector<12x120xf32>,
    %c0_60 = arith.constant 0 : index
    %c0_61 = arith.constant 0 : index
    %78 = vector.load %arg13[%c0_60, %c0_61] : memref<12x120xf32, #tpu.memory_space<vmem>>, vector<8x120xf32>
    %c0_62 = arith.constant 0 : index
    %c0_63 = arith.constant 0 : index
    %c0_64 = arith.constant 0 : index
    %79 = vector.load %arg5[%c0_62, %c0_63, %c0_64] : memref<5x120x80xf32, #tpu.memory_space<vmem>>, vector<1x120x80xf32>
    %80 = vector.shape_cast %79 : vector<1x120x80xf32> to vector<120x80xf32>
    %cst_65 = arith.constant dense<0.000000e+00> : vector<8x80xf32>
    %81 = tpu.matmul %78, %80, %cst_65 {dimension_numbers = #tpu.dot_dimension_numbers<[1], [0], [0], [1], [0, 0, 1, 1], [], []>} : vector<8x120xf32>, vector<120x80xf32>, vector<8x80xf32> -> vector<8x80xf32>
    %c0_66 = arith.constant 0 : index
    %c0_67 = arith.constant 0 : index
    %82 = vector.load %arg13[%c0_66, %c0_67] : memref<12x120xf32, #tpu.memory_space<vmem>>, vector<8x120xf32>
    %c0_68 = arith.constant 0 : index
    %c0_69 = arith.constant 0 : index
    %c0_70 = arith.constant 0 : index
    %83 = vector.load %arg6[%c0_68, %c0_69, %c0_70] : memref<5x120x80xf32, #tpu.memory_space<vmem>>, vector<1x120x80xf32>
    %84 = vector.shape_cast %83 : vector<1x120x80xf32> to vector<120x80xf32>
    %cst_71 = arith.constant dense<0.000000e+00> : vector<8x80xf32>
    %85 = tpu.matmul %82, %84, %cst_71 {dimension_numbers = #tpu.dot_dimension_numbers<[1], [0], [0], [1], [0, 0, 1, 1], [], []>} : vector<8x120xf32>, vector<120x80xf32>, vector<8x80xf32> -> vector<8x80xf32>
    %c1_72 = arith.constant 1 : index
    %c0_73 = arith.constant 0 : index
    %86 = vector.load %arg13[%c1_72, %c0_73] : memref<12x120xf32, #tpu.memory_space<vmem>>, vector<8x120xf32>
    %c1_74 = arith.constant 1 : index
    %c0_75 = arith.constant 0 : index
    %c0_76 = arith.constant 0 : index
    %87 = vector.load %arg5[%c1_74, %c0_75, %c0_76] : memref<5x120x80xf32, #tpu.memory_space<vmem>>, vector<1x120x80xf32>
    %88 = vector.shape_cast %87 : vector<1x120x80xf32> to vector<120x80xf32>
    %cst_77 = arith.constant dense<0.000000e+00> : vector<8x80xf32>
    %89 = tpu.matmul %86, %88, %cst_77 {dimension_numbers = #tpu.dot_dimension_numbers<[1], [0], [0], [1], [0, 0, 1, 1], [], []>} : vector<8x120xf32>, vector<120x80xf32>, vector<8x80xf32> -> vector<8x80xf32>
    %90 = arith.addf %81, %89 : vector<8x80xf32>
    %c1_78 = arith.constant 1 : index
    %c0_79 = arith.constant 0 : index
    %c0_80 = arith.constant 0 : index
    %91 = vector.load %arg6[%c1_78, %c0_79, %c0_80] : memref<5x120x80xf32, #tpu.memory_space<vmem>>, vector<1x120x80xf32>
    %92 = vector.shape_cast %91 : vector<1x120x80xf32> to vector<120x80xf32>
    %cst_81 = arith.constant dense<0.000000e+00> : vector<8x80xf32>
    %93 = tpu.matmul %86, %92, %cst_81 {dimension_numbers = #tpu.dot_dimension_numbers<[1], [0], [0], [1], [0, 0, 1, 1], [], []>} : vector<8x120xf32>, vector<120x80xf32>, vector<8x80xf32> -> vector<8x80xf32>
    %94 = arith.addf %85, %93 : vector<8x80xf32>
    %c2_82 = arith.constant 2 : index
    %c0_83 = arith.constant 0 : index
    %95 = vector.load %arg13[%c2_82, %c0_83] : memref<12x120xf32, #tpu.memory_space<vmem>>, vector<8x120xf32>
    %c2_84 = arith.constant 2 : index
    %c0_85 = arith.constant 0 : index
    %c0_86 = arith.constant 0 : index
    %96 = vector.load %arg5[%c2_84, %c0_85, %c0_86] : memref<5x120x80xf32, #tpu.memory_space<vmem>>, vector<1x120x80xf32>
    %97 = vector.shape_cast %96 : vector<1x120x80xf32> to vector<120x80xf32>
    %cst_87 = arith.constant dense<0.000000e+00> : vector<8x80xf32>
    %98 = tpu.matmul %95, %97, %cst_87 {dimension_numbers = #tpu.dot_dimension_numbers<[1], [0], [0], [1], [0, 0, 1, 1], [], []>} : vector<8x120xf32>, vector<120x80xf32>, vector<8x80xf32> -> vector<8x80xf32>
    %99 = arith.addf %90, %98 : vector<8x80xf32>
    %c2_88 = arith.constant 2 : index
    %c0_89 = arith.constant 0 : index
    %c0_90 = arith.constant 0 : index
    %100 = vector.load %arg6[%c2_88, %c0_89, %c0_90] : memref<5x120x80xf32, #tpu.memory_space<vmem>>, vector<1x120x80xf32>
    %101 = vector.shape_cast %100 : vector<1x120x80xf32> to vector<120x80xf32>
    %cst_91 = arith.constant dense<0.000000e+00> : vector<8x80xf32>
    %102 = tpu.matmul %95, %101, %cst_91 {dimension_numbers = #tpu.dot_dimension_numbers<[1], [0], [0], [1], [0, 0, 1, 1], [], []>} : vector<8x120xf32>, vector<120x80xf32>, vector<8x80xf32> -> vector<8x80xf32>
    %103 = arith.addf %94, %102 : vector<8x80xf32>
    %c3_92 = arith.constant 3 : index
    %c0_93 = arith.constant 0 : index
    %104 = vector.load %arg13[%c3_92, %c0_93] : memref<12x120xf32, #tpu.memory_space<vmem>>, vector<8x120xf32>
    %c3_94 = arith.constant 3 : index
    %c0_95 = arith.constant 0 : index
    %c0_96 = arith.constant 0 : index
    %105 = vector.load %arg5[%c3_94, %c0_95, %c0_96] : memref<5x120x80xf32, #tpu.memory_space<vmem>>, vector<1x120x80xf32>
    %106 = vector.shape_cast %105 : vector<1x120x80xf32> to vector<120x80xf32>
    %cst_97 = arith.constant dense<0.000000e+00> : vector<8x80xf32>
    %107 = tpu.matmul %104, %106, %cst_97 {dimension_numbers = #tpu.dot_dimension_numbers<[1], [0], [0], [1], [0, 0, 1, 1], [], []>} : vector<8x120xf32>, vector<120x80xf32>, vector<8x80xf32> -> vector<8x80xf32>
    %108 = arith.addf %99, %107 : vector<8x80xf32>
    %c3_98 = arith.constant 3 : index
    %c0_99 = arith.constant 0 : index
    %c0_100 = arith.constant 0 : index
    %109 = vector.load %arg6[%c3_98, %c0_99, %c0_100] : memref<5x120x80xf32, #tpu.memory_space<vmem>>, vector<1x120x80xf32>
    %110 = vector.shape_cast %109 : vector<1x120x80xf32> to vector<120x80xf32>
    %cst_101 = arith.constant dense<0.000000e+00> : vector<8x80xf32>
    %111 = tpu.matmul %104, %110, %cst_101 {dimension_numbers = #tpu.dot_dimension_numbers<[1], [0], [0], [1], [0, 0, 1, 1], [], []>} : vector<8x120xf32>, vector<120x80xf32>, vector<8x80xf32> -> vector<8x80xf32>
    %112 = arith.addf %103, %111 : vector<8x80xf32>
    %c4_102 = arith.constant 4 : index
    %c0_103 = arith.constant 0 : index
    %113 = vector.load %arg13[%c4_102, %c0_103] : memref<12x120xf32, #tpu.memory_space<vmem>>, vector<8x120xf32>
    %c4_104 = arith.constant 4 : index
    %c0_105 = arith.constant 0 : index
    %c0_106 = arith.constant 0 : index
    %114 = vector.load %arg5[%c4_104, %c0_105, %c0_106] : memref<5x120x80xf32, #tpu.memory_space<vmem>>, vector<1x120x80xf32>
    %115 = vector.shape_cast %114 : vector<1x120x80xf32> to vector<120x80xf32>
    %cst_107 = arith.constant dense<0.000000e+00> : vector<8x80xf32>
    %116 = tpu.matmul %113, %115, %cst_107 {dimension_numbers = #tpu.dot_dimension_numbers<[1], [0], [0], [1], [0, 0, 1, 1], [], []>} : vector<8x120xf32>, vector<120x80xf32>, vector<8x80xf32> -> vector<8x80xf32>
    %117 = arith.addf %108, %116 : vector<8x80xf32>
    %c4_108 = arith.constant 4 : index
    %c0_109 = arith.constant 0 : index
    %c0_110 = arith.constant 0 : index
    %118 = vector.load %arg6[%c4_108, %c0_109, %c0_110] : memref<5x120x80xf32, #tpu.memory_space<vmem>>, vector<1x120x80xf32>
    %119 = vector.shape_cast %118 : vector<1x120x80xf32> to vector<120x80xf32>
    %cst_111 = arith.constant dense<0.000000e+00> : vector<8x80xf32>
    %120 = tpu.matmul %113, %119, %cst_111 {dimension_numbers = #tpu.dot_dimension_numbers<[1], [0], [0], [1], [0, 0, 1, 1], [], []>} : vector<8x120xf32>, vector<120x80xf32>, vector<8x80xf32> -> vector<8x80xf32>
    %121 = arith.addf %112, %120 : vector<8x80xf32>
    %122 = arith.maximumf %117, %121 : vector<8x80xf32>
    %123 = tpu.iota {dimensions = array<i32: 0>} : vector<4x8xi32>
    %124 = tpu.iota {dimensions = array<i32: 1>} : vector<4x8xi32>
    %c2_i32_112 = arith.constant 2 : i32
    %125 = vector.broadcast %c2_i32_112 : i32 to vector<4x8xi32>
    %126 = arith.muli %125, %123 : vector<4x8xi32>
    %c0_i32_113 = arith.constant 0 : i32
    %127 = vector.broadcast %c0_i32_113 : i32 to vector<4x8xi32>
    %128 = arith.addi %126, %127 : vector<4x8xi32>
    %129 = arith.cmpi eq, %124, %128 : vector<4x8xi32>
    %130 = arith.extui %129 : vector<4x8xi1> to vector<4x8xi32>
    %131 = arith.sitofp %130 : vector<4x8xi32> to vector<4x8xf32>
    %cst_114 = arith.constant dense<0.000000e+00> : vector<4x80xf32>
    %132 = tpu.matmul %131, %122, %cst_114 {dimension_numbers = #tpu.dot_dimension_numbers<[1], [0], [0], [1], [0, 0, 1, 1], [], []>} : vector<4x8xf32>, vector<8x80xf32>, vector<4x80xf32> -> vector<4x80xf32>
    %133 = tpu.iota {dimensions = array<i32: 0>} : vector<4x8xi32>
    %134 = tpu.iota {dimensions = array<i32: 1>} : vector<4x8xi32>
    %c2_i32_115 = arith.constant 2 : i32
    %135 = vector.broadcast %c2_i32_115 : i32 to vector<4x8xi32>
    %136 = arith.muli %135, %133 : vector<4x8xi32>
    %c1_i32_116 = arith.constant 1 : i32
    %137 = vector.broadcast %c1_i32_116 : i32 to vector<4x8xi32>
    %138 = arith.addi %136, %137 : vector<4x8xi32>
    %139 = arith.cmpi eq, %134, %138 : vector<4x8xi32>
    %140 = arith.extui %139 : vector<4x8xi1> to vector<4x8xi32>
    %141 = arith.sitofp %140 : vector<4x8xi32> to vector<4x8xf32>
    %cst_117 = arith.constant dense<0.000000e+00> : vector<4x80xf32>
    %142 = tpu.matmul %141, %122, %cst_117 {dimension_numbers = #tpu.dot_dimension_numbers<[1], [0], [0], [1], [0, 0, 1, 1], [], []>} : vector<4x8xf32>, vector<8x80xf32>, vector<4x80xf32> -> vector<4x80xf32>
    %143 = arith.maximumf %132, %142 : vector<4x80xf32>
    %c0_118 = arith.constant 0 : index
    %c0_119 = arith.constant 0 : index
    %144 = vector.load %arg7[%c0_118, %c0_119] : memref<1x80xf32, #tpu.memory_space<vmem>>, vector<1x80xf32>
    %145 = vector.broadcast %144 : vector<1x80xf32> to vector<4x80xf32>
    %146 = arith.addf %143, %145 : vector<4x80xf32>
    %cst_120 = arith.constant 0.000000e+00 : f32
    %147 = vector.broadcast %cst_120 : f32 to vector<4x80xf32>
    %148 = arith.maximumf %146, %147 : vector<4x80xf32>
    %c0_121 = arith.constant 0 : index
    %c0_122 = arith.constant 0 : index
    %149 = vector.load %arg14[%c0_121, %c0_122] : memref<4x80xf32, #tpu.memory_space<vmem>>, vector<4x80xf32>
    tpu.vector_store %arg14[%c0_121, %c0_122], %148 {strides = array<i32>} : memref<4x80xf32, #tpu.memory_space<vmem>>, vector<4x80xf32>,
    %c0_123 = arith.constant 0 : index
    %c0_124 = arith.constant 0 : index
    %150 = vector.load %arg14[%c0_123, %c0_124] : memref<4x80xf32, #tpu.memory_space<vmem>>, vector<1x80xf32>
    %c0_125 = arith.constant 0 : index
    %c0_126 = arith.constant 0 : index
    %151 = vector.load %arg8[%c0_125, %c0_126] : memref<320x50xf32, #tpu.memory_space<vmem>>, vector<80x50xf32>
    %cst_127 = arith.constant dense<0.000000e+00> : vector<1x50xf32>
    %152 = tpu.matmul %150, %151, %cst_127 {dimension_numbers = #tpu.dot_dimension_numbers<[1], [0], [0], [1], [0, 0, 1, 1], [], []>} : vector<1x80xf32>, vector<80x50xf32>, vector<1x50xf32> -> vector<1x50xf32>
    %c1_128 = arith.constant 1 : index
    %c0_129 = arith.constant 0 : index
    %153 = vector.load %arg14[%c1_128, %c0_129] : memref<4x80xf32, #tpu.memory_space<vmem>>, vector<1x80xf32>
    %c80 = arith.constant 80 : index
    %c0_130 = arith.constant 0 : index
    %154 = vector.load %arg8[%c80, %c0_130] : memref<320x50xf32, #tpu.memory_space<vmem>>, vector<80x50xf32>
    %cst_131 = arith.constant dense<0.000000e+00> : vector<1x50xf32>
    %155 = tpu.matmul %153, %154, %cst_131 {dimension_numbers = #tpu.dot_dimension_numbers<[1], [0], [0], [1], [0, 0, 1, 1], [], []>} : vector<1x80xf32>, vector<80x50xf32>, vector<1x50xf32> -> vector<1x50xf32>
    %156 = arith.addf %152, %155 : vector<1x50xf32>
    %c2_132 = arith.constant 2 : index
    %c0_133 = arith.constant 0 : index
    %157 = vector.load %arg14[%c2_132, %c0_133] : memref<4x80xf32, #tpu.memory_space<vmem>>, vector<1x80xf32>
    %c160 = arith.constant 160 : index
    %c0_134 = arith.constant 0 : index
    %158 = vector.load %arg8[%c160, %c0_134] : memref<320x50xf32, #tpu.memory_space<vmem>>, vector<80x50xf32>
    %cst_135 = arith.constant dense<0.000000e+00> : vector<1x50xf32>
    %159 = tpu.matmul %157, %158, %cst_135 {dimension_numbers = #tpu.dot_dimension_numbers<[1], [0], [0], [1], [0, 0, 1, 1], [], []>} : vector<1x80xf32>, vector<80x50xf32>, vector<1x50xf32> -> vector<1x50xf32>
    %160 = arith.addf %156, %159 : vector<1x50xf32>
    %c3_136 = arith.constant 3 : index
    %c0_137 = arith.constant 0 : index
    %161 = vector.load %arg14[%c3_136, %c0_137] : memref<4x80xf32, #tpu.memory_space<vmem>>, vector<1x80xf32>
    %c240 = arith.constant 240 : index
    %c0_138 = arith.constant 0 : index
    %162 = vector.load %arg8[%c240, %c0_138] : memref<320x50xf32, #tpu.memory_space<vmem>>, vector<80x50xf32>
    %cst_139 = arith.constant dense<0.000000e+00> : vector<1x50xf32>
    %163 = tpu.matmul %161, %162, %cst_139 {dimension_numbers = #tpu.dot_dimension_numbers<[1], [0], [0], [1], [0, 0, 1, 1], [], []>} : vector<1x80xf32>, vector<80x50xf32>, vector<1x50xf32> -> vector<1x50xf32>
    %164 = arith.addf %160, %163 : vector<1x50xf32>
    %c0_140 = arith.constant 0 : index
    %c0_141 = arith.constant 0 : index
    %165 = vector.load %arg9[%c0_140, %c0_141] : memref<1x50xf32, #tpu.memory_space<vmem>>, vector<1x50xf32>
    %166 = arith.addf %164, %165 : vector<1x50xf32>
    %cst_142 = arith.constant 0.000000e+00 : f32
    %167 = vector.broadcast %cst_142 : f32 to vector<1x50xf32>
    %168 = arith.maximumf %166, %167 : vector<1x50xf32>
    %c0_143 = arith.constant 0 : index
    %c0_144 = arith.constant 0 : index
    %169 = vector.load %arg10[%c0_143, %c0_144] : memref<50x10xf32, #tpu.memory_space<vmem>>, vector<50x10xf32>
    %cst_145 = arith.constant dense<0.000000e+00> : vector<1x10xf32>
    %170 = tpu.matmul %168, %169, %cst_145 {dimension_numbers = #tpu.dot_dimension_numbers<[1], [0], [0], [1], [0, 0, 1, 1], [], []>} : vector<1x50xf32>, vector<50x10xf32>, vector<1x10xf32> -> vector<1x10xf32>
    %c0_146 = arith.constant 0 : index
    %c0_147 = arith.constant 0 : index
    %171 = vector.load %arg11[%c0_146, %c0_147] : memref<1x10xf32, #tpu.memory_space<vmem>>, vector<1x10xf32>
    %172 = arith.addf %170, %171 : vector<1x10xf32>
    %cst_148 = arith.constant dense<0xFF800000> : vector<1xf32>
    %173 = vector.multi_reduction <maximumf>, %172, %cst_148 [1] : vector<1x10xf32> to vector<1xf32>
    %174 = vector.shape_cast %173 : vector<1xf32> to vector<1x1xf32>
    %175 = vector.broadcast %174 : vector<1x1xf32> to vector<1x10xf32>
    %176 = arith.subf %172, %175 : vector<1x10xf32>
    %177 = math.exp %176 : vector<1x10xf32>
    %cst_149 = arith.constant dense<0.000000e+00> : vector<1xf32>
    %178 = vector.multi_reduction <add>, %177, %cst_149 [1] : vector<1x10xf32> to vector<1xf32>
    %179 = vector.shape_cast %178 : vector<1xf32> to vector<1x1xf32>
    %180 = math.log %179 : vector<1x1xf32>
    %181 = vector.broadcast %180 : vector<1x1xf32> to vector<1x10xf32>
    %182 = arith.subf %176, %181 : vector<1x10xf32>
    %c0_150 = arith.constant 0 : index
    %c0_151 = arith.constant 0 : index
    %c0_152 = arith.constant 0 : index
    %183 = vector.load %arg12[%c0_150, %c0_151, %c0_152] : memref<1x1x10xf32, #tpu.memory_space<vmem>>, vector<1x1x10xf32>
    %184 = vector.shape_cast %183 : vector<1x1x10xf32> to vector<1x10xf32>
    %185 = vector.shape_cast %182 : vector<1x10xf32> to vector<1x1x10xf32>
    tpu.vector_store %arg12[%c0_150, %c0_151, %c0_152], %185 {strides = array<i32>} : memref<1x1x10xf32, #tpu.memory_space<vmem>>, vector<1x1x10xf32>,
    return
  }
  func.func @transform_0(%arg0: i32) -> (i32, i32, i32) {
    %c0_i32 = arith.constant 0 : i32
    %c0_i32_0 = arith.constant 0 : i32
    %c0_i32_1 = arith.constant 0 : i32
    return %arg0, %c0_i32, %c0_i32_0 : i32, i32, i32
  }
  func.func @transform_1(%arg0: i32) -> (i32, i32, i32) {
    %c0_i32 = arith.constant 0 : i32
    %c0_i32_0 = arith.constant 0 : i32
    %c0_i32_1 = arith.constant 0 : i32
    %c0_i32_2 = arith.constant 0 : i32
    return %c0_i32, %c0_i32_0, %c0_i32_1 : i32, i32, i32
  }
  func.func @transform_2(%arg0: i32) -> (i32, i32, i32) {
    %c0_i32 = arith.constant 0 : i32
    %c0_i32_0 = arith.constant 0 : i32
    %c0_i32_1 = arith.constant 0 : i32
    %c0_i32_2 = arith.constant 0 : i32
    return %c0_i32, %c0_i32_0, %c0_i32_1 : i32, i32, i32
  }
  func.func @transform_3(%arg0: i32) -> (i32, i32) {
    %c0_i32 = arith.constant 0 : i32
    %c0_i32_0 = arith.constant 0 : i32
    %c0_i32_1 = arith.constant 0 : i32
    return %c0_i32, %c0_i32_0 : i32, i32
  }
  func.func @transform_4(%arg0: i32) -> (i32, i32, i32) {
    %c0_i32 = arith.constant 0 : i32
    %c0_i32_0 = arith.constant 0 : i32
    %c0_i32_1 = arith.constant 0 : i32
    %c0_i32_2 = arith.constant 0 : i32
    return %c0_i32, %c0_i32_0, %c0_i32_1 : i32, i32, i32
  }
  func.func @transform_5(%arg0: i32) -> (i32, i32, i32) {
    %c0_i32 = arith.constant 0 : i32
    %c0_i32_0 = arith.constant 0 : i32
    %c0_i32_1 = arith.constant 0 : i32
    %c0_i32_2 = arith.constant 0 : i32
    return %c0_i32, %c0_i32_0, %c0_i32_1 : i32, i32, i32
  }
  func.func @transform_6(%arg0: i32) -> (i32, i32) {
    %c0_i32 = arith.constant 0 : i32
    %c0_i32_0 = arith.constant 0 : i32
    %c0_i32_1 = arith.constant 0 : i32
    return %c0_i32, %c0_i32_0 : i32, i32
  }
  func.func @transform_7(%arg0: i32) -> (i32, i32) {
    %c0_i32 = arith.constant 0 : i32
    %c0_i32_0 = arith.constant 0 : i32
    %c0_i32_1 = arith.constant 0 : i32
    return %c0_i32, %c0_i32_0 : i32, i32
  }
  func.func @transform_8(%arg0: i32) -> (i32, i32) {
    %c0_i32 = arith.constant 0 : i32
    %c0_i32_0 = arith.constant 0 : i32
    %c0_i32_1 = arith.constant 0 : i32
    return %c0_i32, %c0_i32_0 : i32, i32
  }
  func.func @transform_9(%arg0: i32) -> (i32, i32) {
    %c0_i32 = arith.constant 0 : i32
    %c0_i32_0 = arith.constant 0 : i32
    %c0_i32_1 = arith.constant 0 : i32
    return %c0_i32, %c0_i32_0 : i32, i32
  }
  func.func @transform_10(%arg0: i32) -> (i32, i32) {
    %c0_i32 = arith.constant 0 : i32
    %c0_i32_0 = arith.constant 0 : i32
    %c0_i32_1 = arith.constant 0 : i32
    return %c0_i32, %c0_i32_0 : i32, i32
  }
  func.func @transform_11(%arg0: i32) -> (i32, i32, i32) {
    %c0_i32 = arith.constant 0 : i32
    %c0_i32_0 = arith.constant 0 : i32
    %c0_i32_1 = arith.constant 0 : i32
    return %arg0, %c0_i32, %c0_i32_0 : i32, i32, i32
  }
}

</mosaic_0001>

<llo_original>
// kernel: net_forward.1
$region0: #{net_forward.1}
  #allocation0 [shape = 'u32[]', space=smem, size = 0x4, offset = 0x4, fixed_abs, tag = 'smem constant byte address 0x4 - core index']
  #allocation1 [shape = 'u32[144,128]{1,0:T(1,128)}', space=vmem, size = 0x12000, scoped, tag = 'internal scratch']
  #allocation2 [shape = 'f32[12,120]{1,0:T(8,128)}', space=vmem, size = 0x2000, scoped, tag = 'scratch operand']
  #allocation3 [shape = 'f32[4,80]{1,0:T(4,128)}', space=vmem, size = 0x800, scoped, tag = 'scratch operand']
  %s0 = inlined_call_operand.vmem [shape: f32[2,28,28], index: 0, kind: input, shape index: {}]
  %s1 = inlined_call_operand.vmem [shape: f32[5,28,120], index: 1, kind: input, shape index: {}]
  %s2 = inlined_call_operand.vmem [shape: f32[5,28,120], index: 2, kind: input, shape index: {}]
  %s3 = inlined_call_operand.vmem [shape: f32[1,120], index: 3, kind: input, shape index: {}]
  %s4 = inlined_call_operand.vmem [shape: f32[5,120,80], index: 4, kind: input, shape index: {}]
  %s5 = inlined_call_operand.vmem [shape: f32[5,120,80], index: 5, kind: input, shape index: {}]
  %s6 = inlined_call_operand.vmem [shape: f32[1,80], index: 6, kind: input, shape index: {}]
  %s7 = inlined_call_operand.vmem [shape: f32[320,50], index: 7, kind: input, shape index: {}]
  %s8 = inlined_call_operand.vmem [shape: f32[1,50], index: 8, kind: input, shape index: {}]
  %s9 = inlined_call_operand.vmem [shape: f32[50,10], index: 9, kind: input, shape index: {}]
  %s10 = inlined_call_operand.vmem [shape: f32[1,10], index: 10, kind: input, shape index: {}]
  %s11 = inlined_call_operand.hbm [shape: f32[2,1,10], index: 11, kind: output, shape index: {}]
  %s12 = sld [smem:[#allocation0]]
  $region77: #{net_forward.1} parent=0
    _
  %s14 = ssub.s32 1, %s12
  %s15 = scalar_select 0, %s14, %s12
  $region1: #{net_forward.1} parent=0
    #allocation4 [shape = 'u8[1024]{0}', space=vmem, size = 0x400, scoped, tag = 'output window, operand 0']
    #allocation5 [shape = 's32[2]{0}', space=sflag, size = 0x8, scoped, tag = 'scoped memory for net_forward.1']
    %16 = vsyncpa [#allocation5], 0
    %s17 = scalar_lea.sflag [#allocation5], 1
    %18 = vsyncpa %s17, 0
    loop: start=0, step=1, limit=4
    $region2: #{net_forward.1} parent=1 // loop_pre_header
      _
    $region3: #{net_forward.1} parent=1 // loop_header
      %s20 = sphi 0, %s24
      %p21 = scmp.ge.s32.totalorder %s20, 4
      %s30 = sphi 0, %s32
      %s33 = sphi 0, %s30
      %s34 = sphi 0, %s33
      %s50 = sphi 0, %s34
      %s54 = sphi 0, %s54
      %s56 = sphi 0, %s54
      %s57 = sphi 0, %s56
      %s71 = sphi 0, %s57
      %s75 = sphi 0, %s75
      %s77 = sphi 0, %s75
      %s78 = sphi 0, %s77
      %s92 = sphi 0, %s78
      %s96 = sphi 0, %s96
      %s98 = sphi 0, %s96
      %s99 = sphi 0, %s98
      %s113 = sphi 0, %s99
      %s117 = sphi 0, %s117
      %s119 = sphi 0, %s117
      %s120 = sphi 0, %s119
      %s134 = sphi 0, %s120
      %s138 = sphi 0, %s138
      %s140 = sphi 0, %s138
      %s141 = sphi 0, %s140
      %s155 = sphi 0, %s141
      %s159 = sphi 0, %s159
      %s161 = sphi 0, %s159
      %s162 = sphi 0, %s161
      %s176 = sphi 0, %s162
      %s180 = sphi 0, %s180
      %s182 = sphi 0, %s180
      %s183 = sphi 0, %s182
      %s197 = sphi 0, %s183
      %s201 = sphi 0, %s201
      %s203 = sphi 0, %s201
      %s204 = sphi 0, %s203
      %s218 = sphi 0, %s204
      %s222 = sphi 0, %s222
      %s224 = sphi 0, %s222
      %s225 = sphi 0, %s224
      %s239 = sphi 0, %s225
      %s243 = sphi 0, %s243
      %s245 = sphi 0, %s243
      %s246 = sphi 0, %s245
      %s260 = sphi 0, %s246
      %s266 = sphi 0, %s268
      %s269 = sphi 0, %s266
      %s270 = sphi 0, %s269
      %s286 = sphi 0, %s270
    $region4: #{net_forward.1} parent=1 // loop_header_branch
      %23 = sbr.rel (%p21) target = $region8
    $region5: #{net_forward.1} parent=1 // loop_body
      %s25 = ssub.s32 %s20, 1
      %s26 = ssub.s32 %s20, 2
      %s27 = sadd.s32 %s20, 1
      %s28 = ssub.s32 %s20, %s27
      %p29 = scmp.eq.s32.totalorder %s28, 0
      %s31 = sadd.s32 %s30, 1
      %s32 = scalar_select %p29, %s30, %s31
      %p35 = pneg %p29
      %p36 = scmp.eq.s32.totalorder %s20, 1
      %p37 = por %p35, %p36
      %p38 = scmp.ne.s32.totalorder %s30, %s33
      %p39 = scmp.eq.s32.totalorder %s20, 0
      %p40 = por %p38, %p39
      %p41 = scmp.ne.s32.totalorder %s30, %s33
      %p42 = scmp.eq.s32.totalorder %s25, 1
      %p43 = por %p41, %p42
      %p44 = scmp.ne.s32.totalorder %s33, %s34
      %p45 = scmp.eq.s32.totalorder %s25, 0
      %p46 = por %p44, %p45
      %p47 = scmp.ne.s32.totalorder %s33, %s34
      %p48 = scmp.eq.s32.totalorder %s26, 1
      %p49 = por %p47, %p48
      %p51 = scmp.ne.s32.totalorder %s34, %s50
      %p52 = scmp.eq.s32.totalorder %s26, 0
      %p53 = por %p51, %p52
      %s55 = sadd.s32 %s54, 1
      %p58 = scmp.eq.s32.totalorder %s20, 1
      %p59 = scmp.ne.s32.totalorder %s54, %s56
      %p60 = scmp.eq.s32.totalorder %s20, 0
      %p61 = por %p59, %p60
      %p62 = scmp.ne.s32.totalorder %s54, %s56
      %p63 = scmp.eq.s32.totalorder %s25, 1
      %p64 = por %p62, %p63
      %p65 = scmp.ne.s32.totalorder %s56, %s57
      %p66 = scmp.eq.s32.totalorder %s25, 0
      %p67 = por %p65, %p66
      %p68 = scmp.ne.s32.totalorder %s56, %s57
      %p69 = scmp.eq.s32.totalorder %s26, 1
      %p70 = por %p68, %p69
      %p72 = scmp.ne.s32.totalorder %s57, %s71
      %p73 = scmp.eq.s32.totalorder %s26, 0
      %p74 = por %p72, %p73
      %s76 = sadd.s32 %s75, 1
      %p79 = scmp.eq.s32.totalorder %s20, 1
      %p80 = scmp.ne.s32.totalorder %s75, %s77
      %p81 = scmp.eq.s32.totalorder %s20, 0
      %p82 = por %p80, %p81
      %p83 = scmp.ne.s32.totalorder %s75, %s77
      %p84 = scmp.eq.s32.totalorder %s25, 1
      %p85 = por %p83, %p84
      %p86 = scmp.ne.s32.totalorder %s77, %s78
      %p87 = scmp.eq.s32.totalorder %s25, 0
      %p88 = por %p86, %p87
      %p89 = scmp.ne.s32.totalorder %s77, %s78
      %p90 = scmp.eq.s32.totalorder %s26, 1
      %p91 = por %p89, %p90
      %p93 = scmp.ne.s32.totalorder %s78, %s92
      %p94 = scmp.eq.s32.totalorder %s26, 0
      %p95 = por %p93, %p94
      %s97 = sadd.s32 %s96, 1
      %p100 = scmp.eq.s32.totalorder %s20, 1
      %p101 = scmp.ne.s32.totalorder %s96, %s98
      %p102 = scmp.eq.s32.totalorder %s20, 0
      %p103 = por %p101, %p102
      %p104 = scmp.ne.s32.totalorder %s96, %s98
      %p105 = scmp.eq.s32.totalorder %s25, 1
      %p106 = por %p104, %p105
      %p107 = scmp.ne.s32.totalorder %s98, %s99
      %p108 = scmp.eq.s32.totalorder %s25, 0
      %p109 = por %p107, %p108
      %p110 = scmp.ne.s32.totalorder %s98, %s99
      %p111 = scmp.eq.s32.totalorder %s26, 1
      %p112 = por %p110, %p111
      %p114 = scmp.ne.s32.totalorder %s99, %s113
      %p115 = scmp.eq.s32.totalorder %s26, 0
      %p116 = por %p114, %p115
      %s118 = sadd.s32 %s117, 1
      %p121 = scmp.eq.s32.totalorder %s20, 1
      %p122 = scmp.ne.s32.totalorder %s117, %s119
      %p123 = scmp.eq.s32.totalorder %s20, 0
      %p124 = por %p122, %p123
      %p125 = scmp.ne.s32.totalorder %s117, %s119
      %p126 = scmp.eq.s32.totalorder %s25, 1
      %p127 = por %p125, %p126
      %p128 = scmp.ne.s32.totalorder %s119, %s120
      %p129 = scmp.eq.s32.totalorder %s25, 0
      %p130 = por %p128, %p129
      %p131 = scmp.ne.s32.totalorder %s119, %s120
      %p132 = scmp.eq.s32.totalorder %s26, 1
      %p133 = por %p131, %p132
      %p135 = scmp.ne.s32.totalorder %s120, %s134
      %p136 = scmp.eq.s32.totalorder %s26, 0
      %p137 = por %p135, %p136
      %s139 = sadd.s32 %s138, 1
      %p142 = scmp.eq.s32.totalorder %s20, 1
      %p143 = scmp.ne.s32.totalorder %s138, %s140
      %p144 = scmp.eq.s32.totalorder %s20, 0
      %p145 = por %p143, %p144
      %p146 = scmp.ne.s32.totalorder %s138, %s140
      %p147 = scmp.eq.s32.totalorder %s25, 1
      %p148 = por %p146, %p147
      %p149 = scmp.ne.s32.totalorder %s140, %s141
      %p150 = scmp.eq.s32.totalorder %s25, 0
      %p151 = por %p149, %p150
      %p152 = scmp.ne.s32.totalorder %s140, %s141
      %p153 = scmp.eq.s32.totalorder %s26, 1
      %p154 = por %p152, %p153
      %p156 = scmp.ne.s32.totalorder %s141, %s155
      %p157 = scmp.eq.s32.totalorder %s26, 0
      %p158 = por %p156, %p157
      %s160 = sadd.s32 %s159, 1
      %p163 = scmp.eq.s32.totalorder %s20, 1
      %p164 = scmp.ne.s32.totalorder %s159, %s161
      %p165 = scmp.eq.s32.totalorder %s20, 0
      %p166 = por %p164, %p165
      %p167 = scmp.ne.s32.totalorder %s159, %s161
      %p168 = scmp.eq.s32.totalorder %s25, 1
      %p169 = por %p167, %p168
      %p170 = scmp.ne.s32.totalorder %s161, %s162
      %p171 = scmp.eq.s32.totalorder %s25, 0
      %p172 = por %p170, %p171
      %p173 = scmp.ne.s32.totalorder %s161, %s162
      %p174 = scmp.eq.s32.totalorder %s26, 1
      %p175 = por %p173, %p174
      %p177 = scmp.ne.s32.totalorder %s162, %s176
      %p178 = scmp.eq.s32.totalorder %s26, 0
      %p179 = por %p177, %p178
      %s181 = sadd.s32 %s180, 1
      %p184 = scmp.eq.s32.totalorder %s20, 1
      %p185 = scmp.ne.s32.totalorder %s180, %s182
      %p186 = scmp.eq.s32.totalorder %s20, 0
      %p187 = por %p185, %p186
      %p188 = scmp.ne.s32.totalorder %s180, %s182
      %p189 = scmp.eq.s32.totalorder %s25, 1
      %p190 = por %p188, %p189
      %p191 = scmp.ne.s32.totalorder %s182, %s183
      %p192 = scmp.eq.s32.totalorder %s25, 0
      %p193 = por %p191, %p192
      %p194 = scmp.ne.s32.totalorder %s182, %s183
      %p195 = scmp.eq.s32.totalorder %s26, 1
      %p196 = por %p194, %p195
      %p198 = scmp.ne.s32.totalorder %s183, %s197
      %p199 = scmp.eq.s32.totalorder %s26, 0
      %p200 = por %p198, %p199
      %s202 = sadd.s32 %s201, 1
      %p205 = scmp.eq.s32.totalorder %s20, 1
      %p206 = scmp.ne.s32.totalorder %s201, %s203
      %p207 = scmp.eq.s32.totalorder %s20, 0
      %p208 = por %p206, %p207
      %p209 = scmp.ne.s32.totalorder %s201, %s203
      %p210 = scmp.eq.s32.totalorder %s25, 1
      %p211 = por %p209, %p210
      %p212 = scmp.ne.s32.totalorder %s203, %s204
      %p213 = scmp.eq.s32.totalorder %s25, 0
      %p214 = por %p212, %p213
      %p215 = scmp.ne.s32.totalorder %s203, %s204
      %p216 = scmp.eq.s32.totalorder %s26, 1
      %p217 = por %p215, %p216
      %p219 = scmp.ne.s32.totalorder %s204, %s218
      %p220 = scmp.eq.s32.totalorder %s26, 0
      %p221 = por %p219, %p220
      %s223 = sadd.s32 %s222, 1
      %p226 = scmp.eq.s32.totalorder %s20, 1
      %p227 = scmp.ne.s32.totalorder %s222, %s224
      %p228 = scmp.eq.s32.totalorder %s20, 0
      %p229 = por %p227, %p228
      %p230 = scmp.ne.s32.totalorder %s222, %s224
      %p231 = scmp.eq.s32.totalorder %s25, 1
      %p232 = por %p230, %p231
      %p233 = scmp.ne.s32.totalorder %s224, %s225
      %p234 = scmp.eq.s32.totalorder %s25, 0
      %p235 = por %p233, %p234
      %p236 = scmp.ne.s32.totalorder %s224, %s225
      %p237 = scmp.eq.s32.totalorder %s26, 1
      %p238 = por %p236, %p237
      %p240 = scmp.ne.s32.totalorder %s225, %s239
      %p241 = scmp.eq.s32.totalorder %s26, 0
      %p242 = por %p240, %p241
      %s244 = sadd.s32 %s243, 1
      %p247 = scmp.eq.s32.totalorder %s20, 1
      %p248 = scmp.ne.s32.totalorder %s243, %s245
      %p249 = scmp.eq.s32.totalorder %s20, 0
      %p250 = por %p248, %p249
      %p251 = scmp.ne.s32.totalorder %s243, %s245
      %p252 = scmp.eq.s32.totalorder %s25, 1
      %p253 = por %p251, %p252
      %p254 = scmp.ne.s32.totalorder %s245, %s246
      %p255 = scmp.eq.s32.totalorder %s25, 0
      %p256 = por %p254, %p255
      %p257 = scmp.ne.s32.totalorder %s245, %s246
      %p258 = scmp.eq.s32.totalorder %s26, 1
      %p259 = por %p257, %p258
      %p261 = scmp.ne.s32.totalorder %s246, %s260
      %p262 = scmp.eq.s32.totalorder %s26, 0
      %p263 = por %p261, %p262
      %s264 = ssub.s32 %s20, %s27
      %p265 = scmp.eq.s32.totalorder %s264, 0
      %s267 = sadd.s32 %s266, 1
      %s268 = scalar_select %p265, %s266, %s267
      %p271 = pneg %p265
      %p272 = scmp.eq.s32.totalorder %s20, 1
      %p273 = por %p271, %p272
      %p274 = scmp.ne.s32.totalorder %s266, %s269
      %p275 = scmp.eq.s32.totalorder %s20, 0
      %p276 = por %p274, %p275
      %p277 = scmp.ne.s32.totalorder %s266, %s269
      %p278 = scmp.eq.s32.totalorder %s25, 1
      %p279 = por %p277, %p278
      %p280 = scmp.ne.s32.totalorder %s269, %s270
      %p281 = scmp.eq.s32.totalorder %s25, 0
      %p282 = por %p280, %p281
      %p283 = scmp.ne.s32.totalorder %s269, %s270
      %p284 = scmp.eq.s32.totalorder %s26, 1
      %p285 = por %p283, %p284
      %p287 = scmp.ne.s32.totalorder %s270, %s286
      %p288 = scmp.eq.s32.totalorder %s26, 0
      %p289 = por %p287, %p288
      %p290 = scmp.le.s32.totalorder 1, %s20
      %p291 = scmp.lt.s32.totalorder %s20, 3
      %p292 = pnand %p290, %p291
      %p293 = pneg %p292
      // Predicated region
      $region9: #{net_forward.1} parent=5 // pred_check
        _
      $region10: #{net_forward.1} parent=5 // pred_check_branch
        %295 = sbr.rel (%p292) target = $region12
      $region11: #{net_forward.1} parent=5 // pred_region
        %s296 = ssub.s32 %s20, 1
        // Predicated region
        $region13: #{net_forward.1} parent=11 // pred_check
          %p297 = pneg %p67
        $region14: #{net_forward.1} parent=11 // pred_check_branch
          %299 = sbr.rel (%p297) target = $region16
        $region15: #{net_forward.1} parent=11 // pred_region
          _
        $region16: #{net_forward.1} parent=11 // pred_fallthru
          _
        // Predicated region
        $region17: #{net_forward.1} parent=11 // pred_check
          %p300 = pneg %p88
        $region18: #{net_forward.1} parent=11 // pred_check_branch
          %302 = sbr.rel (%p300) target = $region20
        $region19: #{net_forward.1} parent=11 // pred_region
          _
        $region20: #{net_forward.1} parent=11 // pred_fallthru
          _
        // Predicated region
        $region21: #{net_forward.1} parent=11 // pred_check
          %p303 = pneg %p109
        $region22: #{net_forward.1} parent=11 // pred_check_branch
          %305 = sbr.rel (%p303) target = $region24
        $region23: #{net_forward.1} parent=11 // pred_region
          _
        $region24: #{net_forward.1} parent=11 // pred_fallthru
          _
        // Predicated region
        $region25: #{net_forward.1} parent=11 // pred_check
          %p306 = pneg %p130
        $region26: #{net_forward.1} parent=11 // pred_check_branch
          %308 = sbr.rel (%p306) target = $region28
        $region27: #{net_forward.1} parent=11 // pred_region
          _
        $region28: #{net_forward.1} parent=11 // pred_fallthru
          _
        // Predicated region
        $region29: #{net_forward.1} parent=11 // pred_check
          %p309 = pneg %p151
        $region30: #{net_forward.1} parent=11 // pred_check_branch
          %311 = sbr.rel (%p309) target = $region32
        $region31: #{net_forward.1} parent=11 // pred_region
          _
        $region32: #{net_forward.1} parent=11 // pred_fallthru
          _
        // Predicated region
        $region33: #{net_forward.1} parent=11 // pred_check
          %p312 = pneg %p172
        $region34: #{net_forward.1} parent=11 // pred_check_branch
          %314 = sbr.rel (%p312) target = $region36
        $region35: #{net_forward.1} parent=11 // pred_region
          _
        $region36: #{net_forward.1} parent=11 // pred_fallthru
          _
        // Predicated region
        $region37: #{net_forward.1} parent=11 // pred_check
          %p315 = pneg %p193
        $region38: #{net_forward.1} parent=11 // pred_check_branch
          %317 = sbr.rel (%p315) target = $region40
        $region39: #{net_forward.1} parent=11 // pred_region
          _
        $region40: #{net_forward.1} parent=11 // pred_fallthru
          _
        // Predicated region
        $region41: #{net_forward.1} parent=11 // pred_check
          %p318 = pneg %p214
        $region42: #{net_forward.1} parent=11 // pred_check_branch
          %320 = sbr.rel (%p318) target = $region44
        $region43: #{net_forward.1} parent=11 // pred_region
          _
        $region44: #{net_forward.1} parent=11 // pred_fallthru
          _
        // Predicated region
        $region45: #{net_forward.1} parent=11 // pred_check
          %p321 = pneg %p235
        $region46: #{net_forward.1} parent=11 // pred_check_branch
          %323 = sbr.rel (%p321) target = $region48
        $region47: #{net_forward.1} parent=11 // pred_region
          _
        $region48: #{net_forward.1} parent=11 // pred_fallthru
          _
        // Predicated region
        $region49: #{net_forward.1} parent=11 // pred_check
          %p324 = pneg %p256
        $region50: #{net_forward.1} parent=11 // pred_check_branch
          %326 = sbr.rel (%p324) target = $region52
        $region51: #{net_forward.1} parent=11 // pred_region
          _
        $region52: #{net_forward.1} parent=11 // pred_fallthru
          _
      $region12: #{net_forward.1} parent=5 // pred_fallthru
        _
      %p327 = scmp.lt.s32.totalorder %s20, 2
      // Predicated region
      $region53: #{net_forward.1} parent=5 // pred_check
        %p328 = pneg %p327
      $region54: #{net_forward.1} parent=5 // pred_check_branch
        %330 = sbr.rel (%p328) target = $region56
      $region55: #{net_forward.1} parent=5 // pred_region
        // Predicated region
        $region57: #{net_forward.1} parent=55 // pred_check
          %p331 = pneg %p40
        $region58: #{net_forward.1} parent=55 // pred_check_branch
          %333 = sbr.rel (%p331) target = $region60
        $region59: #{net_forward.1} parent=55 // pred_region
          %p334 = scmp.lt.s32.totalorder %s20, 1
          %s335 = scalar_select %p334, %s20, 1
          %s336 = smul.addr %s335, 4
          %s337 = smul.addr %s336, 8
          %s338 = scalar_lea.vmem %s0, %s337
        $region60: #{net_forward.1} parent=55 // pred_fallthru
          _
      $region56: #{net_forward.1} parent=5 // pred_fallthru
        _
      %p339 = scmp.le.s32.totalorder 1, %s20
      %p340 = scmp.lt.s32.totalorder %s20, 3
      %p341 = pnand %p339, %p340
      %p342 = pneg %p341
      // Predicated region
      $region61: #{net_forward.1} parent=5 // pred_check
        _
      $region62: #{net_forward.1} parent=5 // pred_check_branch
        %344 = sbr.rel (%p341) target = $region64
      $region63: #{net_forward.1} parent=5 // pred_region
        %s345 = ssub.s32 %s20, 1
        %p346 = scmp.lt.s32.totalorder %s25, 1
        %s347 = scalar_select %p346, %s25, 1
        %s348 = smul.addr %s347, 4
        %s349 = smul.addr %s348, 8
        %s350 = scalar_lea.vmem %s0, %s349
        %p351 = pneg %p46
        %p352 = pneg %p43
        %p353 = pneg %p67
        %p354 = pneg %p64
        %p355 = pneg %p88
        %p356 = pneg %p85
        %p357 = pneg %p109
        %p358 = pneg %p106
        %p359 = pneg %p130
        %p360 = pneg %p127
        %p361 = pneg %p151
        %p362 = pneg %p148
        %p363 = pneg %p172
        %p364 = pneg %p169
        %p365 = pneg %p193
        %p366 = pneg %p190
        %p367 = pneg %p214
        %p368 = pneg %p211
        %p369 = pneg %p235
        %p370 = pneg %p232
        %p371 = pneg %p256
        %p372 = pneg %p253
        %p373 = pneg %p282
        %p374 = pneg %p279
        %s375 = sand.u32 %s269, 1
        %s376 = scalar_lea.sflag [#allocation5], %s375
        %s377 = sand.u32 %s269, 1
        %s378 = scalar_lea.vmem [#allocation4], %s377
        %p379 = scmp.lt.s32.totalorder %s25, 1
        %s380 = scalar_select %p379, %s25, 1
        %s381 = smul.addr %s380, 4
        %s382 = smul.addr %s381, 8
        %s383 = scalar_lea.vmem %s0, %s382
        %v384 = vld [vmem:[%s383] sm:$0xff]
        %v385 = vld [vmem:[%s383 + $0x8] sm:$0xff]
        %v386 = vld [vmem:[%s383 + $0x10] sm:$0xff]
        %v387 = vld [vmem:[%s1] sm:$0xff]
        %v388 = vld [vmem:[%s1 + $0x8] sm:$0xff]
        %v389 = vld [vmem:[%s1 + $0x10] sm:$0xff]
        %v390 = vld [vmem:[%s1 + $0x18] sm:$0xf]
        %v391 = vld [vmem:[%s2] sm:$0xff]
        %v392 = vld [vmem:[%s2 + $0x8] sm:$0xff]
        %v393 = vld [vmem:[%s2 + $0x10] sm:$0xff]
        %v394 = vld [vmem:[%s2 + $0x18] sm:$0xf]
        %v395 = vld [vmem:[%s383 + $0x1] sm:$0xff]
        %v396 = vld [vmem:[%s383 + $0x9] sm:$0xff]
        %v397 = vld [vmem:[%s383 + $0x11] sm:$0xff]
        %s398 = scalar_lea.vmem %s1, 32
        %v399 = vld [vmem:[%s398] sm:$0xff]
        %v400 = vld [vmem:[%s398 + $0x8] sm:$0xff]
        %v401 = vld [vmem:[%s398 + $0x10] sm:$0xff]
        %v402 = vld [vmem:[%s398 + $0x18] sm:$0xf]
        %vm403 = vcmask 228352
        %v405 = vsel %vm403, %v395, 0
        %v408 = vsel %vm403, %v396, 0
        %v411 = vsel %vm403, %v397, 0
        %vm413 = vcmask 1043456
        %v415 = vsel %vm413, %v402, 0
        %417 = vmatprep.subr.mxu0 0.0
        %418 = vmatpush1.msra.mxu0 0.0
        %419 = vmatprep.subr.mxu0 0.0
        %420 = vmatpush1.msra.mxu0 0.0
        %421 = vmatprep.subr.mxu0 0.0
        %422 = vmatpush1.msra.mxu0 0.0
        %423 = vmatprep.subr.mxu0 0.0
        %424 = vmatpush1.msra.mxu0 0.0
        %425 = vmatprep.subr.mxu0 0.0
        %426 = vmatpush1.msra.mxu0 0.0
        %427 = vmatprep.subr.mxu0 0.0
        %428 = vmatpush1.msra.mxu0 0.0
        %429 = vmatprep.subr.mxu0 0.0
        %430 = vmatpush1.msra.mxu0 0.0
        %431 = vmatprep.subr.mxu0 0.0
        %432 = vmatpush1.msra.mxu0 0.0
        %433 = vmatprep.subr.mxu0 0.0
        %434 = vmatpush1.msra.mxu0 0.0
        %435 = vmatprep.subr.mxu0 0.0
        %436 = vmatpush1.msra.mxu0 0.0
        %437 = vmatprep.subr.mxu0 0.0
        %438 = vmatpush1.msra.mxu0 0.0
        %439 = vmatprep.subr.mxu0 0.0
        %440 = vmatpush1.msra.mxu0 0.0
        %441 = vmatprep.subr.mxu0 0.0
        %442 = vmatpush1.msra.mxu0 %v415
        %443 = vmatprep.subr.mxu0 0.0
        %444 = vmatpush1.msra.mxu0 %v401
        %445 = vmatprep.subr.mxu0 0.0
        %446 = vmatpush1.msra.mxu0 %v400
        %447 = vmatprep.subr.mxu0 0.0
        %448 = vmatpush1.msra.mxu0 %v399
        %449 = vmatprep.subr.mxu0 0.0
        %450 = vmatpush2.msra.mxu0 0.0
        %451 = vmatprep.subr.mxu0 0.0
        %452 = vmatpush2.msra.mxu0 0.0
        %453 = vmatprep.subr.mxu0 0.0
        %454 = vmatpush2.msra.mxu0 0.0
        %455 = vmatprep.subr.mxu0 0.0
        %456 = vmatpush2.msra.mxu0 0.0
        %457 = vmatprep.subr.mxu0 0.0
        %458 = vmatpush2.msra.mxu0 0.0
        %459 = vmatprep.subr.mxu0 0.0
        %460 = vmatpush2.msra.mxu0 0.0
        %461 = vmatprep.subr.mxu0 0.0
        %462 = vmatpush2.msra.mxu0 0.0
        %463 = vmatprep.subr.mxu0 0.0
        %464 = vmatpush2.msra.mxu0 0.0
        %465 = vmatprep.subr.mxu0 0.0
        %466 = vmatpush2.msra.mxu0 0.0
        %467 = vmatprep.subr.mxu0 0.0
        %468 = vmatpush2.msra.mxu0 0.0
        %469 = vmatprep.subr.mxu0 0.0
        %470 = vmatpush2.msra.mxu0 0.0
        %471 = vmatprep.subr.mxu0 0.0
        %472 = vmatpush2.msra.mxu0 0.0
        %473 = vmatprep.subr.mxu0 0.0
        %474 = vmatpush2.msra.mxu0 0.0
        %475 = vmatprep.subr.mxu0 0.0
        %476 = vmatpush2.msra.mxu0 0.0
        %477 = vmatprep.subr.mxu0 0.0
        %478 = vmatpush2.msra.mxu0 0.0
        %479 = vmatprep.subr.mxu0 0.0
        %480 = vmatpush2.msra.mxu0 0.0
        %481 = vmatprep.mubr.f32.mxu0 0.0
        %482 = vmatmul.mubr.f32.gmra.mxu0 %v405
        %v483 = vpop.f32.mrf.mxu0
        %v484 = vadd.f32 0.0, %v483
        %v485 = vpop.f32.mrf.mxu0
        %486 = vmatprep.mubr.f32.mxu0 0.0
        %487 = vmatmul.mubr.f32.gmra.mxu0 %v408
        %v488 = vpop.f32.mrf.mxu0
        %v489 = vadd.f32 0.0, %v488
        %v490 = vpop.f32.mrf.mxu0
        %491 = vmatprep.mubr.f32.mxu0 0.0
        %492 = vmatmul.mubr.f32.gmra.mxu0 %v411
        %v493 = vpop.f32.mrf.mxu0
        %v494 = vadd.f32 0.0, %v493
        %v495 = vpop.f32.mrf.mxu0
        %496 = vdwg.mxu0
        %v498 = vsel %vm403, %v384, 0
        %v501 = vsel %vm403, %v385, 0
        %v504 = vsel %vm403, %v386, 0
        %v507 = vsel %vm413, %v390, 0
        %509 = vmatprep.subr.mxu0 0.0
        %510 = vmatpush1.msra.mxu0 0.0
        %511 = vmatprep.subr.mxu0 0.0
        %512 = vmatpush1.msra.mxu0 0.0
        %513 = vmatprep.subr.mxu0 0.0
        %514 = vmatpush1.msra.mxu0 0.0
        %515 = vmatprep.subr.mxu0 0.0
        %516 = vmatpush1.msra.mxu0 0.0
        %517 = vmatprep.subr.mxu0 0.0
        %518 = vmatpush1.msra.mxu0 0.0
        %519 = vmatprep.subr.mxu0 0.0
        %520 = vmatpush1.msra.mxu0 0.0
        %521 = vmatprep.subr.mxu0 0.0
        %522 = vmatpush1.msra.mxu0 0.0
        %523 = vmatprep.subr.mxu0 0.0
        %524 = vmatpush1.msra.mxu0 0.0
        %525 = vmatprep.subr.mxu0 0.0
        %526 = vmatpush1.msra.mxu0 0.0
        %527 = vmatprep.subr.mxu0 0.0
        %528 = vmatpush1.msra.mxu0 0.0
        %529 = vmatprep.subr.mxu0 0.0
        %530 = vmatpush1.msra.mxu0 0.0
        %531 = vmatprep.subr.mxu0 0.0
        %532 = vmatpush1.msra.mxu0 0.0
        %533 = vmatprep.subr.mxu0 0.0
        %534 = vmatpush1.msra.mxu0 %v507
        %535 = vmatprep.subr.mxu0 0.0
        %536 = vmatpush1.msra.mxu0 %v389
        %537 = vmatprep.subr.mxu0 0.0
        %538 = vmatpush1.msra.mxu0 %v388
        %539 = vmatprep.subr.mxu0 0.0
        %540 = vmatpush1.msra.mxu0 %v387
        %541 = vmatprep.subr.mxu0 0.0
        %542 = vmatpush2.msra.mxu0 0.0
        %543 = vmatprep.subr.mxu0 0.0
        %544 = vmatpush2.msra.mxu0 0.0
        %545 = vmatprep.subr.mxu0 0.0
        %546 = vmatpush2.msra.mxu0 0.0
        %547 = vmatprep.subr.mxu0 0.0
        %548 = vmatpush2.msra.mxu0 0.0
        %549 = vmatprep.subr.mxu0 0.0
        %550 = vmatpush2.msra.mxu0 0.0
        %551 = vmatprep.subr.mxu0 0.0
        %552 = vmatpush2.msra.mxu0 0.0
        %553 = vmatprep.subr.mxu0 0.0
        %554 = vmatpush2.msra.mxu0 0.0
        %555 = vmatprep.subr.mxu0 0.0
        %556 = vmatpush2.msra.mxu0 0.0
        %557 = vmatprep.subr.mxu0 0.0
        %558 = vmatpush2.msra.mxu0 0.0
        %559 = vmatprep.subr.mxu0 0.0
        %560 = vmatpush2.msra.mxu0 0.0
        %561 = vmatprep.subr.mxu0 0.0
        %562 = vmatpush2.msra.mxu0 0.0
        %563 = vmatprep.subr.mxu0 0.0
        %564 = vmatpush2.msra.mxu0 0.0
        %565 = vmatprep.subr.mxu0 0.0
        %566 = vmatpush2.msra.mxu0 0.0
        %567 = vmatprep.subr.mxu0 0.0
        %568 = vmatpush2.msra.mxu0 0.0
        %569 = vmatprep.subr.mxu0 0.0
        %570 = vmatpush2.msra.mxu0 0.0
        %571 = vmatprep.subr.mxu0 0.0
        %572 = vmatpush2.msra.mxu0 0.0
        %573 = vmatprep.mubr.f32.mxu0 0.0
        %574 = vmatmul.mubr.f32.gmra.mxu0 %v498
        %v575 = vpop.f32.mrf.mxu0
        %v576 = vadd.f32 %v484, %v575
        %v577 = vpop.f32.mrf.mxu0
        %578 = vmatprep.mubr.f32.mxu0 0.0
        %579 = vmatmul.mubr.f32.gmra.mxu0 %v501
        %v580 = vpop.f32.mrf.mxu0
        %v581 = vadd.f32 %v489, %v580
        %v582 = vpop.f32.mrf.mxu0
        %583 = vmatprep.mubr.f32.mxu0 0.0
        %584 = vmatmul.mubr.f32.gmra.mxu0 %v504
        %v585 = vpop.f32.mrf.mxu0
        %v586 = vadd.f32 %v494, %v585
        %v587 = vpop.f32.mrf.mxu0
        %588 = vdwg.mxu0
        %s589 = scalar_lea.vmem %s2, 32
        %v590 = vld [vmem:[%s589] sm:$0xff]
        %v591 = vld [vmem:[%s589 + $0x8] sm:$0xff]
        %v592 = vld [vmem:[%s589 + $0x10] sm:$0xff]
        %v593 = vld [vmem:[%s589 + $0x18] sm:$0xf]
        %v595 = vsel %vm413, %v593, 0
        %597 = vmatprep.subr.mxu0 0.0
        %598 = vmatpush1.msra.mxu0 0.0
        %599 = vmatprep.subr.mxu0 0.0
        %600 = vmatpush1.msra.mxu0 0.0
        %601 = vmatprep.subr.mxu0 0.0
        %602 = vmatpush1.msra.mxu0 0.0
        %603 = vmatprep.subr.mxu0 0.0
        %604 = vmatpush1.msra.mxu0 0.0
        %605 = vmatprep.subr.mxu0 0.0
        %606 = vmatpush1.msra.mxu0 0.0
        %607 = vmatprep.subr.mxu0 0.0
        %608 = vmatpush1.msra.mxu0 0.0
        %609 = vmatprep.subr.mxu0 0.0
        %610 = vmatpush1.msra.mxu0 0.0
        %611 = vmatprep.subr.mxu0 0.0
        %612 = vmatpush1.msra.mxu0 0.0
        %613 = vmatprep.subr.mxu0 0.0
        %614 = vmatpush1.msra.mxu0 0.0
        %615 = vmatprep.subr.mxu0 0.0
        %616 = vmatpush1.msra.mxu0 0.0
        %617 = vmatprep.subr.mxu0 0.0
        %618 = vmatpush1.msra.mxu0 0.0
        %619 = vmatprep.subr.mxu0 0.0
        %620 = vmatpush1.msra.mxu0 0.0
        %621 = vmatprep.subr.mxu0 0.0
        %622 = vmatpush1.msra.mxu0 %v595
        %623 = vmatprep.subr.mxu0 0.0
        %624 = vmatpush1.msra.mxu0 %v592
        %625 = vmatprep.subr.mxu0 0.0
        %626 = vmatpush1.msra.mxu0 %v591
        %627 = vmatprep.subr.mxu0 0.0
        %628 = vmatpush1.msra.mxu0 %v590
        %629 = vmatprep.subr.mxu0 0.0
        %630 = vmatpush2.msra.mxu0 0.0
        %631 = vmatprep.subr.mxu0 0.0
        %632 = vmatpush2.msra.mxu0 0.0
        %633 = vmatprep.subr.mxu0 0.0
        %634 = vmatpush2.msra.mxu0 0.0
        %635 = vmatprep.subr.mxu0 0.0
        %636 = vmatpush2.msra.mxu0 0.0
        %637 = vmatprep.subr.mxu0 0.0
        %638 = vmatpush2.msra.mxu0 0.0
        %639 = vmatprep.subr.mxu0 0.0
        %640 = vmatpush2.msra.mxu0 0.0
        %641 = vmatprep.subr.mxu0 0.0
        %642 = vmatpush2.msra.mxu0 0.0
        %643 = vmatprep.subr.mxu0 0.0
        %644 = vmatpush2.msra.mxu0 0.0
        %645 = vmatprep.subr.mxu0 0.0
        %646 = vmatpush2.msra.mxu0 0.0
        %647 = vmatprep.subr.mxu0 0.0
        %648 = vmatpush2.msra.mxu0 0.0
        %649 = vmatprep.subr.mxu0 0.0
        %650 = vmatpush2.msra.mxu0 0.0
        %651 = vmatprep.subr.mxu0 0.0
        %652 = vmatpush2.msra.mxu0 0.0
        %653 = vmatprep.subr.mxu0 0.0
        %654 = vmatpush2.msra.mxu0 0.0
        %655 = vmatprep.subr.mxu0 0.0
        %656 = vmatpush2.msra.mxu0 0.0
        %657 = vmatprep.subr.mxu0 0.0
        %658 = vmatpush2.msra.mxu0 0.0
        %659 = vmatprep.subr.mxu0 0.0
        %660 = vmatpush2.msra.mxu0 0.0
        %661 = vmatprep.mubr.f32.mxu0 0.0
        %662 = vmatmul.mubr.f32.gmra.mxu0 %v405
        %v663 = vpop.f32.mrf.mxu0
        %v664 = vadd.f32 0.0, %v663
        %v665 = vpop.f32.mrf.mxu0
        %666 = vmatprep.mubr.f32.mxu0 0.0
        %667 = vmatmul.mubr.f32.gmra.mxu0 %v408
        %v668 = vpop.f32.mrf.mxu0
        %v669 = vadd.f32 0.0, %v668
        %v670 = vpop.f32.mrf.mxu0
        %671 = vmatprep.mubr.f32.mxu0 0.0
        %672 = vmatmul.mubr.f32.gmra.mxu0 %v411
        %v673 = vpop.f32.mrf.mxu0
        %v674 = vadd.f32 0.0, %v673
        %v675 = vpop.f32.mrf.mxu0
        %676 = vdwg.mxu0
        %v678 = vsel %vm413, %v394, 0
        %680 = vmatprep.subr.mxu0 0.0
        %681 = vmatpush1.msra.mxu0 0.0
        %682 = vmatprep.subr.mxu0 0.0
        %683 = vmatpush1.msra.mxu0 0.0
        %684 = vmatprep.subr.mxu0 0.0
        %685 = vmatpush1.msra.mxu0 0.0
        %686 = vmatprep.subr.mxu0 0.0
        %687 = vmatpush1.msra.mxu0 0.0
        %688 = vmatprep.subr.mxu0 0.0
        %689 = vmatpush1.msra.mxu0 0.0
        %690 = vmatprep.subr.mxu0 0.0
        %691 = vmatpush1.msra.mxu0 0.0
        %692 = vmatprep.subr.mxu0 0.0
        %693 = vmatpush1.msra.mxu0 0.0
        %694 = vmatprep.subr.mxu0 0.0
        %695 = vmatpush1.msra.mxu0 0.0
        %696 = vmatprep.subr.mxu0 0.0
        %697 = vmatpush1.msra.mxu0 0.0
        %698 = vmatprep.subr.mxu0 0.0
        %699 = vmatpush1.msra.mxu0 0.0
        %700 = vmatprep.subr.mxu0 0.0
        %701 = vmatpush1.msra.mxu0 0.0
        %702 = vmatprep.subr.mxu0 0.0
        %703 = vmatpush1.msra.mxu0 0.0
        %704 = vmatprep.subr.mxu0 0.0
        %705 = vmatpush1.msra.mxu0 %v678
        %706 = vmatprep.subr.mxu0 0.0
        %707 = vmatpush1.msra.mxu0 %v393
        %708 = vmatprep.subr.mxu0 0.0
        %709 = vmatpush1.msra.mxu0 %v392
        %710 = vmatprep.subr.mxu0 0.0
        %711 = vmatpush1.msra.mxu0 %v391
        %712 = vmatprep.subr.mxu0 0.0
        %713 = vmatpush2.msra.mxu0 0.0
        %714 = vmatprep.subr.mxu0 0.0
        %715 = vmatpush2.msra.mxu0 0.0
        %716 = vmatprep.subr.mxu0 0.0
        %717 = vmatpush2.msra.mxu0 0.0
        %718 = vmatprep.subr.mxu0 0.0
        %719 = vmatpush2.msra.mxu0 0.0
        %720 = vmatprep.subr.mxu0 0.0
        %721 = vmatpush2.msra.mxu0 0.0
        %722 = vmatprep.subr.mxu0 0.0
        %723 = vmatpush2.msra.mxu0 0.0
        %724 = vmatprep.subr.mxu0 0.0
        %725 = vmatpush2.msra.mxu0 0.0
        %726 = vmatprep.subr.mxu0 0.0
        %727 = vmatpush2.msra.mxu0 0.0
        %728 = vmatprep.subr.mxu0 0.0
        %729 = vmatpush2.msra.mxu0 0.0
        %730 = vmatprep.subr.mxu0 0.0
        %731 = vmatpush2.msra.mxu0 0.0
        %732 = vmatprep.subr.mxu0 0.0
        %733 = vmatpush2.msra.mxu0 0.0
        %734 = vmatprep.subr.mxu0 0.0
        %735 = vmatpush2.msra.mxu0 0.0
        %736 = vmatprep.subr.mxu0 0.0
        %737 = vmatpush2.msra.mxu0 0.0
        %738 = vmatprep.subr.mxu0 0.0
        %739 = vmatpush2.msra.mxu0 0.0
        %740 = vmatprep.subr.mxu0 0.0
        %741 = vmatpush2.msra.mxu0 0.0
        %742 = vmatprep.subr.mxu0 0.0
        %743 = vmatpush2.msra.mxu0 0.0
        %744 = vmatprep.mubr.f32.mxu0 0.0
        %745 = vmatmul.mubr.f32.gmra.mxu0 %v498
        %v746 = vpop.f32.mrf.mxu0
        %v747 = vadd.f32 %v664, %v746
        %v748 = vpop.f32.mrf.mxu0
        %749 = vmatprep.mubr.f32.mxu0 0.0
        %750 = vmatmul.mubr.f32.gmra.mxu0 %v501
        %v751 = vpop.f32.mrf.mxu0
        %v752 = vadd.f32 %v669, %v751
        %v753 = vpop.f32.mrf.mxu0
        %754 = vmatprep.mubr.f32.mxu0 0.0
        %755 = vmatmul.mubr.f32.gmra.mxu0 %v504
        %v756 = vpop.f32.mrf.mxu0
        %v757 = vadd.f32 %v674, %v756
        %v758 = vpop.f32.mrf.mxu0
        %759 = vdwg.mxu0
        %v760 = vld [vmem:[%s383 + $0x2] sm:$0xff]
        %v761 = vld [vmem:[%s383 + $0xa] sm:$0xff]
        %v762 = vld [vmem:[%s383 + $0x12] sm:$0xff]
        %s763 = scalar_lea.vmem %s1, 64
        %v764 = vld [vmem:[%s763] sm:$0xff]
        %v765 = vld [vmem:[%s763 + $0x8] sm:$0xff]
        %v766 = vld [vmem:[%s763 + $0x10] sm:$0xff]
        %v767 = vld [vmem:[%s763 + $0x18] sm:$0xf]
        %v769 = vsel %vm403, %v760, 0
        %v772 = vsel %vm403, %v761, 0
        %v775 = vsel %vm403, %v762, 0
        %v778 = vsel %vm413, %v767, 0
        %780 = vmatprep.subr.mxu0 0.0
        %781 = vmatpush1.msra.mxu0 0.0
        %782 = vmatprep.subr.mxu0 0.0
        %783 = vmatpush1.msra.mxu0 0.0
        %784 = vmatprep.subr.mxu0 0.0
        %785 = vmatpush1.msra.mxu0 0.0
        %786 = vmatprep.subr.mxu0 0.0
        %787 = vmatpush1.msra.mxu0 0.0
        %788 = vmatprep.subr.mxu0 0.0
        %789 = vmatpush1.msra.mxu0 0.0
        %790 = vmatprep.subr.mxu0 0.0
        %791 = vmatpush1.msra.mxu0 0.0
        %792 = vmatprep.subr.mxu0 0.0
        %793 = vmatpush1.msra.mxu0 0.0
        %794 = vmatprep.subr.mxu0 0.0
        %795 = vmatpush1.msra.mxu0 0.0
        %796 = vmatprep.subr.mxu0 0.0
        %797 = vmatpush1.msra.mxu0 0.0
        %798 = vmatprep.subr.mxu0 0.0
        %799 = vmatpush1.msra.mxu0 0.0
        %800 = vmatprep.subr.mxu0 0.0
        %801 = vmatpush1.msra.mxu0 0.0
        %802 = vmatprep.subr.mxu0 0.0
        %803 = vmatpush1.msra.mxu0 0.0
        %804 = vmatprep.subr.mxu0 0.0
        %805 = vmatpush1.msra.mxu0 %v778
        %806 = vmatprep.subr.mxu0 0.0
        %807 = vmatpush1.msra.mxu0 %v766
        %808 = vmatprep.subr.mxu0 0.0
        %809 = vmatpush1.msra.mxu0 %v765
        %810 = vmatprep.subr.mxu0 0.0
        %811 = vmatpush1.msra.mxu0 %v764
        %812 = vmatprep.subr.mxu0 0.0
        %813 = vmatpush2.msra.mxu0 0.0
        %814 = vmatprep.subr.mxu0 0.0
        %815 = vmatpush2.msra.mxu0 0.0
        %816 = vmatprep.subr.mxu0 0.0
        %817 = vmatpush2.msra.mxu0 0.0
        %818 = vmatprep.subr.mxu0 0.0
        %819 = vmatpush2.msra.mxu0 0.0
        %820 = vmatprep.subr.mxu0 0.0
        %821 = vmatpush2.msra.mxu0 0.0
        %822 = vmatprep.subr.mxu0 0.0
        %823 = vmatpush2.msra.mxu0 0.0
        %824 = vmatprep.subr.mxu0 0.0
        %825 = vmatpush2.msra.mxu0 0.0
        %826 = vmatprep.subr.mxu0 0.0
        %827 = vmatpush2.msra.mxu0 0.0
        %828 = vmatprep.subr.mxu0 0.0
        %829 = vmatpush2.msra.mxu0 0.0
        %830 = vmatprep.subr.mxu0 0.0
        %831 = vmatpush2.msra.mxu0 0.0
        %832 = vmatprep.subr.mxu0 0.0
        %833 = vmatpush2.msra.mxu0 0.0
        %834 = vmatprep.subr.mxu0 0.0
        %835 = vmatpush2.msra.mxu0 0.0
        %836 = vmatprep.subr.mxu0 0.0
        %837 = vmatpush2.msra.mxu0 0.0
        %838 = vmatprep.subr.mxu0 0.0
        %839 = vmatpush2.msra.mxu0 0.0
        %840 = vmatprep.subr.mxu0 0.0
        %841 = vmatpush2.msra.mxu0 0.0
        %842 = vmatprep.subr.mxu0 0.0
        %843 = vmatpush2.msra.mxu0 0.0
        %844 = vmatprep.mubr.f32.mxu0 0.0
        %845 = vmatmul.mubr.f32.gmra.mxu0 %v769
        %v846 = vpop.f32.mrf.mxu0
        %v847 = vadd.f32 0.0, %v846
        %v848 = vpop.f32.mrf.mxu0
        %849 = vmatprep.mubr.f32.mxu0 0.0
        %850 = vmatmul.mubr.f32.gmra.mxu0 %v772
        %v851 = vpop.f32.mrf.mxu0
        %v852 = vadd.f32 0.0, %v851
        %v853 = vpop.f32.mrf.mxu0
        %854 = vmatprep.mubr.f32.mxu0 0.0
        %855 = vmatmul.mubr.f32.gmra.mxu0 %v775
        %v856 = vpop.f32.mrf.mxu0
        %v857 = vadd.f32 0.0, %v856
        %v858 = vpop.f32.mrf.mxu0
        %859 = vdwg.mxu0
        %v860 = vadd.f32 %v576, %v847
        %v861 = vadd.f32 %v581, %v852
        %v862 = vadd.f32 %v586, %v857
        %s863 = scalar_lea.vmem %s2, 64
        %v864 = vld [vmem:[%s863] sm:$0xff]
        %v865 = vld [vmem:[%s863 + $0x8] sm:$0xff]
        %v866 = vld [vmem:[%s863 + $0x10] sm:$0xff]
        %v867 = vld [vmem:[%s863 + $0x18] sm:$0xf]
        %v869 = vsel %vm413, %v867, 0
        %871 = vmatprep.subr.mxu0 0.0
        %872 = vmatpush1.msra.mxu0 0.0
        %873 = vmatprep.subr.mxu0 0.0
        %874 = vmatpush1.msra.mxu0 0.0
        %875 = vmatprep.subr.mxu0 0.0
        %876 = vmatpush1.msra.mxu0 0.0
        %877 = vmatprep.subr.mxu0 0.0
        %878 = vmatpush1.msra.mxu0 0.0
        %879 = vmatprep.subr.mxu0 0.0
        %880 = vmatpush1.msra.mxu0 0.0
        %881 = vmatprep.subr.mxu0 0.0
        %882 = vmatpush1.msra.mxu0 0.0
        %883 = vmatprep.subr.mxu0 0.0
        %884 = vmatpush1.msra.mxu0 0.0
        %885 = vmatprep.subr.mxu0 0.0
        %886 = vmatpush1.msra.mxu0 0.0
        %887 = vmatprep.subr.mxu0 0.0
        %888 = vmatpush1.msra.mxu0 0.0
        %889 = vmatprep.subr.mxu0 0.0
        %890 = vmatpush1.msra.mxu0 0.0
        %891 = vmatprep.subr.mxu0 0.0
        %892 = vmatpush1.msra.mxu0 0.0
        %893 = vmatprep.subr.mxu0 0.0
        %894 = vmatpush1.msra.mxu0 0.0
        %895 = vmatprep.subr.mxu0 0.0
        %896 = vmatpush1.msra.mxu0 %v869
        %897 = vmatprep.subr.mxu0 0.0
        %898 = vmatpush1.msra.mxu0 %v866
        %899 = vmatprep.subr.mxu0 0.0
        %900 = vmatpush1.msra.mxu0 %v865
        %901 = vmatprep.subr.mxu0 0.0
        %902 = vmatpush1.msra.mxu0 %v864
        %903 = vmatprep.subr.mxu0 0.0
        %904 = vmatpush2.msra.mxu0 0.0
        %905 = vmatprep.subr.mxu0 0.0
        %906 = vmatpush2.msra.mxu0 0.0
        %907 = vmatprep.subr.mxu0 0.0
        %908 = vmatpush2.msra.mxu0 0.0
        %909 = vmatprep.subr.mxu0 0.0
        %910 = vmatpush2.msra.mxu0 0.0
        %911 = vmatprep.subr.mxu0 0.0
        %912 = vmatpush2.msra.mxu0 0.0
        %913 = vmatprep.subr.mxu0 0.0
        %914 = vmatpush2.msra.mxu0 0.0
        %915 = vmatprep.subr.mxu0 0.0
        %916 = vmatpush2.msra.mxu0 0.0
        %917 = vmatprep.subr.mxu0 0.0
        %918 = vmatpush2.msra.mxu0 0.0
        %919 = vmatprep.subr.mxu0 0.0
        %920 = vmatpush2.msra.mxu0 0.0
        %921 = vmatprep.subr.mxu0 0.0
        %922 = vmatpush2.msra.mxu0 0.0
        %923 = vmatprep.subr.mxu0 0.0
        %924 = vmatpush2.msra.mxu0 0.0
        %925 = vmatprep.subr.mxu0 0.0
        %926 = vmatpush2.msra.mxu0 0.0
        %927 = vmatprep.subr.mxu0 0.0
        %928 = vmatpush2.msra.mxu0 0.0
        %929 = vmatprep.subr.mxu0 0.0
        %930 = vmatpush2.msra.mxu0 0.0
        %931 = vmatprep.subr.mxu0 0.0
        %932 = vmatpush2.msra.mxu0 0.0
        %933 = vmatprep.subr.mxu0 0.0
        %934 = vmatpush2.msra.mxu0 0.0
        %935 = vmatprep.mubr.f32.mxu0 0.0
        %936 = vmatmul.mubr.f32.gmra.mxu0 %v769
        %v937 = vpop.f32.mrf.mxu0
        %v938 = vadd.f32 0.0, %v937
        %v939 = vpop.f32.mrf.mxu0
        %940 = vmatprep.mubr.f32.mxu0 0.0
        %941 = vmatmul.mubr.f32.gmra.mxu0 %v772
        %v942 = vpop.f32.mrf.mxu0
        %v943 = vadd.f32 0.0, %v942
        %v944 = vpop.f32.mrf.mxu0
        %945 = vmatprep.mubr.f32.mxu0 0.0
        %946 = vmatmul.mubr.f32.gmra.mxu0 %v775
        %v947 = vpop.f32.mrf.mxu0
        %v948 = vadd.f32 0.0, %v947
        %v949 = vpop.f32.mrf.mxu0
        %950 = vdwg.mxu0
        %v951 = vadd.f32 %v747, %v938
        %v952 = vadd.f32 %v752, %v943
        %v953 = vadd.f32 %v757, %v948
        %v954 = vld [vmem:[%s383 + $0x3] sm:$0xff]
        %v955 = vld [vmem:[%s383 + $0xb] sm:$0xff]
        %v956 = vld [vmem:[%s383 + $0x13] sm:$0xff]
        %s957 = scalar_lea.vmem %s1, 96
        %v958 = vld [vmem:[%s957] sm:$0xff]
        %v959 = vld [vmem:[%s957 + $0x8] sm:$0xff]
        %v960 = vld [vmem:[%s957 + $0x10] sm:$0xff]
        %v961 = vld [vmem:[%s957 + $0x18] sm:$0xf]
        %v963 = vsel %vm403, %v954, 0
        %v966 = vsel %vm403, %v955, 0
        %v969 = vsel %vm403, %v956, 0
        %v972 = vsel %vm413, %v961, 0
        %974 = vmatprep.subr.mxu0 0.0
        %975 = vmatpush1.msra.mxu0 0.0
        %976 = vmatprep.subr.mxu0 0.0
        %977 = vmatpush1.msra.mxu0 0.0
        %978 = vmatprep.subr.mxu0 0.0
        %979 = vmatpush1.msra.mxu0 0.0
        %980 = vmatprep.subr.mxu0 0.0
        %981 = vmatpush1.msra.mxu0 0.0
        %982 = vmatprep.subr.mxu0 0.0
        %983 = vmatpush1.msra.mxu0 0.0
        %984 = vmatprep.subr.mxu0 0.0
        %985 = vmatpush1.msra.mxu0 0.0
        %986 = vmatprep.subr.mxu0 0.0
        %987 = vmatpush1.msra.mxu0 0.0
        %988 = vmatprep.subr.mxu0 0.0
        %989 = vmatpush1.msra.mxu0 0.0
        %990 = vmatprep.subr.mxu0 0.0
        %991 = vmatpush1.msra.mxu0 0.0
        %992 = vmatprep.subr.mxu0 0.0
        %993 = vmatpush1.msra.mxu0 0.0
        %994 = vmatprep.subr.mxu0 0.0
        %995 = vmatpush1.msra.mxu0 0.0
        %996 = vmatprep.subr.mxu0 0.0
        %997 = vmatpush1.msra.mxu0 0.0
        %998 = vmatprep.subr.mxu0 0.0
        %999 = vmatpush1.msra.mxu0 %v972
        %1000 = vmatprep.subr.mxu0 0.0
        %1001 = vmatpush1.msra.mxu0 %v960
        %1002 = vmatprep.subr.mxu0 0.0
        %1003 = vmatpush1.msra.mxu0 %v959
        %1004 = vmatprep.subr.mxu0 0.0
        %1005 = vmatpush1.msra.mxu0 %v958
        %1006 = vmatprep.subr.mxu0 0.0
        %1007 = vmatpush2.msra.mxu0 0.0
        %1008 = vmatprep.subr.mxu0 0.0
        %1009 = vmatpush2.msra.mxu0 0.0
        %1010 = vmatprep.subr.mxu0 0.0
        %1011 = vmatpush2.msra.mxu0 0.0
        %1012 = vmatprep.subr.mxu0 0.0
        %1013 = vmatpush2.msra.mxu0 0.0
        %1014 = vmatprep.subr.mxu0 0.0
        %1015 = vmatpush2.msra.mxu0 0.0
        %1016 = vmatprep.subr.mxu0 0.0
        %1017 = vmatpush2.msra.mxu0 0.0
        %1018 = vmatprep.subr.mxu0 0.0
        %1019 = vmatpush2.msra.mxu0 0.0
        %1020 = vmatprep.subr.mxu0 0.0
        %1021 = vmatpush2.msra.mxu0 0.0
        %1022 = vmatprep.subr.mxu0 0.0
        %1023 = vmatpush2.msra.mxu0 0.0
        %1024 = vmatprep.subr.mxu0 0.0
        %1025 = vmatpush2.msra.mxu0 0.0
        %1026 = vmatprep.subr.mxu0 0.0
        %1027 = vmatpush2.msra.mxu0 0.0
        %1028 = vmatprep.subr.mxu0 0.0
        %1029 = vmatpush2.msra.mxu0 0.0
        %1030 = vmatprep.subr.mxu0 0.0
        %1031 = vmatpush2.msra.mxu0 0.0
        %1032 = vmatprep.subr.mxu0 0.0
        %1033 = vmatpush2.msra.mxu0 0.0
        %1034 = vmatprep.subr.mxu0 0.0
        %1035 = vmatpush2.msra.mxu0 0.0
        %1036 = vmatprep.subr.mxu0 0.0
        %1037 = vmatpush2.msra.mxu0 0.0
        %1038 = vmatprep.mubr.f32.mxu0 0.0
        %1039 = vmatmul.mubr.f32.gmra.mxu0 %v963
        %v1040 = vpop.f32.mrf.mxu0
        %v1041 = vadd.f32 0.0, %v1040
        %v1042 = vpop.f32.mrf.mxu0
        %1043 = vmatprep.mubr.f32.mxu0 0.0
        %1044 = vmatmul.mubr.f32.gmra.mxu0 %v966
        %v1045 = vpop.f32.mrf.mxu0
        %v1046 = vadd.f32 0.0, %v1045
        %v1047 = vpop.f32.mrf.mxu0
        %1048 = vmatprep.mubr.f32.mxu0 0.0
        %1049 = vmatmul.mubr.f32.gmra.mxu0 %v969
        %v1050 = vpop.f32.mrf.mxu0
        %v1051 = vadd.f32 0.0, %v1050
        %v1052 = vpop.f32.mrf.mxu0
        %1053 = vdwg.mxu0
        %v1054 = vadd.f32 %v860, %v1041
        %v1055 = vadd.f32 %v861, %v1046
        %v1056 = vadd.f32 %v862, %v1051
        %s1057 = scalar_lea.vmem %s2, 96
        %v1058 = vld [vmem:[%s1057] sm:$0xff]
        %v1059 = vld [vmem:[%s1057 + $0x8] sm:$0xff]
        %v1060 = vld [vmem:[%s1057 + $0x10] sm:$0xff]
        %v1061 = vld [vmem:[%s1057 + $0x18] sm:$0xf]
        %v1063 = vsel %vm413, %v1061, 0
        %1065 = vmatprep.subr.mxu0 0.0
        %1066 = vmatpush1.msra.mxu0 0.0
        %1067 = vmatprep.subr.mxu0 0.0
        %1068 = vmatpush1.msra.mxu0 0.0
        %1069 = vmatprep.subr.mxu0 0.0
        %1070 = vmatpush1.msra.mxu0 0.0
        %1071 = vmatprep.subr.mxu0 0.0
        %1072 = vmatpush1.msra.mxu0 0.0
        %1073 = vmatprep.subr.mxu0 0.0
        %1074 = vmatpush1.msra.mxu0 0.0
        %1075 = vmatprep.subr.mxu0 0.0
        %1076 = vmatpush1.msra.mxu0 0.0
        %1077 = vmatprep.subr.mxu0 0.0
        %1078 = vmatpush1.msra.mxu0 0.0
        %1079 = vmatprep.subr.mxu0 0.0
        %1080 = vmatpush1.msra.mxu0 0.0
        %1081 = vmatprep.subr.mxu0 0.0
        %1082 = vmatpush1.msra.mxu0 0.0
        %1083 = vmatprep.subr.mxu0 0.0
        %1084 = vmatpush1.msra.mxu0 0.0
        %1085 = vmatprep.subr.mxu0 0.0
        %1086 = vmatpush1.msra.mxu0 0.0
        %1087 = vmatprep.subr.mxu0 0.0
        %1088 = vmatpush1.msra.mxu0 0.0
        %1089 = vmatprep.subr.mxu0 0.0
        %1090 = vmatpush1.msra.mxu0 %v1063
        %1091 = vmatprep.subr.mxu0 0.0
        %1092 = vmatpush1.msra.mxu0 %v1060
        %1093 = vmatprep.subr.mxu0 0.0
        %1094 = vmatpush1.msra.mxu0 %v1059
        %1095 = vmatprep.subr.mxu0 0.0
        %1096 = vmatpush1.msra.mxu0 %v1058
        %1097 = vmatprep.subr.mxu0 0.0
        %1098 = vmatpush2.msra.mxu0 0.0
        %1099 = vmatprep.subr.mxu0 0.0
        %1100 = vmatpush2.msra.mxu0 0.0
        %1101 = vmatprep.subr.mxu0 0.0
        %1102 = vmatpush2.msra.mxu0 0.0
        %1103 = vmatprep.subr.mxu0 0.0
        %1104 = vmatpush2.msra.mxu0 0.0
        %1105 = vmatprep.subr.mxu0 0.0
        %1106 = vmatpush2.msra.mxu0 0.0
        %1107 = vmatprep.subr.mxu0 0.0
        %1108 = vmatpush2.msra.mxu0 0.0
        %1109 = vmatprep.subr.mxu0 0.0
        %1110 = vmatpush2.msra.mxu0 0.0
        %1111 = vmatprep.subr.mxu0 0.0
        %1112 = vmatpush2.msra.mxu0 0.0
        %1113 = vmatprep.subr.mxu0 0.0
        %1114 = vmatpush2.msra.mxu0 0.0
        %1115 = vmatprep.subr.mxu0 0.0
        %1116 = vmatpush2.msra.mxu0 0.0
        %1117 = vmatprep.subr.mxu0 0.0
        %1118 = vmatpush2.msra.mxu0 0.0
        %1119 = vmatprep.subr.mxu0 0.0
        %1120 = vmatpush2.msra.mxu0 0.0
        %1121 = vmatprep.subr.mxu0 0.0
        %1122 = vmatpush2.msra.mxu0 0.0
        %1123 = vmatprep.subr.mxu0 0.0
        %1124 = vmatpush2.msra.mxu0 0.0
        %1125 = vmatprep.subr.mxu0 0.0
        %1126 = vmatpush2.msra.mxu0 0.0
        %1127 = vmatprep.subr.mxu0 0.0
        %1128 = vmatpush2.msra.mxu0 0.0
        %1129 = vmatprep.mubr.f32.mxu0 0.0
        %1130 = vmatmul.mubr.f32.gmra.mxu0 %v963
        %v1131 = vpop.f32.mrf.mxu0
        %v1132 = vadd.f32 0.0, %v1131
        %v1133 = vpop.f32.mrf.mxu0
        %1134 = vmatprep.mubr.f32.mxu0 0.0
        %1135 = vmatmul.mubr.f32.gmra.mxu0 %v966
        %v1136 = vpop.f32.mrf.mxu0
        %v1137 = vadd.f32 0.0, %v1136
        %v1138 = vpop.f32.mrf.mxu0
        %1139 = vmatprep.mubr.f32.mxu0 0.0
        %1140 = vmatmul.mubr.f32.gmra.mxu0 %v969
        %v1141 = vpop.f32.mrf.mxu0
        %v1142 = vadd.f32 0.0, %v1141
        %v1143 = vpop.f32.mrf.mxu0
        %1144 = vdwg.mxu0
        %v1145 = vadd.f32 %v951, %v1132
        %v1146 = vadd.f32 %v952, %v1137
        %v1147 = vadd.f32 %v953, %v1142
        %v1148 = vld [vmem:[%s383 + $0x4] sm:$0xff]
        %v1149 = vld [vmem:[%s383 + $0xc] sm:$0xff]
        %v1150 = vld [vmem:[%s383 + $0x14] sm:$0xff]
        %s1151 = scalar_lea.vmem %s1, 128
        %v1152 = vld [vmem:[%s1151] sm:$0xff]
        %v1153 = vld [vmem:[%s1151 + $0x8] sm:$0xff]
        %v1154 = vld [vmem:[%s1151 + $0x10] sm:$0xff]
        %v1155 = vld [vmem:[%s1151 + $0x18] sm:$0xf]
        %v1157 = vsel %vm403, %v1148, 0
        %v1160 = vsel %vm403, %v1149, 0
        %v1163 = vsel %vm403, %v1150, 0
        %v1166 = vsel %vm413, %v1155, 0
        %1168 = vmatprep.subr.mxu0 0.0
        %1169 = vmatpush1.msra.mxu0 0.0
        %1170 = vmatprep.subr.mxu0 0.0
        %1171 = vmatpush1.msra.mxu0 0.0
        %1172 = vmatprep.subr.mxu0 0.0
        %1173 = vmatpush1.msra.mxu0 0.0
        %1174 = vmatprep.subr.mxu0 0.0
        %1175 = vmatpush1.msra.mxu0 0.0
        %1176 = vmatprep.subr.mxu0 0.0
        %1177 = vmatpush1.msra.mxu0 0.0
        %1178 = vmatprep.subr.mxu0 0.0
        %1179 = vmatpush1.msra.mxu0 0.0
        %1180 = vmatprep.subr.mxu0 0.0
        %1181 = vmatpush1.msra.mxu0 0.0
        %1182 = vmatprep.subr.mxu0 0.0
        %1183 = vmatpush1.msra.mxu0 0.0
        %1184 = vmatprep.subr.mxu0 0.0
        %1185 = vmatpush1.msra.mxu0 0.0
        %1186 = vmatprep.subr.mxu0 0.0
        %1187 = vmatpush1.msra.mxu0 0.0
        %1188 = vmatprep.subr.mxu0 0.0
        %1189 = vmatpush1.msra.mxu0 0.0
        %1190 = vmatprep.subr.mxu0 0.0
        %1191 = vmatpush1.msra.mxu0 0.0
        %1192 = vmatprep.subr.mxu0 0.0
        %1193 = vmatpush1.msra.mxu0 %v1166
        %1194 = vmatprep.subr.mxu0 0.0
        %1195 = vmatpush1.msra.mxu0 %v1154
        %1196 = vmatprep.subr.mxu0 0.0
        %1197 = vmatpush1.msra.mxu0 %v1153
        %1198 = vmatprep.subr.mxu0 0.0
        %1199 = vmatpush1.msra.mxu0 %v1152
        %1200 = vmatprep.subr.mxu0 0.0
        %1201 = vmatpush2.msra.mxu0 0.0
        %1202 = vmatprep.subr.mxu0 0.0
        %1203 = vmatpush2.msra.mxu0 0.0
        %1204 = vmatprep.subr.mxu0 0.0
        %1205 = vmatpush2.msra.mxu0 0.0
        %1206 = vmatprep.subr.mxu0 0.0
        %1207 = vmatpush2.msra.mxu0 0.0
        %1208 = vmatprep.subr.mxu0 0.0
        %1209 = vmatpush2.msra.mxu0 0.0
        %1210 = vmatprep.subr.mxu0 0.0
        %1211 = vmatpush2.msra.mxu0 0.0
        %1212 = vmatprep.subr.mxu0 0.0
        %1213 = vmatpush2.msra.mxu0 0.0
        %1214 = vmatprep.subr.mxu0 0.0
        %1215 = vmatpush2.msra.mxu0 0.0
        %1216 = vmatprep.subr.mxu0 0.0
        %1217 = vmatpush2.msra.mxu0 0.0
        %1218 = vmatprep.subr.mxu0 0.0
        %1219 = vmatpush2.msra.mxu0 0.0
        %1220 = vmatprep.subr.mxu0 0.0
        %1221 = vmatpush2.msra.mxu0 0.0
        %1222 = vmatprep.subr.mxu0 0.0
        %1223 = vmatpush2.msra.mxu0 0.0
        %1224 = vmatprep.subr.mxu0 0.0
        %1225 = vmatpush2.msra.mxu0 0.0
        %1226 = vmatprep.subr.mxu0 0.0
        %1227 = vmatpush2.msra.mxu0 0.0
        %1228 = vmatprep.subr.mxu0 0.0
        %1229 = vmatpush2.msra.mxu0 0.0
        %1230 = vmatprep.subr.mxu0 0.0
        %1231 = vmatpush2.msra.mxu0 0.0
        %1232 = vmatprep.mubr.f32.mxu0 0.0
        %1233 = vmatmul.mubr.f32.gmra.mxu0 %v1157
        %v1234 = vpop.f32.mrf.mxu0
        %v1235 = vadd.f32 0.0, %v1234
        %v1236 = vpop.f32.mrf.mxu0
        %1237 = vmatprep.mubr.f32.mxu0 0.0
        %1238 = vmatmul.mubr.f32.gmra.mxu0 %v1160
        %v1239 = vpop.f32.mrf.mxu0
        %v1240 = vadd.f32 0.0, %v1239
        %v1241 = vpop.f32.mrf.mxu0
        %1242 = vmatprep.mubr.f32.mxu0 0.0
        %1243 = vmatmul.mubr.f32.gmra.mxu0 %v1163
        %v1244 = vpop.f32.mrf.mxu0
        %v1245 = vadd.f32 0.0, %v1244
        %v1246 = vpop.f32.mrf.mxu0
        %1247 = vdwg.mxu0
        %v1248 = vadd.f32 %v1054, %v1235
        %v1249 = vadd.f32 %v1055, %v1240
        %v1250 = vadd.f32 %v1056, %v1245
        %s1251 = scalar_lea.vmem %s2, 128
        %v1252 = vld [vmem:[%s1251] sm:$0xff]
        %v1253 = vld [vmem:[%s1251 + $0x8] sm:$0xff]
        %v1254 = vld [vmem:[%s1251 + $0x10] sm:$0xff]
        %v1255 = vld [vmem:[%s1251 + $0x18] sm:$0xf]
        %v1257 = vsel %vm413, %v1255, 0
        %1259 = vmatprep.subr.mxu0 0.0
        %1260 = vmatpush1.msra.mxu0 0.0
        %1261 = vmatprep.subr.mxu0 0.0
        %1262 = vmatpush1.msra.mxu0 0.0
        %1263 = vmatprep.subr.mxu0 0.0
        %1264 = vmatpush1.msra.mxu0 0.0
        %1265 = vmatprep.subr.mxu0 0.0
        %1266 = vmatpush1.msra.mxu0 0.0
        %1267 = vmatprep.subr.mxu0 0.0
        %1268 = vmatpush1.msra.mxu0 0.0
        %1269 = vmatprep.subr.mxu0 0.0
        %1270 = vmatpush1.msra.mxu0 0.0
        %1271 = vmatprep.subr.mxu0 0.0
        %1272 = vmatpush1.msra.mxu0 0.0
        %1273 = vmatprep.subr.mxu0 0.0
        %1274 = vmatpush1.msra.mxu0 0.0
        %1275 = vmatprep.subr.mxu0 0.0
        %1276 = vmatpush1.msra.mxu0 0.0
        %1277 = vmatprep.subr.mxu0 0.0
        %1278 = vmatpush1.msra.mxu0 0.0
        %1279 = vmatprep.subr.mxu0 0.0
        %1280 = vmatpush1.msra.mxu0 0.0
        %1281 = vmatprep.subr.mxu0 0.0
        %1282 = vmatpush1.msra.mxu0 0.0
        %1283 = vmatprep.subr.mxu0 0.0
        %1284 = vmatpush1.msra.mxu0 %v1257
        %1285 = vmatprep.subr.mxu0 0.0
        %1286 = vmatpush1.msra.mxu0 %v1254
        %1287 = vmatprep.subr.mxu0 0.0
        %1288 = vmatpush1.msra.mxu0 %v1253
        %1289 = vmatprep.subr.mxu0 0.0
        %1290 = vmatpush1.msra.mxu0 %v1252
        %1291 = vmatprep.subr.mxu0 0.0
        %1292 = vmatpush2.msra.mxu0 0.0
        %1293 = vmatprep.subr.mxu0 0.0
        %1294 = vmatpush2.msra.mxu0 0.0
        %1295 = vmatprep.subr.mxu0 0.0
        %1296 = vmatpush2.msra.mxu0 0.0
        %1297 = vmatprep.subr.mxu0 0.0
        %1298 = vmatpush2.msra.mxu0 0.0
        %1299 = vmatprep.subr.mxu0 0.0
        %1300 = vmatpush2.msra.mxu0 0.0
        %1301 = vmatprep.subr.mxu0 0.0
        %1302 = vmatpush2.msra.mxu0 0.0
        %1303 = vmatprep.subr.mxu0 0.0
        %1304 = vmatpush2.msra.mxu0 0.0
        %1305 = vmatprep.subr.mxu0 0.0
        %1306 = vmatpush2.msra.mxu0 0.0
        %1307 = vmatprep.subr.mxu0 0.0
        %1308 = vmatpush2.msra.mxu0 0.0
        %1309 = vmatprep.subr.mxu0 0.0
        %1310 = vmatpush2.msra.mxu0 0.0
        %1311 = vmatprep.subr.mxu0 0.0
        %1312 = vmatpush2.msra.mxu0 0.0
        %1313 = vmatprep.subr.mxu0 0.0
        %1314 = vmatpush2.msra.mxu0 0.0
        %1315 = vmatprep.subr.mxu0 0.0
        %1316 = vmatpush2.msra.mxu0 0.0
        %1317 = vmatprep.subr.mxu0 0.0
        %1318 = vmatpush2.msra.mxu0 0.0
        %1319 = vmatprep.subr.mxu0 0.0
        %1320 = vmatpush2.msra.mxu0 0.0
        %1321 = vmatprep.subr.mxu0 0.0
        %1322 = vmatpush2.msra.mxu0 0.0
        %1323 = vmatprep.mubr.f32.mxu0 0.0
        %1324 = vmatmul.mubr.f32.gmra.mxu0 %v1157
        %v1325 = vpop.f32.mrf.mxu0
        %v1326 = vadd.f32 0.0, %v1325
        %v1327 = vpop.f32.mrf.mxu0
        %1328 = vmatprep.mubr.f32.mxu0 0.0
        %1329 = vmatmul.mubr.f32.gmra.mxu0 %v1160
        %v1330 = vpop.f32.mrf.mxu0
        %v1331 = vadd.f32 0.0, %v1330
        %v1332 = vpop.f32.mrf.mxu0
        %1333 = vmatprep.mubr.f32.mxu0 0.0
        %1334 = vmatmul.mubr.f32.gmra.mxu0 %v1163
        %v1335 = vpop.f32.mrf.mxu0
        %v1336 = vadd.f32 0.0, %v1335
        %v1337 = vpop.f32.mrf.mxu0
        %1338 = vdwg.mxu0
        %v1339 = vadd.f32 %v1145, %v1326
        %v1340 = vadd.f32 %v1146, %v1331
        %v1341 = vadd.f32 %v1147, %v1336
        %v1342 = vmax.f32 %v1248, %v1339
        %v1343 = vmax.f32 %v1249, %v1340
        %v1344 = vmax.f32 %v1250, %v1341
        %v1345 = vlaneseq
        %v1346 = vshrl.u32 %v1345, 7
        %v1347 = vadd.s32 %v1346, 8
        %v1348 = vlaneseq
        %v1349 = vand.u32 %v1348, 127
        %v1350 = vmul.u32 %v1346, 2
        %v1351 = vmul.u32 %v1347, 2
        %vm1352 = vcmp.eq.s32.totalorder %v1349, %v1350
        %vm1353 = vcmp.eq.s32.totalorder %v1349, %v1351
        %v1354 = vsel %vm1352, 1, 0
        %v1355 = vsel %vm1353, 1, 0
        %v1356 = vcvt.s32.f32 %v1354
        %v1357 = vcvt.s32.f32 %v1355
        %vm1358 = vcmask 195584
        %v1360 = vsel %vm1358, %v1356, 0
        %v1363 = vsel %vm1358, %v1357, 0
        %1365 = vmatprep.subr.mxu0 0.0
        %1366 = vmatpush1.msra.mxu0 0.0
        %1367 = vmatprep.subr.mxu0 0.0
        %1368 = vmatpush1.msra.mxu0 0.0
        %1369 = vmatprep.subr.mxu0 0.0
        %1370 = vmatpush1.msra.mxu0 0.0
        %1371 = vmatprep.subr.mxu0 0.0
        %1372 = vmatpush1.msra.mxu0 0.0
        %1373 = vmatprep.subr.mxu0 0.0
        %1374 = vmatpush1.msra.mxu0 0.0
        %1375 = vmatprep.subr.mxu0 0.0
        %1376 = vmatpush1.msra.mxu0 0.0
        %1377 = vmatprep.subr.mxu0 0.0
        %1378 = vmatpush1.msra.mxu0 0.0
        %1379 = vmatprep.subr.mxu0 0.0
        %1380 = vmatpush1.msra.mxu0 0.0
        %1381 = vmatprep.subr.mxu0 0.0
        %1382 = vmatpush1.msra.mxu0 0.0
        %1383 = vmatprep.subr.mxu0 0.0
        %1384 = vmatpush1.msra.mxu0 0.0
        %1385 = vmatprep.subr.mxu0 0.0
        %1386 = vmatpush1.msra.mxu0 0.0
        %1387 = vmatprep.subr.mxu0 0.0
        %1388 = vmatpush1.msra.mxu0 0.0
        %1389 = vmatprep.subr.mxu0 0.0
        %1390 = vmatpush1.msra.mxu0 0.0
        %1391 = vmatprep.subr.mxu0 0.0
        %1392 = vmatpush1.msra.mxu0 %v1344
        %1393 = vmatprep.subr.mxu0 0.0
        %1394 = vmatpush1.msra.mxu0 %v1343
        %1395 = vmatprep.subr.mxu0 0.0
        %1396 = vmatpush1.msra.mxu0 %v1342
        %1397 = vmatprep.subr.mxu0 0.0
        %1398 = vmatpush2.msra.mxu0 0.0
        %1399 = vmatprep.subr.mxu0 0.0
        %1400 = vmatpush2.msra.mxu0 0.0
        %1401 = vmatprep.subr.mxu0 0.0
        %1402 = vmatpush2.msra.mxu0 0.0
        %1403 = vmatprep.subr.mxu0 0.0
        %1404 = vmatpush2.msra.mxu0 0.0
        %1405 = vmatprep.subr.mxu0 0.0
        %1406 = vmatpush2.msra.mxu0 0.0
        %1407 = vmatprep.subr.mxu0 0.0
        %1408 = vmatpush2.msra.mxu0 0.0
        %1409 = vmatprep.subr.mxu0 0.0
        %1410 = vmatpush2.msra.mxu0 0.0
        %1411 = vmatprep.subr.mxu0 0.0
        %1412 = vmatpush2.msra.mxu0 0.0
        %1413 = vmatprep.subr.mxu0 0.0
        %1414 = vmatpush2.msra.mxu0 0.0
        %1415 = vmatprep.subr.mxu0 0.0
        %1416 = vmatpush2.msra.mxu0 0.0
        %1417 = vmatprep.subr.mxu0 0.0
        %1418 = vmatpush2.msra.mxu0 0.0
        %1419 = vmatprep.subr.mxu0 0.0
        %1420 = vmatpush2.msra.mxu0 0.0
        %1421 = vmatprep.subr.mxu0 0.0
        %1422 = vmatpush2.msra.mxu0 0.0
        %1423 = vmatprep.subr.mxu0 0.0
        %1424 = vmatpush2.msra.mxu0 0.0
        %1425 = vmatprep.subr.mxu0 0.0
        %1426 = vmatpush2.msra.mxu0 0.0
        %1427 = vmatprep.subr.mxu0 0.0
        %1428 = vmatpush2.msra.mxu0 0.0
        %1429 = vmatprep.mubr.f32.mxu0 0.0
        %1430 = vmatmul.mubr.f32.gmra.mxu0 %v1360
        %v1431 = vpop.f32.mrf.mxu0
        %v1432 = vadd.f32 0.0, %v1431
        %v1433 = vpop.f32.mrf.mxu0
        %1434 = vmatprep.mubr.f32.mxu0 0.0
        %1435 = vmatmul.mubr.f32.gmra.mxu0 %v1363
        %v1436 = vpop.f32.mrf.mxu0
        %v1437 = vadd.f32 0.0, %v1436
        %v1438 = vpop.f32.mrf.mxu0
        %1439 = vdwg.mxu0
        %v1440 = vadd.s32 %v1350, 1
        %v1441 = vadd.s32 %v1351, 1
        %vm1442 = vcmp.eq.s32.totalorder %v1349, %v1440
        %vm1443 = vcmp.eq.s32.totalorder %v1349, %v1441
        %v1444 = vsel %vm1442, 1, 0
        %v1445 = vsel %vm1443, 1, 0
        %v1446 = vcvt.s32.f32 %v1444
        %v1447 = vcvt.s32.f32 %v1445
        %v1449 = vsel %vm1358, %v1446, 0
        %v1452 = vsel %vm1358, %v1447, 0
        %1454 = vmatprep.subr.mxu0 0.0
        %1455 = vmatpush1.msra.mxu0 0.0
        %1456 = vmatprep.subr.mxu0 0.0
        %1457 = vmatpush1.msra.mxu0 0.0
        %1458 = vmatprep.subr.mxu0 0.0
        %1459 = vmatpush1.msra.mxu0 0.0
        %1460 = vmatprep.subr.mxu0 0.0
        %1461 = vmatpush1.msra.mxu0 0.0
        %1462 = vmatprep.subr.mxu0 0.0
        %1463 = vmatpush1.msra.mxu0 0.0
        %1464 = vmatprep.subr.mxu0 0.0
        %1465 = vmatpush1.msra.mxu0 0.0
        %1466 = vmatprep.subr.mxu0 0.0
        %1467 = vmatpush1.msra.mxu0 0.0
        %1468 = vmatprep.subr.mxu0 0.0
        %1469 = vmatpush1.msra.mxu0 0.0
        %1470 = vmatprep.subr.mxu0 0.0
        %1471 = vmatpush1.msra.mxu0 0.0
        %1472 = vmatprep.subr.mxu0 0.0
        %1473 = vmatpush1.msra.mxu0 0.0
        %1474 = vmatprep.subr.mxu0 0.0
        %1475 = vmatpush1.msra.mxu0 0.0
        %1476 = vmatprep.subr.mxu0 0.0
        %1477 = vmatpush1.msra.mxu0 0.0
        %1478 = vmatprep.subr.mxu0 0.0
        %1479 = vmatpush1.msra.mxu0 0.0
        %1480 = vmatprep.subr.mxu0 0.0
        %1481 = vmatpush1.msra.mxu0 %v1344
        %1482 = vmatprep.subr.mxu0 0.0
        %1483 = vmatpush1.msra.mxu0 %v1343
        %1484 = vmatprep.subr.mxu0 0.0
        %1485 = vmatpush1.msra.mxu0 %v1342
        %1486 = vmatprep.subr.mxu0 0.0
        %1487 = vmatpush2.msra.mxu0 0.0
        %1488 = vmatprep.subr.mxu0 0.0
        %1489 = vmatpush2.msra.mxu0 0.0
        %1490 = vmatprep.subr.mxu0 0.0
        %1491 = vmatpush2.msra.mxu0 0.0
        %1492 = vmatprep.subr.mxu0 0.0
        %1493 = vmatpush2.msra.mxu0 0.0
        %1494 = vmatprep.subr.mxu0 0.0
        %1495 = vmatpush2.msra.mxu0 0.0
        %1496 = vmatprep.subr.mxu0 0.0
        %1497 = vmatpush2.msra.mxu0 0.0
        %1498 = vmatprep.subr.mxu0 0.0
        %1499 = vmatpush2.msra.mxu0 0.0
        %1500 = vmatprep.subr.mxu0 0.0
        %1501 = vmatpush2.msra.mxu0 0.0
        %1502 = vmatprep.subr.mxu0 0.0
        %1503 = vmatpush2.msra.mxu0 0.0
        %1504 = vmatprep.subr.mxu0 0.0
        %1505 = vmatpush2.msra.mxu0 0.0
        %1506 = vmatprep.subr.mxu0 0.0
        %1507 = vmatpush2.msra.mxu0 0.0
        %1508 = vmatprep.subr.mxu0 0.0
        %1509 = vmatpush2.msra.mxu0 0.0
        %1510 = vmatprep.subr.mxu0 0.0
        %1511 = vmatpush2.msra.mxu0 0.0
        %1512 = vmatprep.subr.mxu0 0.0
        %1513 = vmatpush2.msra.mxu0 0.0
        %1514 = vmatprep.subr.mxu0 0.0
        %1515 = vmatpush2.msra.mxu0 0.0
        %1516 = vmatprep.subr.mxu0 0.0
        %1517 = vmatpush2.msra.mxu0 0.0
        %1518 = vmatprep.mubr.f32.mxu0 0.0
        %1519 = vmatmul.mubr.f32.gmra.mxu0 %v1449
        %v1520 = vpop.f32.mrf.mxu0
        %v1521 = vadd.f32 0.0, %v1520
        %v1522 = vpop.f32.mrf.mxu0
        %1523 = vmatprep.mubr.f32.mxu0 0.0
        %1524 = vmatmul.mubr.f32.gmra.mxu0 %v1452
        %v1525 = vpop.f32.mrf.mxu0
        %v1526 = vadd.f32 0.0, %v1525
        %v1527 = vpop.f32.mrf.mxu0
        %1528 = vdwg.mxu0
        %v1529 = vmax.f32 %v1432, %v1521
        %v1530 = vmax.f32 %v1437, %v1526
        %v1531 = vld [vmem:[%s3] sm:$0x1]
        %v1533 = vlaneseq
        %v1534 = vshrl.u32 %v1533, 7
        %v1535 = vsub.s32 0, %v1534
        %v1536 = vrot.slane %v1531, %v1535
        %v1538 = vadd.f32 %v1529, %v1536
        %v1539 = vadd.f32 %v1530, %v1536
        %v1540 = vmax.f32 %v1538, 0.0
        %v1541 = vmax.f32 %v1539, 0.0
        %vm1542 = vcmask 982016
        %1543 = vst.msk [vmem:[#allocation2] sm:$0xff] %vm1542, %v1540
        %vm1544 = vcmask 977920
        %1545 = vst.msk [vmem:[#allocation2 + $0x8] sm:$0xf] %vm1544, %v1541
        %v1546 = vld [vmem:[#allocation2] sm:$0xff]
        %v1547 = vld [vmem:[%s4] sm:$0xff]
        %v1548 = vld [vmem:[%s4 + $0x8] sm:$0xff]
        %v1549 = vld [vmem:[%s4 + $0x10] sm:$0xff]
        %v1550 = vld [vmem:[%s4 + $0x18] sm:$0xff]
        %v1551 = vld [vmem:[%s4 + $0x20] sm:$0xff]
        %v1552 = vld [vmem:[%s4 + $0x28] sm:$0xff]
        %v1553 = vld [vmem:[%s4 + $0x30] sm:$0xff]
        %v1554 = vld [vmem:[%s4 + $0x38] sm:$0xff]
        %v1555 = vld [vmem:[%s4 + $0x40] sm:$0xff]
        %v1556 = vld [vmem:[%s4 + $0x48] sm:$0xff]
        %v1557 = vld [vmem:[%s4 + $0x50] sm:$0xff]
        %v1558 = vld [vmem:[%s4 + $0x58] sm:$0xff]
        %v1559 = vld [vmem:[%s4 + $0x60] sm:$0xff]
        %v1560 = vld [vmem:[%s4 + $0x68] sm:$0xff]
        %v1561 = vld [vmem:[%s4 + $0x70] sm:$0xff]
        %v1562 = vld [vmem:[%s5] sm:$0xff]
        %v1563 = vld [vmem:[%s5 + $0x8] sm:$0xff]
        %v1564 = vld [vmem:[%s5 + $0x10] sm:$0xff]
        %v1565 = vld [vmem:[%s5 + $0x18] sm:$0xff]
        %v1566 = vld [vmem:[%s5 + $0x20] sm:$0xff]
        %v1567 = vld [vmem:[%s5 + $0x28] sm:$0xff]
        %v1568 = vld [vmem:[%s5 + $0x30] sm:$0xff]
        %v1569 = vld [vmem:[%s5 + $0x38] sm:$0xff]
        %v1570 = vld [vmem:[%s5 + $0x40] sm:$0xff]
        %v1571 = vld [vmem:[%s5 + $0x48] sm:$0xff]
        %v1572 = vld [vmem:[%s5 + $0x50] sm:$0xff]
        %v1573 = vld [vmem:[%s5 + $0x58] sm:$0xff]
        %v1574 = vld [vmem:[%s5 + $0x60] sm:$0xff]
        %v1575 = vld [vmem:[%s5 + $0x68] sm:$0xff]
        %v1576 = vld [vmem:[%s5 + $0x70] sm:$0xff]
        %v1577 = vld [vmem:[#allocation2 + $0x1] sm:$0xff]
        %s1578 = scalar_lea.vmem %s4, 120
        %v1579 = vld [vmem:[%s1578] sm:$0xff]
        %v1580 = vld [vmem:[%s1578 + $0x8] sm:$0xff]
        %v1581 = vld [vmem:[%s1578 + $0x10] sm:$0xff]
        %v1582 = vld [vmem:[%s1578 + $0x18] sm:$0xff]
        %v1583 = vld [vmem:[%s1578 + $0x20] sm:$0xff]
        %v1584 = vld [vmem:[%s1578 + $0x28] sm:$0xff]
        %v1585 = vld [vmem:[%s1578 + $0x30] sm:$0xff]
        %v1586 = vld [vmem:[%s1578 + $0x38] sm:$0xff]
        %v1587 = vld [vmem:[%s1578 + $0x40] sm:$0xff]
        %v1588 = vld [vmem:[%s1578 + $0x48] sm:$0xff]
        %v1589 = vld [vmem:[%s1578 + $0x50] sm:$0xff]
        %v1590 = vld [vmem:[%s1578 + $0x58] sm:$0xff]
        %v1591 = vld [vmem:[%s1578 + $0x60] sm:$0xff]
        %v1592 = vld [vmem:[%s1578 + $0x68] sm:$0xff]
        %v1593 = vld [vmem:[%s1578 + $0x70] sm:$0xff]
        %v1595 = vsel %vm1542, %v1577, 0
        %1597 = vmatprep.subr.mxu0 0.0
        %1598 = vmatpush1.msra.mxu0 0.0
        %1599 = vmatprep.subr.mxu0 0.0
        %1600 = vmatpush1.msra.mxu0 %v1593
        %1601 = vmatprep.subr.mxu0 0.0
        %1602 = vmatpush1.msra.mxu0 %v1592
        %1603 = vmatprep.subr.mxu0 0.0
        %1604 = vmatpush1.msra.mxu0 %v1591
        %1605 = vmatprep.subr.mxu0 0.0
        %1606 = vmatpush1.msra.mxu0 %v1590
        %1607 = vmatprep.subr.mxu0 0.0
        %1608 = vmatpush1.msra.mxu0 %v1589
        %1609 = vmatprep.subr.mxu0 0.0
        %1610 = vmatpush1.msra.mxu0 %v1588
        %1611 = vmatprep.subr.mxu0 0.0
        %1612 = vmatpush1.msra.mxu0 %v1587
        %1613 = vmatprep.subr.mxu0 0.0
        %1614 = vmatpush1.msra.mxu0 %v1586
        %1615 = vmatprep.subr.mxu0 0.0
        %1616 = vmatpush1.msra.mxu0 %v1585
        %1617 = vmatprep.subr.mxu0 0.0
        %1618 = vmatpush1.msra.mxu0 %v1584
        %1619 = vmatprep.subr.mxu0 0.0
        %1620 = vmatpush1.msra.mxu0 %v1583
        %1621 = vmatprep.subr.mxu0 0.0
        %1622 = vmatpush1.msra.mxu0 %v1582
        %1623 = vmatprep.subr.mxu0 0.0
        %1624 = vmatpush1.msra.mxu0 %v1581
        %1625 = vmatprep.subr.mxu0 0.0
        %1626 = vmatpush1.msra.mxu0 %v1580
        %1627 = vmatprep.subr.mxu0 0.0
        %1628 = vmatpush1.msra.mxu0 %v1579
        %1629 = vmatprep.subr.mxu0 0.0
        %1630 = vmatpush2.msra.mxu0 0.0
        %1631 = vmatprep.subr.mxu0 0.0
        %1632 = vmatpush2.msra.mxu0 0.0
        %1633 = vmatprep.subr.mxu0 0.0
        %1634 = vmatpush2.msra.mxu0 0.0
        %1635 = vmatprep.subr.mxu0 0.0
        %1636 = vmatpush2.msra.mxu0 0.0
        %1637 = vmatprep.subr.mxu0 0.0
        %1638 = vmatpush2.msra.mxu0 0.0
        %1639 = vmatprep.subr.mxu0 0.0
        %1640 = vmatpush2.msra.mxu0 0.0
        %1641 = vmatprep.subr.mxu0 0.0
        %1642 = vmatpush2.msra.mxu0 0.0
        %1643 = vmatprep.subr.mxu0 0.0
        %1644 = vmatpush2.msra.mxu0 0.0
        %1645 = vmatprep.subr.mxu0 0.0
        %1646 = vmatpush2.msra.mxu0 0.0
        %1647 = vmatprep.subr.mxu0 0.0
        %1648 = vmatpush2.msra.mxu0 0.0
        %1649 = vmatprep.subr.mxu0 0.0
        %1650 = vmatpush2.msra.mxu0 0.0
        %1651 = vmatprep.subr.mxu0 0.0
        %1652 = vmatpush2.msra.mxu0 0.0
        %1653 = vmatprep.subr.mxu0 0.0
        %1654 = vmatpush2.msra.mxu0 0.0
        %1655 = vmatprep.subr.mxu0 0.0
        %1656 = vmatpush2.msra.mxu0 0.0
        %1657 = vmatprep.subr.mxu0 0.0
        %1658 = vmatpush2.msra.mxu0 0.0
        %1659 = vmatprep.subr.mxu0 0.0
        %1660 = vmatpush2.msra.mxu0 0.0
        %1661 = vmatprep.mubr.f32.mxu0 0.0
        %1662 = vmatmul.mubr.f32.gmra.mxu0 %v1595
        %v1663 = vpop.f32.mrf.mxu0
        %v1664 = vadd.f32 0.0, %v1663
        %v1665 = vpop.f32.mrf.mxu0
        %1666 = vdwg.mxu0
        %v1668 = vsel %vm1542, %v1546, 0
        %1670 = vmatprep.subr.mxu0 0.0
        %1671 = vmatpush1.msra.mxu0 0.0
        %1672 = vmatprep.subr.mxu0 0.0
        %1673 = vmatpush1.msra.mxu0 %v1561
        %1674 = vmatprep.subr.mxu0 0.0
        %1675 = vmatpush1.msra.mxu0 %v1560
        %1676 = vmatprep.subr.mxu0 0.0
        %1677 = vmatpush1.msra.mxu0 %v1559
        %1678 = vmatprep.subr.mxu0 0.0
        %1679 = vmatpush1.msra.mxu0 %v1558
        %1680 = vmatprep.subr.mxu0 0.0
        %1681 = vmatpush1.msra.mxu0 %v1557
        %1682 = vmatprep.subr.mxu0 0.0
        %1683 = vmatpush1.msra.mxu0 %v1556
        %1684 = vmatprep.subr.mxu0 0.0
        %1685 = vmatpush1.msra.mxu0 %v1555
        %1686 = vmatprep.subr.mxu0 0.0
        %1687 = vmatpush1.msra.mxu0 %v1554
        %1688 = vmatprep.subr.mxu0 0.0
        %1689 = vmatpush1.msra.mxu0 %v1553
        %1690 = vmatprep.subr.mxu0 0.0
        %1691 = vmatpush1.msra.mxu0 %v1552
        %1692 = vmatprep.subr.mxu0 0.0
        %1693 = vmatpush1.msra.mxu0 %v1551
        %1694 = vmatprep.subr.mxu0 0.0
        %1695 = vmatpush1.msra.mxu0 %v1550
        %1696 = vmatprep.subr.mxu0 0.0
        %1697 = vmatpush1.msra.mxu0 %v1549
        %1698 = vmatprep.subr.mxu0 0.0
        %1699 = vmatpush1.msra.mxu0 %v1548
        %1700 = vmatprep.subr.mxu0 0.0
        %1701 = vmatpush1.msra.mxu0 %v1547
        %1702 = vmatprep.subr.mxu0 0.0
        %1703 = vmatpush2.msra.mxu0 0.0
        %1704 = vmatprep.subr.mxu0 0.0
        %1705 = vmatpush2.msra.mxu0 0.0
        %1706 = vmatprep.subr.mxu0 0.0
        %1707 = vmatpush2.msra.mxu0 0.0
        %1708 = vmatprep.subr.mxu0 0.0
        %1709 = vmatpush2.msra.mxu0 0.0
        %1710 = vmatprep.subr.mxu0 0.0
        %1711 = vmatpush2.msra.mxu0 0.0
        %1712 = vmatprep.subr.mxu0 0.0
        %1713 = vmatpush2.msra.mxu0 0.0
        %1714 = vmatprep.subr.mxu0 0.0
        %1715 = vmatpush2.msra.mxu0 0.0
        %1716 = vmatprep.subr.mxu0 0.0
        %1717 = vmatpush2.msra.mxu0 0.0
        %1718 = vmatprep.subr.mxu0 0.0
        %1719 = vmatpush2.msra.mxu0 0.0
        %1720 = vmatprep.subr.mxu0 0.0
        %1721 = vmatpush2.msra.mxu0 0.0
        %1722 = vmatprep.subr.mxu0 0.0
        %1723 = vmatpush2.msra.mxu0 0.0
        %1724 = vmatprep.subr.mxu0 0.0
        %1725 = vmatpush2.msra.mxu0 0.0
        %1726 = vmatprep.subr.mxu0 0.0
        %1727 = vmatpush2.msra.mxu0 0.0
        %1728 = vmatprep.subr.mxu0 0.0
        %1729 = vmatpush2.msra.mxu0 0.0
        %1730 = vmatprep.subr.mxu0 0.0
        %1731 = vmatpush2.msra.mxu0 0.0
        %1732 = vmatprep.subr.mxu0 0.0
        %1733 = vmatpush2.msra.mxu0 0.0
        %1734 = vmatprep.mubr.f32.mxu0 0.0
        %1735 = vmatmul.mubr.f32.gmra.mxu0 %v1668
        %v1736 = vpop.f32.mrf.mxu0
        %v1737 = vadd.f32 %v1664, %v1736
        %v1738 = vpop.f32.mrf.mxu0
        %1739 = vdwg.mxu0
        %s1740 = scalar_lea.vmem %s5, 120
        %v1741 = vld [vmem:[%s1740] sm:$0xff]
        %v1742 = vld [vmem:[%s1740 + $0x8] sm:$0xff]
        %v1743 = vld [vmem:[%s1740 + $0x10] sm:$0xff]
        %v1744 = vld [vmem:[%s1740 + $0x18] sm:$0xff]
        %v1745 = vld [vmem:[%s1740 + $0x20] sm:$0xff]
        %v1746 = vld [vmem:[%s1740 + $0x28] sm:$0xff]
        %v1747 = vld [vmem:[%s1740 + $0x30] sm:$0xff]
        %v1748 = vld [vmem:[%s1740 + $0x38] sm:$0xff]
        %v1749 = vld [vmem:[%s1740 + $0x40] sm:$0xff]
        %v1750 = vld [vmem:[%s1740 + $0x48] sm:$0xff]
        %v1751 = vld [vmem:[%s1740 + $0x50] sm:$0xff]
        %v1752 = vld [vmem:[%s1740 + $0x58] sm:$0xff]
        %v1753 = vld [vmem:[%s1740 + $0x60] sm:$0xff]
        %v1754 = vld [vmem:[%s1740 + $0x68] sm:$0xff]
        %v1755 = vld [vmem:[%s1740 + $0x70] sm:$0xff]
        %1756 = vmatprep.subr.mxu0 0.0
        %1757 = vmatpush1.msra.mxu0 0.0
        %1758 = vmatprep.subr.mxu0 0.0
        %1759 = vmatpush1.msra.mxu0 %v1755
        %1760 = vmatprep.subr.mxu0 0.0
        %1761 = vmatpush1.msra.mxu0 %v1754
        %1762 = vmatprep.subr.mxu0 0.0
        %1763 = vmatpush1.msra.mxu0 %v1753
        %1764 = vmatprep.subr.mxu0 0.0
        %1765 = vmatpush1.msra.mxu0 %v1752
        %1766 = vmatprep.subr.mxu0 0.0
        %1767 = vmatpush1.msra.mxu0 %v1751
        %1768 = vmatprep.subr.mxu0 0.0
        %1769 = vmatpush1.msra.mxu0 %v1750
        %1770 = vmatprep.subr.mxu0 0.0
        %1771 = vmatpush1.msra.mxu0 %v1749
        %1772 = vmatprep.subr.mxu0 0.0
        %1773 = vmatpush1.msra.mxu0 %v1748
        %1774 = vmatprep.subr.mxu0 0.0
        %1775 = vmatpush1.msra.mxu0 %v1747
        %1776 = vmatprep.subr.mxu0 0.0
        %1777 = vmatpush1.msra.mxu0 %v1746
        %1778 = vmatprep.subr.mxu0 0.0
        %1779 = vmatpush1.msra.mxu0 %v1745
        %1780 = vmatprep.subr.mxu0 0.0
        %1781 = vmatpush1.msra.mxu0 %v1744
        %1782 = vmatprep.subr.mxu0 0.0
        %1783 = vmatpush1.msra.mxu0 %v1743
        %1784 = vmatprep.subr.mxu0 0.0
        %1785 = vmatpush1.msra.mxu0 %v1742
        %1786 = vmatprep.subr.mxu0 0.0
        %1787 = vmatpush1.msra.mxu0 %v1741
        %1788 = vmatprep.subr.mxu0 0.0
        %1789 = vmatpush2.msra.mxu0 0.0
        %1790 = vmatprep.subr.mxu0 0.0
        %1791 = vmatpush2.msra.mxu0 0.0
        %1792 = vmatprep.subr.mxu0 0.0
        %1793 = vmatpush2.msra.mxu0 0.0
        %1794 = vmatprep.subr.mxu0 0.0
        %1795 = vmatpush2.msra.mxu0 0.0
        %1796 = vmatprep.subr.mxu0 0.0
        %1797 = vmatpush2.msra.mxu0 0.0
        %1798 = vmatprep.subr.mxu0 0.0
        %1799 = vmatpush2.msra.mxu0 0.0
        %1800 = vmatprep.subr.mxu0 0.0
        %1801 = vmatpush2.msra.mxu0 0.0
        %1802 = vmatprep.subr.mxu0 0.0
        %1803 = vmatpush2.msra.mxu0 0.0
        %1804 = vmatprep.subr.mxu0 0.0
        %1805 = vmatpush2.msra.mxu0 0.0
        %1806 = vmatprep.subr.mxu0 0.0
        %1807 = vmatpush2.msra.mxu0 0.0
        %1808 = vmatprep.subr.mxu0 0.0
        %1809 = vmatpush2.msra.mxu0 0.0
        %1810 = vmatprep.subr.mxu0 0.0
        %1811 = vmatpush2.msra.mxu0 0.0
        %1812 = vmatprep.subr.mxu0 0.0
        %1813 = vmatpush2.msra.mxu0 0.0
        %1814 = vmatprep.subr.mxu0 0.0
        %1815 = vmatpush2.msra.mxu0 0.0
        %1816 = vmatprep.subr.mxu0 0.0
        %1817 = vmatpush2.msra.mxu0 0.0
        %1818 = vmatprep.subr.mxu0 0.0
        %1819 = vmatpush2.msra.mxu0 0.0
        %1820 = vmatprep.mubr.f32.mxu0 0.0
        %1821 = vmatmul.mubr.f32.gmra.mxu0 %v1595
        %v1822 = vpop.f32.mrf.mxu0
        %v1823 = vadd.f32 0.0, %v1822
        %v1824 = vpop.f32.mrf.mxu0
        %1825 = vdwg.mxu0
        %1826 = vmatprep.subr.mxu0 0.0
        %1827 = vmatpush1.msra.mxu0 0.0
        %1828 = vmatprep.subr.mxu0 0.0
        %1829 = vmatpush1.msra.mxu0 %v1576
        %1830 = vmatprep.subr.mxu0 0.0
        %1831 = vmatpush1.msra.mxu0 %v1575
        %1832 = vmatprep.subr.mxu0 0.0
        %1833 = vmatpush1.msra.mxu0 %v1574
        %1834 = vmatprep.subr.mxu0 0.0
        %1835 = vmatpush1.msra.mxu0 %v1573
        %1836 = vmatprep.subr.mxu0 0.0
        %1837 = vmatpush1.msra.mxu0 %v1572
        %1838 = vmatprep.subr.mxu0 0.0
        %1839 = vmatpush1.msra.mxu0 %v1571
        %1840 = vmatprep.subr.mxu0 0.0
        %1841 = vmatpush1.msra.mxu0 %v1570
        %1842 = vmatprep.subr.mxu0 0.0
        %1843 = vmatpush1.msra.mxu0 %v1569
        %1844 = vmatprep.subr.mxu0 0.0
        %1845 = vmatpush1.msra.mxu0 %v1568
        %1846 = vmatprep.subr.mxu0 0.0
        %1847 = vmatpush1.msra.mxu0 %v1567
        %1848 = vmatprep.subr.mxu0 0.0
        %1849 = vmatpush1.msra.mxu0 %v1566
        %1850 = vmatprep.subr.mxu0 0.0
        %1851 = vmatpush1.msra.mxu0 %v1565
        %1852 = vmatprep.subr.mxu0 0.0
        %1853 = vmatpush1.msra.mxu0 %v1564
        %1854 = vmatprep.subr.mxu0 0.0
        %1855 = vmatpush1.msra.mxu0 %v1563
        %1856 = vmatprep.subr.mxu0 0.0
        %1857 = vmatpush1.msra.mxu0 %v1562
        %1858 = vmatprep.subr.mxu0 0.0
        %1859 = vmatpush2.msra.mxu0 0.0
        %1860 = vmatprep.subr.mxu0 0.0
        %1861 = vmatpush2.msra.mxu0 0.0
        %1862 = vmatprep.subr.mxu0 0.0
        %1863 = vmatpush2.msra.mxu0 0.0
        %1864 = vmatprep.subr.mxu0 0.0
        %1865 = vmatpush2.msra.mxu0 0.0
        %1866 = vmatprep.subr.mxu0 0.0
        %1867 = vmatpush2.msra.mxu0 0.0
        %1868 = vmatprep.subr.mxu0 0.0
        %1869 = vmatpush2.msra.mxu0 0.0
        %1870 = vmatprep.subr.mxu0 0.0
        %1871 = vmatpush2.msra.mxu0 0.0
        %1872 = vmatprep.subr.mxu0 0.0
        %1873 = vmatpush2.msra.mxu0 0.0
        %1874 = vmatprep.subr.mxu0 0.0
        %1875 = vmatpush2.msra.mxu0 0.0
        %1876 = vmatprep.subr.mxu0 0.0
        %1877 = vmatpush2.msra.mxu0 0.0
        %1878 = vmatprep.subr.mxu0 0.0
        %1879 = vmatpush2.msra.mxu0 0.0
        %1880 = vmatprep.subr.mxu0 0.0
        %1881 = vmatpush2.msra.mxu0 0.0
        %1882 = vmatprep.subr.mxu0 0.0
        %1883 = vmatpush2.msra.mxu0 0.0
        %1884 = vmatprep.subr.mxu0 0.0
        %1885 = vmatpush2.msra.mxu0 0.0
        %1886 = vmatprep.subr.mxu0 0.0
        %1887 = vmatpush2.msra.mxu0 0.0
        %1888 = vmatprep.subr.mxu0 0.0
        %1889 = vmatpush2.msra.mxu0 0.0
        %1890 = vmatprep.mubr.f32.mxu0 0.0
        %1891 = vmatmul.mubr.f32.gmra.mxu0 %v1668
        %v1892 = vpop.f32.mrf.mxu0
        %v1893 = vadd.f32 %v1823, %v1892
        %v1894 = vpop.f32.mrf.mxu0
        %1895 = vdwg.mxu0
        %v1896 = vld [vmem:[#allocation2 + $0x2] sm:$0xff]
        %s1897 = scalar_lea.vmem %s4, 240
        %v1898 = vld [vmem:[%s1897] sm:$0xff]
        %v1899 = vld [vmem:[%s1897 + $0x8] sm:$0xff]
        %v1900 = vld [vmem:[%s1897 + $0x10] sm:$0xff]
        %v1901 = vld [vmem:[%s1897 + $0x18] sm:$0xff]
        %v1902 = vld [vmem:[%s1897 + $0x20] sm:$0xff]
        %v1903 = vld [vmem:[%s1897 + $0x28] sm:$0xff]
        %v1904 = vld [vmem:[%s1897 + $0x30] sm:$0xff]
        %v1905 = vld [vmem:[%s1897 + $0x38] sm:$0xff]
        %v1906 = vld [vmem:[%s1897 + $0x40] sm:$0xff]
        %v1907 = vld [vmem:[%s1897 + $0x48] sm:$0xff]
        %v1908 = vld [vmem:[%s1897 + $0x50] sm:$0xff]
        %v1909 = vld [vmem:[%s1897 + $0x58] sm:$0xff]
        %v1910 = vld [vmem:[%s1897 + $0x60] sm:$0xff]
        %v1911 = vld [vmem:[%s1897 + $0x68] sm:$0xff]
        %v1912 = vld [vmem:[%s1897 + $0x70] sm:$0xff]
        %v1914 = vsel %vm1542, %v1896, 0
        %1916 = vmatprep.subr.mxu0 0.0
        %1917 = vmatpush1.msra.mxu0 0.0
        %1918 = vmatprep.subr.mxu0 0.0
        %1919 = vmatpush1.msra.mxu0 %v1912
        %1920 = vmatprep.subr.mxu0 0.0
        %1921 = vmatpush1.msra.mxu0 %v1911
        %1922 = vmatprep.subr.mxu0 0.0
        %1923 = vmatpush1.msra.mxu0 %v1910
        %1924 = vmatprep.subr.mxu0 0.0
        %1925 = vmatpush1.msra.mxu0 %v1909
        %1926 = vmatprep.subr.mxu0 0.0
        %1927 = vmatpush1.msra.mxu0 %v1908
        %1928 = vmatprep.subr.mxu0 0.0
        %1929 = vmatpush1.msra.mxu0 %v1907
        %1930 = vmatprep.subr.mxu0 0.0
        %1931 = vmatpush1.msra.mxu0 %v1906
        %1932 = vmatprep.subr.mxu0 0.0
        %1933 = vmatpush1.msra.mxu0 %v1905
        %1934 = vmatprep.subr.mxu0 0.0
        %1935 = vmatpush1.msra.mxu0 %v1904
        %1936 = vmatprep.subr.mxu0 0.0
        %1937 = vmatpush1.msra.mxu0 %v1903
        %1938 = vmatprep.subr.mxu0 0.0
        %1939 = vmatpush1.msra.mxu0 %v1902
        %1940 = vmatprep.subr.mxu0 0.0
        %1941 = vmatpush1.msra.mxu0 %v1901
        %1942 = vmatprep.subr.mxu0 0.0
        %1943 = vmatpush1.msra.mxu0 %v1900
        %1944 = vmatprep.subr.mxu0 0.0
        %1945 = vmatpush1.msra.mxu0 %v1899
        %1946 = vmatprep.subr.mxu0 0.0
        %1947 = vmatpush1.msra.mxu0 %v1898
        %1948 = vmatprep.subr.mxu0 0.0
        %1949 = vmatpush2.msra.mxu0 0.0
        %1950 = vmatprep.subr.mxu0 0.0
        %1951 = vmatpush2.msra.mxu0 0.0
        %1952 = vmatprep.subr.mxu0 0.0
        %1953 = vmatpush2.msra.mxu0 0.0
        %1954 = vmatprep.subr.mxu0 0.0
        %1955 = vmatpush2.msra.mxu0 0.0
        %1956 = vmatprep.subr.mxu0 0.0
        %1957 = vmatpush2.msra.mxu0 0.0
        %1958 = vmatprep.subr.mxu0 0.0
        %1959 = vmatpush2.msra.mxu0 0.0
        %1960 = vmatprep.subr.mxu0 0.0
        %1961 = vmatpush2.msra.mxu0 0.0
        %1962 = vmatprep.subr.mxu0 0.0
        %1963 = vmatpush2.msra.mxu0 0.0
        %1964 = vmatprep.subr.mxu0 0.0
        %1965 = vmatpush2.msra.mxu0 0.0
        %1966 = vmatprep.subr.mxu0 0.0
        %1967 = vmatpush2.msra.mxu0 0.0
        %1968 = vmatprep.subr.mxu0 0.0
        %1969 = vmatpush2.msra.mxu0 0.0
        %1970 = vmatprep.subr.mxu0 0.0
        %1971 = vmatpush2.msra.mxu0 0.0
        %1972 = vmatprep.subr.mxu0 0.0
        %1973 = vmatpush2.msra.mxu0 0.0
        %1974 = vmatprep.subr.mxu0 0.0
        %1975 = vmatpush2.msra.mxu0 0.0
        %1976 = vmatprep.subr.mxu0 0.0
        %1977 = vmatpush2.msra.mxu0 0.0
        %1978 = vmatprep.subr.mxu0 0.0
        %1979 = vmatpush2.msra.mxu0 0.0
        %1980 = vmatprep.mubr.f32.mxu0 0.0
        %1981 = vmatmul.mubr.f32.gmra.mxu0 %v1914
        %v1982 = vpop.f32.mrf.mxu0
        %v1983 = vadd.f32 0.0, %v1982
        %v1984 = vpop.f32.mrf.mxu0
        %1985 = vdwg.mxu0
        %v1986 = vadd.f32 %v1737, %v1983
        %s1987 = scalar_lea.vmem %s5, 240
        %v1988 = vld [vmem:[%s1987] sm:$0xff]
        %v1989 = vld [vmem:[%s1987 + $0x8] sm:$0xff]
        %v1990 = vld [vmem:[%s1987 + $0x10] sm:$0xff]
        %v1991 = vld [vmem:[%s1987 + $0x18] sm:$0xff]
        %v1992 = vld [vmem:[%s1987 + $0x20] sm:$0xff]
        %v1993 = vld [vmem:[%s1987 + $0x28] sm:$0xff]
        %v1994 = vld [vmem:[%s1987 + $0x30] sm:$0xff]
        %v1995 = vld [vmem:[%s1987 + $0x38] sm:$0xff]
        %v1996 = vld [vmem:[%s1987 + $0x40] sm:$0xff]
        %v1997 = vld [vmem:[%s1987 + $0x48] sm:$0xff]
        %v1998 = vld [vmem:[%s1987 + $0x50] sm:$0xff]
        %v1999 = vld [vmem:[%s1987 + $0x58] sm:$0xff]
        %v2000 = vld [vmem:[%s1987 + $0x60] sm:$0xff]
        %v2001 = vld [vmem:[%s1987 + $0x68] sm:$0xff]
        %v2002 = vld [vmem:[%s1987 + $0x70] sm:$0xff]
        %2003 = vmatprep.subr.mxu0 0.0
        %2004 = vmatpush1.msra.mxu0 0.0
        %2005 = vmatprep.subr.mxu0 0.0
        %2006 = vmatpush1.msra.mxu0 %v2002
        %2007 = vmatprep.subr.mxu0 0.0
        %2008 = vmatpush1.msra.mxu0 %v2001
        %2009 = vmatprep.subr.mxu0 0.0
        %2010 = vmatpush1.msra.mxu0 %v2000
        %2011 = vmatprep.subr.mxu0 0.0
        %2012 = vmatpush1.msra.mxu0 %v1999
        %2013 = vmatprep.subr.mxu0 0.0
        %2014 = vmatpush1.msra.mxu0 %v1998
        %2015 = vmatprep.subr.mxu0 0.0
        %2016 = vmatpush1.msra.mxu0 %v1997
        %2017 = vmatprep.subr.mxu0 0.0
        %2018 = vmatpush1.msra.mxu0 %v1996
        %2019 = vmatprep.subr.mxu0 0.0
        %2020 = vmatpush1.msra.mxu0 %v1995
        %2021 = vmatprep.subr.mxu0 0.0
        %2022 = vmatpush1.msra.mxu0 %v1994
        %2023 = vmatprep.subr.mxu0 0.0
        %2024 = vmatpush1.msra.mxu0 %v1993
        %2025 = vmatprep.subr.mxu0 0.0
        %2026 = vmatpush1.msra.mxu0 %v1992
        %2027 = vmatprep.subr.mxu0 0.0
        %2028 = vmatpush1.msra.mxu0 %v1991
        %2029 = vmatprep.subr.mxu0 0.0
        %2030 = vmatpush1.msra.mxu0 %v1990
        %2031 = vmatprep.subr.mxu0 0.0
        %2032 = vmatpush1.msra.mxu0 %v1989
        %2033 = vmatprep.subr.mxu0 0.0
        %2034 = vmatpush1.msra.mxu0 %v1988
        %2035 = vmatprep.subr.mxu0 0.0
        %2036 = vmatpush2.msra.mxu0 0.0
        %2037 = vmatprep.subr.mxu0 0.0
        %2038 = vmatpush2.msra.mxu0 0.0
        %2039 = vmatprep.subr.mxu0 0.0
        %2040 = vmatpush2.msra.mxu0 0.0
        %2041 = vmatprep.subr.mxu0 0.0
        %2042 = vmatpush2.msra.mxu0 0.0
        %2043 = vmatprep.subr.mxu0 0.0
        %2044 = vmatpush2.msra.mxu0 0.0
        %2045 = vmatprep.subr.mxu0 0.0
        %2046 = vmatpush2.msra.mxu0 0.0
        %2047 = vmatprep.subr.mxu0 0.0
        %2048 = vmatpush2.msra.mxu0 0.0
        %2049 = vmatprep.subr.mxu0 0.0
        %2050 = vmatpush2.msra.mxu0 0.0
        %2051 = vmatprep.subr.mxu0 0.0
        %2052 = vmatpush2.msra.mxu0 0.0
        %2053 = vmatprep.subr.mxu0 0.0
        %2054 = vmatpush2.msra.mxu0 0.0
        %2055 = vmatprep.subr.mxu0 0.0
        %2056 = vmatpush2.msra.mxu0 0.0
        %2057 = vmatprep.subr.mxu0 0.0
        %2058 = vmatpush2.msra.mxu0 0.0
        %2059 = vmatprep.subr.mxu0 0.0
        %2060 = vmatpush2.msra.mxu0 0.0
        %2061 = vmatprep.subr.mxu0 0.0
        %2062 = vmatpush2.msra.mxu0 0.0
        %2063 = vmatprep.subr.mxu0 0.0
        %2064 = vmatpush2.msra.mxu0 0.0
        %2065 = vmatprep.subr.mxu0 0.0
        %2066 = vmatpush2.msra.mxu0 0.0
        %2067 = vmatprep.mubr.f32.mxu0 0.0
        %2068 = vmatmul.mubr.f32.gmra.mxu0 %v1914
        %v2069 = vpop.f32.mrf.mxu0
        %v2070 = vadd.f32 0.0, %v2069
        %v2071 = vpop.f32.mrf.mxu0
        %2072 = vdwg.mxu0
        %v2073 = vadd.f32 %v1893, %v2070
        %v2074 = vld [vmem:[#allocation2 + $0x3] sm:$0xff]
        %s2075 = scalar_lea.vmem %s4, 360
        %v2076 = vld [vmem:[%s2075] sm:$0xff]
        %v2077 = vld [vmem:[%s2075 + $0x8] sm:$0xff]
        %v2078 = vld [vmem:[%s2075 + $0x10] sm:$0xff]
        %v2079 = vld [vmem:[%s2075 + $0x18] sm:$0xff]
        %v2080 = vld [vmem:[%s2075 + $0x20] sm:$0xff]
        %v2081 = vld [vmem:[%s2075 + $0x28] sm:$0xff]
        %v2082 = vld [vmem:[%s2075 + $0x30] sm:$0xff]
        %v2083 = vld [vmem:[%s2075 + $0x38] sm:$0xff]
        %v2084 = vld [vmem:[%s2075 + $0x40] sm:$0xff]
        %v2085 = vld [vmem:[%s2075 + $0x48] sm:$0xff]
        %v2086 = vld [vmem:[%s2075 + $0x50] sm:$0xff]
        %v2087 = vld [vmem:[%s2075 + $0x58] sm:$0xff]
        %v2088 = vld [vmem:[%s2075 + $0x60] sm:$0xff]
        %v2089 = vld [vmem:[%s2075 + $0x68] sm:$0xff]
        %v2090 = vld [vmem:[%s2075 + $0x70] sm:$0xff]
        %v2092 = vsel %vm1542, %v2074, 0
        %2094 = vmatprep.subr.mxu0 0.0
        %2095 = vmatpush1.msra.mxu0 0.0
        %2096 = vmatprep.subr.mxu0 0.0
        %2097 = vmatpush1.msra.mxu0 %v2090
        %2098 = vmatprep.subr.mxu0 0.0
        %2099 = vmatpush1.msra.mxu0 %v2089
        %2100 = vmatprep.subr.mxu0 0.0
        %2101 = vmatpush1.msra.mxu0 %v2088
        %2102 = vmatprep.subr.mxu0 0.0
        %2103 = vmatpush1.msra.mxu0 %v2087
        %2104 = vmatprep.subr.mxu0 0.0
        %2105 = vmatpush1.msra.mxu0 %v2086
        %2106 = vmatprep.subr.mxu0 0.0
        %2107 = vmatpush1.msra.mxu0 %v2085
        %2108 = vmatprep.subr.mxu0 0.0
        %2109 = vmatpush1.msra.mxu0 %v2084
        %2110 = vmatprep.subr.mxu0 0.0
        %2111 = vmatpush1.msra.mxu0 %v2083
        %2112 = vmatprep.subr.mxu0 0.0
        %2113 = vmatpush1.msra.mxu0 %v2082
        %2114 = vmatprep.subr.mxu0 0.0
        %2115 = vmatpush1.msra.mxu0 %v2081
        %2116 = vmatprep.subr.mxu0 0.0
        %2117 = vmatpush1.msra.mxu0 %v2080
        %2118 = vmatprep.subr.mxu0 0.0
        %2119 = vmatpush1.msra.mxu0 %v2079
        %2120 = vmatprep.subr.mxu0 0.0
        %2121 = vmatpush1.msra.mxu0 %v2078
        %2122 = vmatprep.subr.mxu0 0.0
        %2123 = vmatpush1.msra.mxu0 %v2077
        %2124 = vmatprep.subr.mxu0 0.0
        %2125 = vmatpush1.msra.mxu0 %v2076
        %2126 = vmatprep.subr.mxu0 0.0
        %2127 = vmatpush2.msra.mxu0 0.0
        %2128 = vmatprep.subr.mxu0 0.0
        %2129 = vmatpush2.msra.mxu0 0.0
        %2130 = vmatprep.subr.mxu0 0.0
        %2131 = vmatpush2.msra.mxu0 0.0
        %2132 = vmatprep.subr.mxu0 0.0
        %2133 = vmatpush2.msra.mxu0 0.0
        %2134 = vmatprep.subr.mxu0 0.0
        %2135 = vmatpush2.msra.mxu0 0.0
        %2136 = vmatprep.subr.mxu0 0.0
        %2137 = vmatpush2.msra.mxu0 0.0
        %2138 = vmatprep.subr.mxu0 0.0
        %2139 = vmatpush2.msra.mxu0 0.0
        %2140 = vmatprep.subr.mxu0 0.0
        %2141 = vmatpush2.msra.mxu0 0.0
        %2142 = vmatprep.subr.mxu0 0.0
        %2143 = vmatpush2.msra.mxu0 0.0
        %2144 = vmatprep.subr.mxu0 0.0
        %2145 = vmatpush2.msra.mxu0 0.0
        %2146 = vmatprep.subr.mxu0 0.0
        %2147 = vmatpush2.msra.mxu0 0.0
        %2148 = vmatprep.subr.mxu0 0.0
        %2149 = vmatpush2.msra.mxu0 0.0
        %2150 = vmatprep.subr.mxu0 0.0
        %2151 = vmatpush2.msra.mxu0 0.0
        %2152 = vmatprep.subr.mxu0 0.0
        %2153 = vmatpush2.msra.mxu0 0.0
        %2154 = vmatprep.subr.mxu0 0.0
        %2155 = vmatpush2.msra.mxu0 0.0
        %2156 = vmatprep.subr.mxu0 0.0
        %2157 = vmatpush2.msra.mxu0 0.0
        %2158 = vmatprep.mubr.f32.mxu0 0.0
        %2159 = vmatmul.mubr.f32.gmra.mxu0 %v2092
        %v2160 = vpop.f32.mrf.mxu0
        %v2161 = vadd.f32 0.0, %v2160
        %v2162 = vpop.f32.mrf.mxu0
        %2163 = vdwg.mxu0
        %v2164 = vadd.f32 %v1986, %v2161
        %s2165 = scalar_lea.vmem %s5, 360
        %v2166 = vld [vmem:[%s2165] sm:$0xff]
        %v2167 = vld [vmem:[%s2165 + $0x8] sm:$0xff]
        %v2168 = vld [vmem:[%s2165 + $0x10] sm:$0xff]
        %v2169 = vld [vmem:[%s2165 + $0x18] sm:$0xff]
        %v2170 = vld [vmem:[%s2165 + $0x20] sm:$0xff]
        %v2171 = vld [vmem:[%s2165 + $0x28] sm:$0xff]
        %v2172 = vld [vmem:[%s2165 + $0x30] sm:$0xff]
        %v2173 = vld [vmem:[%s2165 + $0x38] sm:$0xff]
        %v2174 = vld [vmem:[%s2165 + $0x40] sm:$0xff]
        %v2175 = vld [vmem:[%s2165 + $0x48] sm:$0xff]
        %v2176 = vld [vmem:[%s2165 + $0x50] sm:$0xff]
        %v2177 = vld [vmem:[%s2165 + $0x58] sm:$0xff]
        %v2178 = vld [vmem:[%s2165 + $0x60] sm:$0xff]
        %v2179 = vld [vmem:[%s2165 + $0x68] sm:$0xff]
        %v2180 = vld [vmem:[%s2165 + $0x70] sm:$0xff]
        %2181 = vmatprep.subr.mxu0 0.0
        %2182 = vmatpush1.msra.mxu0 0.0
        %2183 = vmatprep.subr.mxu0 0.0
        %2184 = vmatpush1.msra.mxu0 %v2180
        %2185 = vmatprep.subr.mxu0 0.0
        %2186 = vmatpush1.msra.mxu0 %v2179
        %2187 = vmatprep.subr.mxu0 0.0
        %2188 = vmatpush1.msra.mxu0 %v2178
        %2189 = vmatprep.subr.mxu0 0.0
        %2190 = vmatpush1.msra.mxu0 %v2177
        %2191 = vmatprep.subr.mxu0 0.0
        %2192 = vmatpush1.msra.mxu0 %v2176
        %2193 = vmatprep.subr.mxu0 0.0
        %2194 = vmatpush1.msra.mxu0 %v2175
        %2195 = vmatprep.subr.mxu0 0.0
        %2196 = vmatpush1.msra.mxu0 %v2174
        %2197 = vmatprep.subr.mxu0 0.0
        %2198 = vmatpush1.msra.mxu0 %v2173
        %2199 = vmatprep.subr.mxu0 0.0
        %2200 = vmatpush1.msra.mxu0 %v2172
        %2201 = vmatprep.subr.mxu0 0.0
        %2202 = vmatpush1.msra.mxu0 %v2171
        %2203 = vmatprep.subr.mxu0 0.0
        %2204 = vmatpush1.msra.mxu0 %v2170
        %2205 = vmatprep.subr.mxu0 0.0
        %2206 = vmatpush1.msra.mxu0 %v2169
        %2207 = vmatprep.subr.mxu0 0.0
        %2208 = vmatpush1.msra.mxu0 %v2168
        %2209 = vmatprep.subr.mxu0 0.0
        %2210 = vmatpush1.msra.mxu0 %v2167
        %2211 = vmatprep.subr.mxu0 0.0
        %2212 = vmatpush1.msra.mxu0 %v2166
        %2213 = vmatprep.subr.mxu0 0.0
        %2214 = vmatpush2.msra.mxu0 0.0
        %2215 = vmatprep.subr.mxu0 0.0
        %2216 = vmatpush2.msra.mxu0 0.0
        %2217 = vmatprep.subr.mxu0 0.0
        %2218 = vmatpush2.msra.mxu0 0.0
        %2219 = vmatprep.subr.mxu0 0.0
        %2220 = vmatpush2.msra.mxu0 0.0
        %2221 = vmatprep.subr.mxu0 0.0
        %2222 = vmatpush2.msra.mxu0 0.0
        %2223 = vmatprep.subr.mxu0 0.0
        %2224 = vmatpush2.msra.mxu0 0.0
        %2225 = vmatprep.subr.mxu0 0.0
        %2226 = vmatpush2.msra.mxu0 0.0
        %2227 = vmatprep.subr.mxu0 0.0
        %2228 = vmatpush2.msra.mxu0 0.0
        %2229 = vmatprep.subr.mxu0 0.0
        %2230 = vmatpush2.msra.mxu0 0.0
        %2231 = vmatprep.subr.mxu0 0.0
        %2232 = vmatpush2.msra.mxu0 0.0
        %2233 = vmatprep.subr.mxu0 0.0
        %2234 = vmatpush2.msra.mxu0 0.0
        %2235 = vmatprep.subr.mxu0 0.0
        %2236 = vmatpush2.msra.mxu0 0.0
        %2237 = vmatprep.subr.mxu0 0.0
        %2238 = vmatpush2.msra.mxu0 0.0
        %2239 = vmatprep.subr.mxu0 0.0
        %2240 = vmatpush2.msra.mxu0 0.0
        %2241 = vmatprep.subr.mxu0 0.0
        %2242 = vmatpush2.msra.mxu0 0.0
        %2243 = vmatprep.subr.mxu0 0.0
        %2244 = vmatpush2.msra.mxu0 0.0
        %2245 = vmatprep.mubr.f32.mxu0 0.0
        %2246 = vmatmul.mubr.f32.gmra.mxu0 %v2092
        %v2247 = vpop.f32.mrf.mxu0
        %v2248 = vadd.f32 0.0, %v2247
        %v2249 = vpop.f32.mrf.mxu0
        %2250 = vdwg.mxu0
        %v2251 = vadd.f32 %v2073, %v2248
        %v2252 = vld [vmem:[#allocation2 + $0x4] sm:$0xff]
        %s2253 = scalar_lea.vmem %s4, 480
        %v2254 = vld [vmem:[%s2253] sm:$0xff]
        %v2255 = vld [vmem:[%s2253 + $0x8] sm:$0xff]
        %v2256 = vld [vmem:[%s2253 + $0x10] sm:$0xff]
        %v2257 = vld [vmem:[%s2253 + $0x18] sm:$0xff]
        %v2258 = vld [vmem:[%s2253 + $0x20] sm:$0xff]
        %v2259 = vld [vmem:[%s2253 + $0x28] sm:$0xff]
        %v2260 = vld [vmem:[%s2253 + $0x30] sm:$0xff]
        %v2261 = vld [vmem:[%s2253 + $0x38] sm:$0xff]
        %v2262 = vld [vmem:[%s2253 + $0x40] sm:$0xff]
        %v2263 = vld [vmem:[%s2253 + $0x48] sm:$0xff]
        %v2264 = vld [vmem:[%s2253 + $0x50] sm:$0xff]
        %v2265 = vld [vmem:[%s2253 + $0x58] sm:$0xff]
        %v2266 = vld [vmem:[%s2253 + $0x60] sm:$0xff]
        %v2267 = vld [vmem:[%s2253 + $0x68] sm:$0xff]
        %v2268 = vld [vmem:[%s2253 + $0x70] sm:$0xff]
        %v2270 = vsel %vm1542, %v2252, 0
        %2272 = vmatprep.subr.mxu0 0.0
        %2273 = vmatpush1.msra.mxu0 0.0
        %2274 = vmatprep.subr.mxu0 0.0
        %2275 = vmatpush1.msra.mxu0 %v2268
        %2276 = vmatprep.subr.mxu0 0.0
        %2277 = vmatpush1.msra.mxu0 %v2267
        %2278 = vmatprep.subr.mxu0 0.0
        %2279 = vmatpush1.msra.mxu0 %v2266
        %2280 = vmatprep.subr.mxu0 0.0
        %2281 = vmatpush1.msra.mxu0 %v2265
        %2282 = vmatprep.subr.mxu0 0.0
        %2283 = vmatpush1.msra.mxu0 %v2264
        %2284 = vmatprep.subr.mxu0 0.0
        %2285 = vmatpush1.msra.mxu0 %v2263
        %2286 = vmatprep.subr.mxu0 0.0
        %2287 = vmatpush1.msra.mxu0 %v2262
        %2288 = vmatprep.subr.mxu0 0.0
        %2289 = vmatpush1.msra.mxu0 %v2261
        %2290 = vmatprep.subr.mxu0 0.0
        %2291 = vmatpush1.msra.mxu0 %v2260
        %2292 = vmatprep.subr.mxu0 0.0
        %2293 = vmatpush1.msra.mxu0 %v2259
        %2294 = vmatprep.subr.mxu0 0.0
        %2295 = vmatpush1.msra.mxu0 %v2258
        %2296 = vmatprep.subr.mxu0 0.0
        %2297 = vmatpush1.msra.mxu0 %v2257
        %2298 = vmatprep.subr.mxu0 0.0
        %2299 = vmatpush1.msra.mxu0 %v2256
        %2300 = vmatprep.subr.mxu0 0.0
        %2301 = vmatpush1.msra.mxu0 %v2255
        %2302 = vmatprep.subr.mxu0 0.0
        %2303 = vmatpush1.msra.mxu0 %v2254
        %2304 = vmatprep.subr.mxu0 0.0
        %2305 = vmatpush2.msra.mxu0 0.0
        %2306 = vmatprep.subr.mxu0 0.0
        %2307 = vmatpush2.msra.mxu0 0.0
        %2308 = vmatprep.subr.mxu0 0.0
        %2309 = vmatpush2.msra.mxu0 0.0
        %2310 = vmatprep.subr.mxu0 0.0
        %2311 = vmatpush2.msra.mxu0 0.0
        %2312 = vmatprep.subr.mxu0 0.0
        %2313 = vmatpush2.msra.mxu0 0.0
        %2314 = vmatprep.subr.mxu0 0.0
        %2315 = vmatpush2.msra.mxu0 0.0
        %2316 = vmatprep.subr.mxu0 0.0
        %2317 = vmatpush2.msra.mxu0 0.0
        %2318 = vmatprep.subr.mxu0 0.0
        %2319 = vmatpush2.msra.mxu0 0.0
        %2320 = vmatprep.subr.mxu0 0.0
        %2321 = vmatpush2.msra.mxu0 0.0
        %2322 = vmatprep.subr.mxu0 0.0
        %2323 = vmatpush2.msra.mxu0 0.0
        %2324 = vmatprep.subr.mxu0 0.0
        %2325 = vmatpush2.msra.mxu0 0.0
        %2326 = vmatprep.subr.mxu0 0.0
        %2327 = vmatpush2.msra.mxu0 0.0
        %2328 = vmatprep.subr.mxu0 0.0
        %2329 = vmatpush2.msra.mxu0 0.0
        %2330 = vmatprep.subr.mxu0 0.0
        %2331 = vmatpush2.msra.mxu0 0.0
        %2332 = vmatprep.subr.mxu0 0.0
        %2333 = vmatpush2.msra.mxu0 0.0
        %2334 = vmatprep.subr.mxu0 0.0
        %2335 = vmatpush2.msra.mxu0 0.0
        %2336 = vmatprep.mubr.f32.mxu0 0.0
        %2337 = vmatmul.mubr.f32.gmra.mxu0 %v2270
        %v2338 = vpop.f32.mrf.mxu0
        %v2339 = vadd.f32 0.0, %v2338
        %v2340 = vpop.f32.mrf.mxu0
        %2341 = vdwg.mxu0
        %v2342 = vadd.f32 %v2164, %v2339
        %s2343 = scalar_lea.vmem %s5, 480
        %v2344 = vld [vmem:[%s2343] sm:$0xff]
        %v2345 = vld [vmem:[%s2343 + $0x8] sm:$0xff]
        %v2346 = vld [vmem:[%s2343 + $0x10] sm:$0xff]
        %v2347 = vld [vmem:[%s2343 + $0x18] sm:$0xff]
        %v2348 = vld [vmem:[%s2343 + $0x20] sm:$0xff]
        %v2349 = vld [vmem:[%s2343 + $0x28] sm:$0xff]
        %v2350 = vld [vmem:[%s2343 + $0x30] sm:$0xff]
        %v2351 = vld [vmem:[%s2343 + $0x38] sm:$0xff]
        %v2352 = vld [vmem:[%s2343 + $0x40] sm:$0xff]
        %v2353 = vld [vmem:[%s2343 + $0x48] sm:$0xff]
        %v2354 = vld [vmem:[%s2343 + $0x50] sm:$0xff]
        %v2355 = vld [vmem:[%s2343 + $0x58] sm:$0xff]
        %v2356 = vld [vmem:[%s2343 + $0x60] sm:$0xff]
        %v2357 = vld [vmem:[%s2343 + $0x68] sm:$0xff]
        %v2358 = vld [vmem:[%s2343 + $0x70] sm:$0xff]
        %2359 = vmatprep.subr.mxu0 0.0
        %2360 = vmatpush1.msra.mxu0 0.0
        %2361 = vmatprep.subr.mxu0 0.0
        %2362 = vmatpush1.msra.mxu0 %v2358
        %2363 = vmatprep.subr.mxu0 0.0
        %2364 = vmatpush1.msra.mxu0 %v2357
        %2365 = vmatprep.subr.mxu0 0.0
        %2366 = vmatpush1.msra.mxu0 %v2356
        %2367 = vmatprep.subr.mxu0 0.0
        %2368 = vmatpush1.msra.mxu0 %v2355
        %2369 = vmatprep.subr.mxu0 0.0
        %2370 = vmatpush1.msra.mxu0 %v2354
        %2371 = vmatprep.subr.mxu0 0.0
        %2372 = vmatpush1.msra.mxu0 %v2353
        %2373 = vmatprep.subr.mxu0 0.0
        %2374 = vmatpush1.msra.mxu0 %v2352
        %2375 = vmatprep.subr.mxu0 0.0
        %2376 = vmatpush1.msra.mxu0 %v2351
        %2377 = vmatprep.subr.mxu0 0.0
        %2378 = vmatpush1.msra.mxu0 %v2350
        %2379 = vmatprep.subr.mxu0 0.0
        %2380 = vmatpush1.msra.mxu0 %v2349
        %2381 = vmatprep.subr.mxu0 0.0
        %2382 = vmatpush1.msra.mxu0 %v2348
        %2383 = vmatprep.subr.mxu0 0.0
        %2384 = vmatpush1.msra.mxu0 %v2347
        %2385 = vmatprep.subr.mxu0 0.0
        %2386 = vmatpush1.msra.mxu0 %v2346
        %2387 = vmatprep.subr.mxu0 0.0
        %2388 = vmatpush1.msra.mxu0 %v2345
        %2389 = vmatprep.subr.mxu0 0.0
        %2390 = vmatpush1.msra.mxu0 %v2344
        %2391 = vmatprep.subr.mxu0 0.0
        %2392 = vmatpush2.msra.mxu0 0.0
        %2393 = vmatprep.subr.mxu0 0.0
        %2394 = vmatpush2.msra.mxu0 0.0
        %2395 = vmatprep.subr.mxu0 0.0
        %2396 = vmatpush2.msra.mxu0 0.0
        %2397 = vmatprep.subr.mxu0 0.0
        %2398 = vmatpush2.msra.mxu0 0.0
        %2399 = vmatprep.subr.mxu0 0.0
        %2400 = vmatpush2.msra.mxu0 0.0
        %2401 = vmatprep.subr.mxu0 0.0
        %2402 = vmatpush2.msra.mxu0 0.0
        %2403 = vmatprep.subr.mxu0 0.0
        %2404 = vmatpush2.msra.mxu0 0.0
        %2405 = vmatprep.subr.mxu0 0.0
        %2406 = vmatpush2.msra.mxu0 0.0
        %2407 = vmatprep.subr.mxu0 0.0
        %2408 = vmatpush2.msra.mxu0 0.0
        %2409 = vmatprep.subr.mxu0 0.0
        %2410 = vmatpush2.msra.mxu0 0.0
        %2411 = vmatprep.subr.mxu0 0.0
        %2412 = vmatpush2.msra.mxu0 0.0
        %2413 = vmatprep.subr.mxu0 0.0
        %2414 = vmatpush2.msra.mxu0 0.0
        %2415 = vmatprep.subr.mxu0 0.0
        %2416 = vmatpush2.msra.mxu0 0.0
        %2417 = vmatprep.subr.mxu0 0.0
        %2418 = vmatpush2.msra.mxu0 0.0
        %2419 = vmatprep.subr.mxu0 0.0
        %2420 = vmatpush2.msra.mxu0 0.0
        %2421 = vmatprep.subr.mxu0 0.0
        %2422 = vmatpush2.msra.mxu0 0.0
        %2423 = vmatprep.mubr.f32.mxu0 0.0
        %2424 = vmatmul.mubr.f32.gmra.mxu0 %v2270
        %v2425 = vpop.f32.mrf.mxu0
        %v2426 = vadd.f32 0.0, %v2425
        %v2427 = vpop.f32.mrf.mxu0
        %2428 = vdwg.mxu0
        %v2429 = vadd.f32 %v2251, %v2426
        %v2430 = vmax.f32 %v2342, %v2429
        %vm2431 = vcmask 64512
        %v2432 = vsel %vm2431, %v1356, 0
        %2434 = vmatprep.subr.mxu0 0.0
        %2435 = vmatpush1.msra.mxu0 0.0
        %2436 = vmatprep.subr.mxu0 0.0
        %2437 = vmatpush1.msra.mxu0 0.0
        %2438 = vmatprep.subr.mxu0 0.0
        %2439 = vmatpush1.msra.mxu0 0.0
        %2440 = vmatprep.subr.mxu0 0.0
        %2441 = vmatpush1.msra.mxu0 0.0
        %2442 = vmatprep.subr.mxu0 0.0
        %2443 = vmatpush1.msra.mxu0 0.0
        %2444 = vmatprep.subr.mxu0 0.0
        %2445 = vmatpush1.msra.mxu0 0.0
        %2446 = vmatprep.subr.mxu0 0.0
        %2447 = vmatpush1.msra.mxu0 0.0
        %2448 = vmatprep.subr.mxu0 0.0
        %2449 = vmatpush1.msra.mxu0 0.0
        %2450 = vmatprep.subr.mxu0 0.0
        %2451 = vmatpush1.msra.mxu0 0.0
        %2452 = vmatprep.subr.mxu0 0.0
        %2453 = vmatpush1.msra.mxu0 0.0
        %2454 = vmatprep.subr.mxu0 0.0
        %2455 = vmatpush1.msra.mxu0 0.0
        %2456 = vmatprep.subr.mxu0 0.0
        %2457 = vmatpush1.msra.mxu0 0.0
        %2458 = vmatprep.subr.mxu0 0.0
        %2459 = vmatpush1.msra.mxu0 0.0
        %2460 = vmatprep.subr.mxu0 0.0
        %2461 = vmatpush1.msra.mxu0 0.0
        %2462 = vmatprep.subr.mxu0 0.0
        %2463 = vmatpush1.msra.mxu0 0.0
        %2464 = vmatprep.subr.mxu0 0.0
        %2465 = vmatpush1.msra.mxu0 %v2430
        %2466 = vmatprep.subr.mxu0 0.0
        %2467 = vmatpush2.msra.mxu0 0.0
        %2468 = vmatprep.subr.mxu0 0.0
        %2469 = vmatpush2.msra.mxu0 0.0
        %2470 = vmatprep.subr.mxu0 0.0
        %2471 = vmatpush2.msra.mxu0 0.0
        %2472 = vmatprep.subr.mxu0 0.0
        %2473 = vmatpush2.msra.mxu0 0.0
        %2474 = vmatprep.subr.mxu0 0.0
        %2475 = vmatpush2.msra.mxu0 0.0
        %2476 = vmatprep.subr.mxu0 0.0
        %2477 = vmatpush2.msra.mxu0 0.0
        %2478 = vmatprep.subr.mxu0 0.0
        %2479 = vmatpush2.msra.mxu0 0.0
        %2480 = vmatprep.subr.mxu0 0.0
        %2481 = vmatpush2.msra.mxu0 0.0
        %2482 = vmatprep.subr.mxu0 0.0
        %2483 = vmatpush2.msra.mxu0 0.0
        %2484 = vmatprep.subr.mxu0 0.0
        %2485 = vmatpush2.msra.mxu0 0.0
        %2486 = vmatprep.subr.mxu0 0.0
        %2487 = vmatpush2.msra.mxu0 0.0
        %2488 = vmatprep.subr.mxu0 0.0
        %2489 = vmatpush2.msra.mxu0 0.0
        %2490 = vmatprep.subr.mxu0 0.0
        %2491 = vmatpush2.msra.mxu0 0.0
        %2492 = vmatprep.subr.mxu0 0.0
        %2493 = vmatpush2.msra.mxu0 0.0
        %2494 = vmatprep.subr.mxu0 0.0
        %2495 = vmatpush2.msra.mxu0 0.0
        %2496 = vmatprep.subr.mxu0 0.0
        %2497 = vmatpush2.msra.mxu0 0.0
        %2498 = vmatprep.mubr.f32.mxu0 0.0
        %2499 = vmatmul.mubr.f32.gmra.mxu0 %v2432
        %v2500 = vpop.f32.mrf.mxu0
        %v2501 = vadd.f32 0.0, %v2500
        %v2502 = vpop.f32.mrf.mxu0
        %2503 = vdwg.mxu0
        %v2504 = vsel %vm2431, %v1446, 0
        %2506 = vmatprep.subr.mxu0 0.0
        %2507 = vmatpush1.msra.mxu0 0.0
        %2508 = vmatprep.subr.mxu0 0.0
        %2509 = vmatpush1.msra.mxu0 0.0
        %2510 = vmatprep.subr.mxu0 0.0
        %2511 = vmatpush1.msra.mxu0 0.0
        %2512 = vmatprep.subr.mxu0 0.0
        %2513 = vmatpush1.msra.mxu0 0.0
        %2514 = vmatprep.subr.mxu0 0.0
        %2515 = vmatpush1.msra.mxu0 0.0
        %2516 = vmatprep.subr.mxu0 0.0
        %2517 = vmatpush1.msra.mxu0 0.0
        %2518 = vmatprep.subr.mxu0 0.0
        %2519 = vmatpush1.msra.mxu0 0.0
        %2520 = vmatprep.subr.mxu0 0.0
        %2521 = vmatpush1.msra.mxu0 0.0
        %2522 = vmatprep.subr.mxu0 0.0
        %2523 = vmatpush1.msra.mxu0 0.0
        %2524 = vmatprep.subr.mxu0 0.0
        %2525 = vmatpush1.msra.mxu0 0.0
        %2526 = vmatprep.subr.mxu0 0.0
        %2527 = vmatpush1.msra.mxu0 0.0
        %2528 = vmatprep.subr.mxu0 0.0
        %2529 = vmatpush1.msra.mxu0 0.0
        %2530 = vmatprep.subr.mxu0 0.0
        %2531 = vmatpush1.msra.mxu0 0.0
        %2532 = vmatprep.subr.mxu0 0.0
        %2533 = vmatpush1.msra.mxu0 0.0
        %2534 = vmatprep.subr.mxu0 0.0
        %2535 = vmatpush1.msra.mxu0 0.0
        %2536 = vmatprep.subr.mxu0 0.0
        %2537 = vmatpush1.msra.mxu0 %v2430
        %2538 = vmatprep.subr.mxu0 0.0
        %2539 = vmatpush2.msra.mxu0 0.0
        %2540 = vmatprep.subr.mxu0 0.0
        %2541 = vmatpush2.msra.mxu0 0.0
        %2542 = vmatprep.subr.mxu0 0.0
        %2543 = vmatpush2.msra.mxu0 0.0
        %2544 = vmatprep.subr.mxu0 0.0
        %2545 = vmatpush2.msra.mxu0 0.0
        %2546 = vmatprep.subr.mxu0 0.0
        %2547 = vmatpush2.msra.mxu0 0.0
        %2548 = vmatprep.subr.mxu0 0.0
        %2549 = vmatpush2.msra.mxu0 0.0
        %2550 = vmatprep.subr.mxu0 0.0
        %2551 = vmatpush2.msra.mxu0 0.0
        %2552 = vmatprep.subr.mxu0 0.0
        %2553 = vmatpush2.msra.mxu0 0.0
        %2554 = vmatprep.subr.mxu0 0.0
        %2555 = vmatpush2.msra.mxu0 0.0
        %2556 = vmatprep.subr.mxu0 0.0
        %2557 = vmatpush2.msra.mxu0 0.0
        %2558 = vmatprep.subr.mxu0 0.0
        %2559 = vmatpush2.msra.mxu0 0.0
        %2560 = vmatprep.subr.mxu0 0.0
        %2561 = vmatpush2.msra.mxu0 0.0
        %2562 = vmatprep.subr.mxu0 0.0
        %2563 = vmatpush2.msra.mxu0 0.0
        %2564 = vmatprep.subr.mxu0 0.0
        %2565 = vmatpush2.msra.mxu0 0.0
        %2566 = vmatprep.subr.mxu0 0.0
        %2567 = vmatpush2.msra.mxu0 0.0
        %2568 = vmatprep.subr.mxu0 0.0
        %2569 = vmatpush2.msra.mxu0 0.0
        %2570 = vmatprep.mubr.f32.mxu0 0.0
        %2571 = vmatmul.mubr.f32.gmra.mxu0 %v2504
        %v2572 = vpop.f32.mrf.mxu0
        %v2573 = vadd.f32 0.0, %v2572
        %v2574 = vpop.f32.mrf.mxu0
        %2575 = vdwg.mxu0
        %v2576 = vmax.f32 %v2501, %v2573
        %v2577 = vld [vmem:[%s6] sm:$0x1]
        %v2579 = vlaneseq
        %v2580 = vshrl.u32 %v2579, 7
        %v2581 = vsub.s32 0, %v2580
        %v2582 = vrot.slane %v2577, %v2581
        %v2584 = vadd.f32 %v2576, %v2582
        %v2585 = vmax.f32 %v2584, 0.0
        %vm2586 = vcmask 650240
        %2587 = vst.msk [vmem:[#allocation3] sm:$0xf] %vm2586, %v2585
        %v2588 = vld [vmem:[#allocation3] sm:$0x1]
        %v2589 = vld [vmem:[%s7] sm:$0xff]
        %v2590 = vld [vmem:[%s7 + $0x8] sm:$0xff]
        %v2591 = vld [vmem:[%s7 + $0x10] sm:$0xff]
        %v2592 = vld [vmem:[%s7 + $0x18] sm:$0xff]
        %v2593 = vld [vmem:[%s7 + $0x20] sm:$0xff]
        %v2594 = vld [vmem:[%s7 + $0x28] sm:$0xff]
        %v2595 = vld [vmem:[%s7 + $0x30] sm:$0xff]
        %v2596 = vld [vmem:[%s7 + $0x38] sm:$0xff]
        %v2597 = vld [vmem:[%s7 + $0x40] sm:$0xff]
        %v2598 = vld [vmem:[%s7 + $0x48] sm:$0xff]
        %v2599 = vld [vmem:[#allocation3 + $0x1] sm:$0x1]
        %v2600 = vld [vmem:[%s7 + $0x50] sm:$0xff]
        %v2601 = vld [vmem:[%s7 + $0x58] sm:$0xff]
        %v2602 = vld [vmem:[%s7 + $0x60] sm:$0xff]
        %v2603 = vld [vmem:[%s7 + $0x68] sm:$0xff]
        %v2604 = vld [vmem:[%s7 + $0x70] sm:$0xff]
        %v2605 = vld [vmem:[%s7 + $0x78] sm:$0xff]
        %v2606 = vld [vmem:[%s7 + $0x80] sm:$0xff]
        %v2607 = vld [vmem:[%s7 + $0x88] sm:$0xff]
        %v2608 = vld [vmem:[%s7 + $0x90] sm:$0xff]
        %v2609 = vld [vmem:[%s7 + $0x98] sm:$0xff]
        %vm2610 = vcmask 654336
        %v2612 = vsel %vm2610, %v2599, 0
        %2614 = vmatprep.subr.mxu0 0.0
        %2615 = vmatpush1.msra.mxu0 0.0
        %2616 = vmatprep.subr.mxu0 0.0
        %2617 = vmatpush1.msra.mxu0 0.0
        %2618 = vmatprep.subr.mxu0 0.0
        %2619 = vmatpush1.msra.mxu0 0.0
        %2620 = vmatprep.subr.mxu0 0.0
        %2621 = vmatpush1.msra.mxu0 0.0
        %2622 = vmatprep.subr.mxu0 0.0
        %2623 = vmatpush1.msra.mxu0 0.0
        %2624 = vmatprep.subr.mxu0 0.0
        %2625 = vmatpush1.msra.mxu0 0.0
        %2626 = vmatprep.subr.mxu0 0.0
        %2627 = vmatpush1.msra.mxu0 %v2609
        %2628 = vmatprep.subr.mxu0 0.0
        %2629 = vmatpush1.msra.mxu0 %v2608
        %2630 = vmatprep.subr.mxu0 0.0
        %2631 = vmatpush1.msra.mxu0 %v2607
        %2632 = vmatprep.subr.mxu0 0.0
        %2633 = vmatpush1.msra.mxu0 %v2606
        %2634 = vmatprep.subr.mxu0 0.0
        %2635 = vmatpush1.msra.mxu0 %v2605
        %2636 = vmatprep.subr.mxu0 0.0
        %2637 = vmatpush1.msra.mxu0 %v2604
        %2638 = vmatprep.subr.mxu0 0.0
        %2639 = vmatpush1.msra.mxu0 %v2603
        %2640 = vmatprep.subr.mxu0 0.0
        %2641 = vmatpush1.msra.mxu0 %v2602
        %2642 = vmatprep.subr.mxu0 0.0
        %2643 = vmatpush1.msra.mxu0 %v2601
        %2644 = vmatprep.subr.mxu0 0.0
        %2645 = vmatpush1.msra.mxu0 %v2600
        %2646 = vmatprep.subr.mxu0 0.0
        %2647 = vmatpush2.msra.mxu0 0.0
        %2648 = vmatprep.subr.mxu0 0.0
        %2649 = vmatpush2.msra.mxu0 0.0
        %2650 = vmatprep.subr.mxu0 0.0
        %2651 = vmatpush2.msra.mxu0 0.0
        %2652 = vmatprep.subr.mxu0 0.0
        %2653 = vmatpush2.msra.mxu0 0.0
        %2654 = vmatprep.subr.mxu0 0.0
        %2655 = vmatpush2.msra.mxu0 0.0
        %2656 = vmatprep.subr.mxu0 0.0
        %2657 = vmatpush2.msra.mxu0 0.0
        %2658 = vmatprep.subr.mxu0 0.0
        %2659 = vmatpush2.msra.mxu0 0.0
        %2660 = vmatprep.subr.mxu0 0.0
        %2661 = vmatpush2.msra.mxu0 0.0
        %2662 = vmatprep.subr.mxu0 0.0
        %2663 = vmatpush2.msra.mxu0 0.0
        %2664 = vmatprep.subr.mxu0 0.0
        %2665 = vmatpush2.msra.mxu0 0.0
        %2666 = vmatprep.subr.mxu0 0.0
        %2667 = vmatpush2.msra.mxu0 0.0
        %2668 = vmatprep.subr.mxu0 0.0
        %2669 = vmatpush2.msra.mxu0 0.0
        %2670 = vmatprep.subr.mxu0 0.0
        %2671 = vmatpush2.msra.mxu0 0.0
        %2672 = vmatprep.subr.mxu0 0.0
        %2673 = vmatpush2.msra.mxu0 0.0
        %2674 = vmatprep.subr.mxu0 0.0
        %2675 = vmatpush2.msra.mxu0 0.0
        %2676 = vmatprep.subr.mxu0 0.0
        %2677 = vmatpush2.msra.mxu0 0.0
        %2678 = vmatprep.mubr.f32.mxu0 0.0
        %2679 = vmatmul.mubr.f32.gmra.mxu0 %v2612
        %v2680 = vpop.f32.mrf.mxu0
        %v2681 = vadd.f32 0.0, %v2680
        %v2682 = vpop.f32.mrf.mxu0
        %2683 = vdwg.mxu0
        %v2685 = vsel %vm2610, %v2588, 0
        %2687 = vmatprep.subr.mxu0 0.0
        %2688 = vmatpush1.msra.mxu0 0.0
        %2689 = vmatprep.subr.mxu0 0.0
        %2690 = vmatpush1.msra.mxu0 0.0
        %2691 = vmatprep.subr.mxu0 0.0
        %2692 = vmatpush1.msra.mxu0 0.0
        %2693 = vmatprep.subr.mxu0 0.0
        %2694 = vmatpush1.msra.mxu0 0.0
        %2695 = vmatprep.subr.mxu0 0.0
        %2696 = vmatpush1.msra.mxu0 0.0
        %2697 = vmatprep.subr.mxu0 0.0
        %2698 = vmatpush1.msra.mxu0 0.0
        %2699 = vmatprep.subr.mxu0 0.0
        %2700 = vmatpush1.msra.mxu0 %v2598
        %2701 = vmatprep.subr.mxu0 0.0
        %2702 = vmatpush1.msra.mxu0 %v2597
        %2703 = vmatprep.subr.mxu0 0.0
        %2704 = vmatpush1.msra.mxu0 %v2596
        %2705 = vmatprep.subr.mxu0 0.0
        %2706 = vmatpush1.msra.mxu0 %v2595
        %2707 = vmatprep.subr.mxu0 0.0
        %2708 = vmatpush1.msra.mxu0 %v2594
        %2709 = vmatprep.subr.mxu0 0.0
        %2710 = vmatpush1.msra.mxu0 %v2593
        %2711 = vmatprep.subr.mxu0 0.0
        %2712 = vmatpush1.msra.mxu0 %v2592
        %2713 = vmatprep.subr.mxu0 0.0
        %2714 = vmatpush1.msra.mxu0 %v2591
        %2715 = vmatprep.subr.mxu0 0.0
        %2716 = vmatpush1.msra.mxu0 %v2590
        %2717 = vmatprep.subr.mxu0 0.0
        %2718 = vmatpush1.msra.mxu0 %v2589
        %2719 = vmatprep.subr.mxu0 0.0
        %2720 = vmatpush2.msra.mxu0 0.0
        %2721 = vmatprep.subr.mxu0 0.0
        %2722 = vmatpush2.msra.mxu0 0.0
        %2723 = vmatprep.subr.mxu0 0.0
        %2724 = vmatpush2.msra.mxu0 0.0
        %2725 = vmatprep.subr.mxu0 0.0
        %2726 = vmatpush2.msra.mxu0 0.0
        %2727 = vmatprep.subr.mxu0 0.0
        %2728 = vmatpush2.msra.mxu0 0.0
        %2729 = vmatprep.subr.mxu0 0.0
        %2730 = vmatpush2.msra.mxu0 0.0
        %2731 = vmatprep.subr.mxu0 0.0
        %2732 = vmatpush2.msra.mxu0 0.0
        %2733 = vmatprep.subr.mxu0 0.0
        %2734 = vmatpush2.msra.mxu0 0.0
        %2735 = vmatprep.subr.mxu0 0.0
        %2736 = vmatpush2.msra.mxu0 0.0
        %2737 = vmatprep.subr.mxu0 0.0
        %2738 = vmatpush2.msra.mxu0 0.0
        %2739 = vmatprep.subr.mxu0 0.0
        %2740 = vmatpush2.msra.mxu0 0.0
        %2741 = vmatprep.subr.mxu0 0.0
        %2742 = vmatpush2.msra.mxu0 0.0
        %2743 = vmatprep.subr.mxu0 0.0
        %2744 = vmatpush2.msra.mxu0 0.0
        %2745 = vmatprep.subr.mxu0 0.0
        %2746 = vmatpush2.msra.mxu0 0.0
        %2747 = vmatprep.subr.mxu0 0.0
        %2748 = vmatpush2.msra.mxu0 0.0
        %2749 = vmatprep.subr.mxu0 0.0
        %2750 = vmatpush2.msra.mxu0 0.0
        %2751 = vmatprep.mubr.f32.mxu0 0.0
        %2752 = vmatmul.mubr.f32.gmra.mxu0 %v2685
        %v2753 = vpop.f32.mrf.mxu0
        %v2754 = vadd.f32 %v2681, %v2753
        %v2755 = vpop.f32.mrf.mxu0
        %2756 = vdwg.mxu0
        %v2757 = vld [vmem:[#allocation3 + $0x2] sm:$0x1]
        %v2758 = vld [vmem:[%s7 + $0xa0] sm:$0xff]
        %v2759 = vld [vmem:[%s7 + $0xa8] sm:$0xff]
        %v2760 = vld [vmem:[%s7 + $0xb0] sm:$0xff]
        %v2761 = vld [vmem:[%s7 + $0xb8] sm:$0xff]
        %v2762 = vld [vmem:[%s7 + $0xc0] sm:$0xff]
        %v2763 = vld [vmem:[%s7 + $0xc8] sm:$0xff]
        %v2764 = vld [vmem:[%s7 + $0xd0] sm:$0xff]
        %v2765 = vld [vmem:[%s7 + $0xd8] sm:$0xff]
        %v2766 = vld [vmem:[%s7 + $0xe0] sm:$0xff]
        %v2767 = vld [vmem:[%s7 + $0xe8] sm:$0xff]
        %v2769 = vsel %vm2610, %v2757, 0
        %2771 = vmatprep.subr.mxu0 0.0
        %2772 = vmatpush1.msra.mxu0 0.0
        %2773 = vmatprep.subr.mxu0 0.0
        %2774 = vmatpush1.msra.mxu0 0.0
        %2775 = vmatprep.subr.mxu0 0.0
        %2776 = vmatpush1.msra.mxu0 0.0
        %2777 = vmatprep.subr.mxu0 0.0
        %2778 = vmatpush1.msra.mxu0 0.0
        %2779 = vmatprep.subr.mxu0 0.0
        %2780 = vmatpush1.msra.mxu0 0.0
        %2781 = vmatprep.subr.mxu0 0.0
        %2782 = vmatpush1.msra.mxu0 0.0
        %2783 = vmatprep.subr.mxu0 0.0
        %2784 = vmatpush1.msra.mxu0 %v2767
        %2785 = vmatprep.subr.mxu0 0.0
        %2786 = vmatpush1.msra.mxu0 %v2766
        %2787 = vmatprep.subr.mxu0 0.0
        %2788 = vmatpush1.msra.mxu0 %v2765
        %2789 = vmatprep.subr.mxu0 0.0
        %2790 = vmatpush1.msra.mxu0 %v2764
        %2791 = vmatprep.subr.mxu0 0.0
        %2792 = vmatpush1.msra.mxu0 %v2763
        %2793 = vmatprep.subr.mxu0 0.0
        %2794 = vmatpush1.msra.mxu0 %v2762
        %2795 = vmatprep.subr.mxu0 0.0
        %2796 = vmatpush1.msra.mxu0 %v2761
        %2797 = vmatprep.subr.mxu0 0.0
        %2798 = vmatpush1.msra.mxu0 %v2760
        %2799 = vmatprep.subr.mxu0 0.0
        %2800 = vmatpush1.msra.mxu0 %v2759
        %2801 = vmatprep.subr.mxu0 0.0
        %2802 = vmatpush1.msra.mxu0 %v2758
        %2803 = vmatprep.subr.mxu0 0.0
        %2804 = vmatpush2.msra.mxu0 0.0
        %2805 = vmatprep.subr.mxu0 0.0
        %2806 = vmatpush2.msra.mxu0 0.0
        %2807 = vmatprep.subr.mxu0 0.0
        %2808 = vmatpush2.msra.mxu0 0.0
        %2809 = vmatprep.subr.mxu0 0.0
        %2810 = vmatpush2.msra.mxu0 0.0
        %2811 = vmatprep.subr.mxu0 0.0
        %2812 = vmatpush2.msra.mxu0 0.0
        %2813 = vmatprep.subr.mxu0 0.0
        %2814 = vmatpush2.msra.mxu0 0.0
        %2815 = vmatprep.subr.mxu0 0.0
        %2816 = vmatpush2.msra.mxu0 0.0
        %2817 = vmatprep.subr.mxu0 0.0
        %2818 = vmatpush2.msra.mxu0 0.0
        %2819 = vmatprep.subr.mxu0 0.0
        %2820 = vmatpush2.msra.mxu0 0.0
        %2821 = vmatprep.subr.mxu0 0.0
        %2822 = vmatpush2.msra.mxu0 0.0
        %2823 = vmatprep.subr.mxu0 0.0
        %2824 = vmatpush2.msra.mxu0 0.0
        %2825 = vmatprep.subr.mxu0 0.0
        %2826 = vmatpush2.msra.mxu0 0.0
        %2827 = vmatprep.subr.mxu0 0.0
        %2828 = vmatpush2.msra.mxu0 0.0
        %2829 = vmatprep.subr.mxu0 0.0
        %2830 = vmatpush2.msra.mxu0 0.0
        %2831 = vmatprep.subr.mxu0 0.0
        %2832 = vmatpush2.msra.mxu0 0.0
        %2833 = vmatprep.subr.mxu0 0.0
        %2834 = vmatpush2.msra.mxu0 0.0
        %2835 = vmatprep.mubr.f32.mxu0 0.0
        %2836 = vmatmul.mubr.f32.gmra.mxu0 %v2769
        %v2837 = vpop.f32.mrf.mxu0
        %v2838 = vadd.f32 0.0, %v2837
        %v2839 = vpop.f32.mrf.mxu0
        %2840 = vdwg.mxu0
        %v2841 = vadd.f32 %v2754, %v2838
        %v2842 = vld [vmem:[#allocation3 + $0x3] sm:$0x1]
        %v2843 = vld [vmem:[%s7 + $0xf0] sm:$0xff]
        %v2844 = vld [vmem:[%s7 + $0xf8] sm:$0xff]
        %v2845 = vld [vmem:[%s7 + $0x100] sm:$0xff]
        %v2846 = vld [vmem:[%s7 + $0x108] sm:$0xff]
        %v2847 = vld [vmem:[%s7 + $0x110] sm:$0xff]
        %v2848 = vld [vmem:[%s7 + $0x118] sm:$0xff]
        %v2849 = vld [vmem:[%s7 + $0x120] sm:$0xff]
        %v2850 = vld [vmem:[%s7 + $0x128] sm:$0xff]
        %v2851 = vld [vmem:[%s7 + $0x130] sm:$0xff]
        %v2852 = vld [vmem:[%s7 + $0x138] sm:$0xff]
        %v2854 = vsel %vm2610, %v2842, 0
        %2856 = vmatprep.subr.mxu0 0.0
        %2857 = vmatpush1.msra.mxu0 0.0
        %2858 = vmatprep.subr.mxu0 0.0
        %2859 = vmatpush1.msra.mxu0 0.0
        %2860 = vmatprep.subr.mxu0 0.0
        %2861 = vmatpush1.msra.mxu0 0.0
        %2862 = vmatprep.subr.mxu0 0.0
        %2863 = vmatpush1.msra.mxu0 0.0
        %2864 = vmatprep.subr.mxu0 0.0
        %2865 = vmatpush1.msra.mxu0 0.0
        %2866 = vmatprep.subr.mxu0 0.0
        %2867 = vmatpush1.msra.mxu0 0.0
        %2868 = vmatprep.subr.mxu0 0.0
        %2869 = vmatpush1.msra.mxu0 %v2852
        %2870 = vmatprep.subr.mxu0 0.0
        %2871 = vmatpush1.msra.mxu0 %v2851
        %2872 = vmatprep.subr.mxu0 0.0
        %2873 = vmatpush1.msra.mxu0 %v2850
        %2874 = vmatprep.subr.mxu0 0.0
        %2875 = vmatpush1.msra.mxu0 %v2849
        %2876 = vmatprep.subr.mxu0 0.0
        %2877 = vmatpush1.msra.mxu0 %v2848
        %2878 = vmatprep.subr.mxu0 0.0
        %2879 = vmatpush1.msra.mxu0 %v2847
        %2880 = vmatprep.subr.mxu0 0.0
        %2881 = vmatpush1.msra.mxu0 %v2846
        %2882 = vmatprep.subr.mxu0 0.0
        %2883 = vmatpush1.msra.mxu0 %v2845
        %2884 = vmatprep.subr.mxu0 0.0
        %2885 = vmatpush1.msra.mxu0 %v2844
        %2886 = vmatprep.subr.mxu0 0.0
        %2887 = vmatpush1.msra.mxu0 %v2843
        %2888 = vmatprep.subr.mxu0 0.0
        %2889 = vmatpush2.msra.mxu0 0.0
        %2890 = vmatprep.subr.mxu0 0.0
        %2891 = vmatpush2.msra.mxu0 0.0
        %2892 = vmatprep.subr.mxu0 0.0
        %2893 = vmatpush2.msra.mxu0 0.0
        %2894 = vmatprep.subr.mxu0 0.0
        %2895 = vmatpush2.msra.mxu0 0.0
        %2896 = vmatprep.subr.mxu0 0.0
        %2897 = vmatpush2.msra.mxu0 0.0
        %2898 = vmatprep.subr.mxu0 0.0
        %2899 = vmatpush2.msra.mxu0 0.0
        %2900 = vmatprep.subr.mxu0 0.0
        %2901 = vmatpush2.msra.mxu0 0.0
        %2902 = vmatprep.subr.mxu0 0.0
        %2903 = vmatpush2.msra.mxu0 0.0
        %2904 = vmatprep.subr.mxu0 0.0
        %2905 = vmatpush2.msra.mxu0 0.0
        %2906 = vmatprep.subr.mxu0 0.0
        %2907 = vmatpush2.msra.mxu0 0.0
        %2908 = vmatprep.subr.mxu0 0.0
        %2909 = vmatpush2.msra.mxu0 0.0
        %2910 = vmatprep.subr.mxu0 0.0
        %2911 = vmatpush2.msra.mxu0 0.0
        %2912 = vmatprep.subr.mxu0 0.0
        %2913 = vmatpush2.msra.mxu0 0.0
        %2914 = vmatprep.subr.mxu0 0.0
        %2915 = vmatpush2.msra.mxu0 0.0
        %2916 = vmatprep.subr.mxu0 0.0
        %2917 = vmatpush2.msra.mxu0 0.0
        %2918 = vmatprep.subr.mxu0 0.0
        %2919 = vmatpush2.msra.mxu0 0.0
        %2920 = vmatprep.mubr.f32.mxu0 0.0
        %2921 = vmatmul.mubr.f32.gmra.mxu0 %v2854
        %v2922 = vpop.f32.mrf.mxu0
        %v2923 = vadd.f32 0.0, %v2922
        %v2924 = vpop.f32.mrf.mxu0
        %2925 = vdwg.mxu0
        %v2926 = vadd.f32 %v2841, %v2923
        %v2927 = vld [vmem:[%s8] sm:$0x1]
        %v2928 = vadd.f32 %v2926, %v2927
        %v2929 = vmax.f32 %v2928, 0.0
        %v2930 = vld [vmem:[%s9] sm:$0xff]
        %v2931 = vld [vmem:[%s9 + $0x8] sm:$0xff]
        %v2932 = vld [vmem:[%s9 + $0x10] sm:$0xff]
        %v2933 = vld [vmem:[%s9 + $0x18] sm:$0xff]
        %v2934 = vld [vmem:[%s9 + $0x20] sm:$0xff]
        %v2935 = vld [vmem:[%s9 + $0x28] sm:$0xff]
        %v2936 = vld [vmem:[%s9 + $0x30] sm:$0x3]
        %v2937 = vld [vmem:[%s10] sm:$0x1]
        %vm2938 = vcmask 408576
        %v2940 = vsel %vm2938, %v2929, 0
        %vm2942 = vcmask 1041408
        %v2944 = vsel %vm2942, %v2936, 0
        %2946 = vmatprep.subr.mxu0 0.0
        %2947 = vmatpush1.msra.mxu0 0.0
        %2948 = vmatprep.subr.mxu0 0.0
        %2949 = vmatpush1.msra.mxu0 0.0
        %2950 = vmatprep.subr.mxu0 0.0
        %2951 = vmatpush1.msra.mxu0 0.0
        %2952 = vmatprep.subr.mxu0 0.0
        %2953 = vmatpush1.msra.mxu0 0.0
        %2954 = vmatprep.subr.mxu0 0.0
        %2955 = vmatpush1.msra.mxu0 0.0
        %2956 = vmatprep.subr.mxu0 0.0
        %2957 = vmatpush1.msra.mxu0 0.0
        %2958 = vmatprep.subr.mxu0 0.0
        %2959 = vmatpush1.msra.mxu0 0.0
        %2960 = vmatprep.subr.mxu0 0.0
        %2961 = vmatpush1.msra.mxu0 0.0
        %2962 = vmatprep.subr.mxu0 0.0
        %2963 = vmatpush1.msra.mxu0 0.0
        %2964 = vmatprep.subr.mxu0 0.0
        %2965 = vmatpush1.msra.mxu0 %v2944
        %2966 = vmatprep.subr.mxu0 0.0
        %2967 = vmatpush1.msra.mxu0 %v2935
        %2968 = vmatprep.subr.mxu0 0.0
        %2969 = vmatpush1.msra.mxu0 %v2934
        %2970 = vmatprep.subr.mxu0 0.0
        %2971 = vmatpush1.msra.mxu0 %v2933
        %2972 = vmatprep.subr.mxu0 0.0
        %2973 = vmatpush1.msra.mxu0 %v2932
        %2974 = vmatprep.subr.mxu0 0.0
        %2975 = vmatpush1.msra.mxu0 %v2931
        %2976 = vmatprep.subr.mxu0 0.0
        %2977 = vmatpush1.msra.mxu0 %v2930
        %2978 = vmatprep.subr.mxu0 0.0
        %2979 = vmatpush2.msra.mxu0 0.0
        %2980 = vmatprep.subr.mxu0 0.0
        %2981 = vmatpush2.msra.mxu0 0.0
        %2982 = vmatprep.subr.mxu0 0.0
        %2983 = vmatpush2.msra.mxu0 0.0
        %2984 = vmatprep.subr.mxu0 0.0
        %2985 = vmatpush2.msra.mxu0 0.0
        %2986 = vmatprep.subr.mxu0 0.0
        %2987 = vmatpush2.msra.mxu0 0.0
        %2988 = vmatprep.subr.mxu0 0.0
        %2989 = vmatpush2.msra.mxu0 0.0
        %2990 = vmatprep.subr.mxu0 0.0
        %2991 = vmatpush2.msra.mxu0 0.0
        %2992 = vmatprep.subr.mxu0 0.0
        %2993 = vmatpush2.msra.mxu0 0.0
        %2994 = vmatprep.subr.mxu0 0.0
        %2995 = vmatpush2.msra.mxu0 0.0
        %2996 = vmatprep.subr.mxu0 0.0
        %2997 = vmatpush2.msra.mxu0 0.0
        %2998 = vmatprep.subr.mxu0 0.0
        %2999 = vmatpush2.msra.mxu0 0.0
        %3000 = vmatprep.subr.mxu0 0.0
        %3001 = vmatpush2.msra.mxu0 0.0
        %3002 = vmatprep.subr.mxu0 0.0
        %3003 = vmatpush2.msra.mxu0 0.0
        %3004 = vmatprep.subr.mxu0 0.0
        %3005 = vmatpush2.msra.mxu0 0.0
        %3006 = vmatprep.subr.mxu0 0.0
        %3007 = vmatpush2.msra.mxu0 0.0
        %3008 = vmatprep.subr.mxu0 0.0
        %3009 = vmatpush2.msra.mxu0 0.0
        %3010 = vmatprep.mubr.f32.mxu0 0.0
        %3011 = vmatmul.mubr.f32.gmra.mxu0 %v2940
        %v3012 = vpop.f32.mrf.mxu0
        %v3013 = vadd.f32 %v2937, %v3012
        %v3014 = vpop.f32.mrf.mxu0
        %3015 = vdwg.mxu0
        %vm3016 = vcmask 73728
        %v3017 = vsel %vm3016, %v3013, -inf
        %3018 = vmax.xlane.f32.xlu0 %v3017
        %v3019 = vpop.xlane.xlu0 %3018
        %v3020 = vsub.f32 %v3013, %v3019
        %v3021 = vmul.f32 %v3020, 1.442695
        %v3022 = vpow.pop %v3021
        %v3023 = vsel %vm3016, %v3022, 0.0
        %3024 = vadd.xlane.f32.xlu0 %v3023
        %v3025 = vpop.xlane.xlu0 %3024
        %v3026 = vlog2.pop %v3025
        %v3027 = vmul.f32 %v3026, 0.6931472
        %v3028 = vsub.f32 %v3020, %v3027
        %3029 = vst.msk [vmem:[%s378] sm:$0x1] %vm3016, %v3028
        %s3030 = sand.u32 %s269, 1
        %s3031 = scalar_lea.sflag [#allocation5], %s3030
        %s3032 = sand.u32 %s269, 1
        %s3033 = scalar_lea.vmem [#allocation4], %s3032
        // Predicated region
        $region65: #{net_forward.1} parent=63 // pred_check
          %p3034 = pneg %p279
        $region66: #{net_forward.1} parent=63 // pred_check_branch
          %3036 = sbr.rel (%p3034) target = $region68
        $region67: #{net_forward.1} parent=63 // pred_region
          %s3038 = ssub.s32 16, 16
          %3039 = vsyncadd %s3031, %s3038
          %s3040 = smul.addr %s25, 16
          %s3041 = scalar_lea.hbm %s11, %s3040
          %s3043 = sshll.u32 %s3033, 4
          %s3044 = int_to_ptr.vmem [resolvable:$true] %s3043
          %3046 = dma.vmem_to_hbm [thread:$0]  %s3044, 16, %s3041, %s3031
        $region68: #{net_forward.1} parent=63 // pred_fallthru
          _
      $region64: #{net_forward.1} parent=5 // pred_fallthru
        _
      %p3047 = scmp.le.s32.totalorder 2, %s20
      // Predicated region
      $region69: #{net_forward.1} parent=5 // pred_check
        %p3048 = pneg %p3047
      $region70: #{net_forward.1} parent=5 // pred_check_branch
        %3050 = sbr.rel (%p3048) target = $region72
      $region71: #{net_forward.1} parent=5 // pred_region
        %s3051 = ssub.s32 %s20, 2
        // Predicated region
        $region73: #{net_forward.1} parent=71 // pred_check
          %p3052 = pneg %p285
        $region74: #{net_forward.1} parent=71 // pred_check_branch
          %3054 = sbr.rel (%p3052) target = $region76
        $region75: #{net_forward.1} parent=71 // pred_region
          %s3055 = sand.u32 %s270, 1
          %s3056 = scalar_lea.sflag [#allocation5], %s3055
          %s3057 = sand.u32 %s270, 1
          %s3058 = scalar_lea.vmem [#allocation4], %s3057
          %3059 = dma.done %s3056, 16
        $region76: #{net_forward.1} parent=71 // pred_fallthru
          _
      $region72: #{net_forward.1} parent=5 // pred_fallthru
        _
    $region6: #{net_forward.1} parent=1 // loop_footer
      %s24 = sadd.s32 1, %s20
    $region7: #{net_forward.1} parent=1 // loop_footer_branch
      %19 = sbr.rel target = $region3
    $region8: #{net_forward.1} parent=1 // loop_exit
      _
    %3060 = vsyncpa [#allocation5], 1
    %s3061 = scalar_lea.sflag [#allocation5], 1
    %3062 = vsyncpa %s3061, 1

</llo_original>
